<compile_context>
chip_gen: v6e
topology: v6e:2x2x1
jax: 0.10.0
libtpu: 0.0.40
codegen_flags: <defaults>
</compile_context>

<pallas_src>
import functools

import jax
import jax.numpy as jnp
from jax.experimental import pallas as pl
from jax.experimental.pallas import tpu as pltpu

F32 = jnp.float32
BF16 = jnp.bfloat16
_VMEM_LIMIT = 32 * 1024 * 1024  # <= v7x physical (64 MiB); raises v5e/v6e scoped default


# ---------------------------------------------------------------------------
# small math helpers (used inside kernels)
# ---------------------------------------------------------------------------

def _erf_poly(z):
    # Abramowitz & Stegun 7.1.26 (|err| < 1.5e-7); only exp/abs/select -> safe Mosaic lowering.
    a1, a2, a3, a4, a5 = (0.254829592, -0.284496736, 1.421413741,
                          -1.453152027, 1.061405429)
    p = 0.3275911
    s = jnp.where(z >= 0.0, 1.0, -1.0)
    az = jnp.abs(z)
    t = 1.0 / (1.0 + p * az)
    poly = ((((a5 * t + a4) * t + a3) * t + a2) * t + a1) * t
    return s * (1.0 - poly * jnp.exp(-az * az))


def _gelu(x):
    # matches torch.nn.GELU() (erf formulation) to ~1e-7
    return 0.5 * x * (1.0 + _erf_poly(x * 0.7071067811865475))


def _rmsnorm(x, g, dim):
    # F.normalize(x, dim=-1) * sqrt(dim) * gamma ; rsqrt keeps the divide on the EUP
    ss = jnp.sum(x * x, axis=-1, keepdims=True)
    inv = jax.lax.rsqrt(jnp.maximum(ss, 1e-24))
    return x * inv * (float(dim) ** 0.5) * g


def _row_tile(m, cap=256):
    """Largest divisor of m that is <= cap and (multiple of 8 or == m)."""
    cap = min(m, cap)
    for t in range(cap, 0, -1):
        if m % t == 0 and (t % 8 == 0 or t == m):
            return t
    return m


# ---------------------------------------------------------------------------
# kernel 1: fused to_embed  (concat in VMEM + single wide-K matmul, bf16 operands)
# ---------------------------------------------------------------------------

def _embed_kernel(x_ref, pe_ref, c_ref, w_ref, b_ref, o_ref):
    cat = jnp.concatenate([x_ref[...], pe_ref[...], c_ref[...]], axis=-1)
    acc = jnp.dot(cat.astype(BF16), w_ref[...], preferred_element_type=jnp.float32)
    o_ref[...] = acc + b_ref[...]


def to_embed(x2, pe2, cond2, w, bias):
    m = x2.shape[0]
    dim = w.shape[1]
    tm = _row_tile(m)
    return pl.pallas_call(
        _embed_kernel,
        out_shape=jax.ShapeDtypeStruct((m, dim), F32),
        grid=(m // tm,),
        in_specs=[
            pl.BlockSpec((tm, x2.shape[1]), lambda i: (i, 0)),
            pl.BlockSpec((tm, pe2.shape[1]), lambda i: (i, 0)),
            pl.BlockSpec((tm, cond2.shape[1]), lambda i: (i, 0)),
            pl.BlockSpec(w.shape, lambda i: (0, 0)),       # fetched once (constant block index)
            pl.BlockSpec(bias.shape, lambda i: (0, 0)),
        ],
        out_specs=pl.BlockSpec((tm, dim), lambda i: (i, 0)),
        compiler_params=pltpu.CompilerParams(
            dimension_semantics=("parallel",),
            vmem_limit_bytes=_VMEM_LIMIT),
    )(x2, pe2, cond2, w, bias)


# ---------------------------------------------------------------------------
# kernel 2: depthwise Conv1d pos-embed + GELU + residual (channels-last)
#   single read of h; sequence-edge padding done in VMEM (no padded HBM copy)
# ---------------------------------------------------------------------------

def _convpos_kernel(h_ref, w_ref, b_ref, o_ref, *, kernel_size, n, c):
    pad = kernel_size // 2
    h = h_ref[...]                                       # (n, c) f32, also the residual
    w = w_ref[...]
    zeros = jnp.zeros((pad, c), F32)
    hp = jnp.concatenate([zeros, h, zeros], axis=0)      # in-VMEM zero padding
    acc = jnp.zeros((n, c), F32) + b_ref[...]
    for j in range(kernel_size):                         # static unroll, small kernel
        acc = acc + hp[j:j + n, :] * w[j:j + 1, :]
    o_ref[...] = _gelu(acc) + h


def conv_pos_embed_residual(h, w, bias, kernel_size):
    """h: (b, n, c); w: (k, c) (== torch weight[c, 0, j].T); bias: (c,). Returns GELU(conv)+h."""
    b, n, c = h.shape
    kern = functools.partial(_convpos_kernel, kernel_size=kernel_size, n=n, c=c)
    return pl.pallas_call(
        kern,
        out_shape=jax.ShapeDtypeStruct((b, n, c), F32),
        grid=(b,),
        in_specs=[
            pl.BlockSpec((None, n, c), lambda i: (i, 0, 0)),
            pl.BlockSpec((kernel_size, c), lambda i: (0, 0)),
            pl.BlockSpec((1, c), lambda i: (0, 0)),
        ],
        out_specs=pl.BlockSpec((None, n, c), lambda i: (i, 0, 0)),
        compiler_params=pltpu.CompilerParams(
            dimension_semantics=("parallel",),
            vmem_limit_bytes=_VMEM_LIMIT),
    )(h, w, bias.reshape(1, c))


# ---------------------------------------------------------------------------
# kernel 3: fully fused transformer layer, grid over batch ("parallel")
#   [optional skip combiner] -> RMSNorm -> wide QKV -> rotary -> attention
#   -> single out-proj -> residual -> RMSNorm -> FF(GELU) -> residual
# ---------------------------------------------------------------------------

def _layer_kernel(*refs, n, heads, dim_head, dim, dim_inner, has_skip):
    it = iter(refs)
    h_ref = next(it)
    if has_skip:
        skip_ref = next(it)
        skw_ref = next(it)
    vecs_ref = next(it)
    wqkv_ref = next(it)
    wo_ref = next(it)
    w1_ref = next(it)
    b1_ref = next(it)
    w2_ref = next(it)
    cos_ref = next(it)
    sin_ref = next(it)
    o_ref = next(it)

    vecs = vecs_ref[...]                 # (8, dim): [attn_g, ff_g, skip_b, ff_b2, pad...]
    attn_g = vecs[0:1, :]
    ff_g = vecs[1:2, :]
    skip_b = vecs[2:3, :]
    ff_b2 = vecs[3:4, :]

    x = h_ref[...]                       # (n, dim) f32
    if has_skip:
        # torch: cat((x, skip), -1) @ W.T + b  ->  one wide-K (2*dim) bf16 matmul
        cat = jnp.concatenate([x, skip_ref[...]], axis=-1)
        x = jnp.dot(cat.astype(BF16), skw_ref[...],
                    preferred_element_type=jnp.float32) + skip_b

    # ---- attention block (pre-RMSNorm, rotary, residual) ----
    xn = _rmsnorm(x, attn_g, dim).astype(BF16)
    # one head-batched QKV matmul: (n, dim) x (dim, 3*dim_inner)
    qkv = jnp.dot(xn, wqkv_ref[...], preferred_element_type=jnp.float32)

    cos = cos_ref[...]                   # (n, dim_head), shared across batch grid
    sin = sin_ref[...]
    half = dim_head // 2
    scale = float(dim_head) ** -0.5

    heads_out = []
    for hh in range(heads):              # per-head loop only for the inherently per-head core
        q = qkv[:, hh * dim_head:(hh + 1) * dim_head]
        k = qkv[:, dim_inner + hh * dim_head: dim_inner + (hh + 1) * dim_head]
        v = qkv[:, 2 * dim_inner + hh * dim_head: 2 * dim_inner + (hh + 1) * dim_head]
        # rotary (split-half convention, same as reference rotate_half): pure VPU/XLU, no MXU
        q = q * cos + jnp.concatenate([-q[:, half:], q[:, :half]], axis=-1) * sin
        k = k * cos + jnp.concatenate([-k[:, half:], k[:, :half]], axis=-1) * sin
        s = jnp.einsum('qd,kd->qk', q.astype(BF16), k.astype(BF16),
                       preferred_element_type=jnp.float32) * scale
        s = s - jnp.max(s, axis=-1, keepdims=True)
        p = jnp.exp(s)
        l = jnp.sum(p, axis=-1, keepdims=True)
        o = jnp.dot(p.astype(BF16), v.astype(BF16),
                    preferred_element_type=jnp.float32) / l     # exact division
        heads_out.append(o)
    attn = jnp.concatenate(heads_out, axis=-1)                  # (n, dim_inner)
    # single wide output projection
    x = x + jnp.dot(attn.astype(BF16), wo_ref[...], preferred_element_type=jnp.float32)

    # ---- feed-forward block (pre-RMSNorm, GELU, residual) ----
    fn = _rmsnorm(x, ff_g, dim).astype(BF16)
    f = jnp.dot(fn, w1_ref[...], preferred_element_type=jnp.float32) + b1_ref[...]
    f = _gelu(f).astype(BF16)
    f = jnp.dot(f, w2_ref[...], preferred_element_type=jnp.float32) + ff_b2
    o_ref[...] = x + f


def transformer_layer(h3, skip3, lp, cos, sin, *, n, heads, dim_head, dim):
    b = h3.shape[0]
    dim_inner = heads * dim_head
    has_skip = skip3 is not None

    inputs = [h3]
    in_specs = [pl.BlockSpec((None, n, dim), lambda i: (i, 0, 0))]
    if has_skip:
        inputs += [skip3, lp['skip_w']]
        in_specs += [pl.BlockSpec((None, n, dim), lambda i: (i, 0, 0)),
                     pl.BlockSpec(lp['skip_w'].shape, lambda i: (0, 0))]
    param_list = (lp['vecs'], lp['w_qkv'], lp['w_o'], lp['ff_w1'], lp['ff_b1'],
                  lp['ff_w2'], cos, sin)
    inputs += list(param_list)
    in_specs += [pl.BlockSpec(a.shape, lambda i: (0, 0)) for a in param_list]

    kern = functools.partial(_layer_kernel, n=n, heads=heads, dim_head=dim_head,
                             dim=dim, dim_inner=dim_inner, has_skip=has_skip)
    return pl.pallas_call(
        kern,
        out_shape=jax.ShapeDtypeStruct((b, n, dim), F32),
        grid=(b,),
        in_specs=in_specs,
        out_specs=pl.BlockSpec((None, n, dim), lambda i: (i, 0, 0)),
        compiler_params=pltpu.CompilerParams(
            dimension_semantics=("parallel",),
            vmem_limit_bytes=_VMEM_LIMIT),
    )(*inputs)


# ---------------------------------------------------------------------------
# kernel 4: mean L1 loss, row-tiled over a lane-dense slab with resident accumulator
# ---------------------------------------------------------------------------

def _l1_kernel(x_ref, t_ref, o_ref):
    @pl.when(pl.program_id(0) == 0)
    def _():
        o_ref[...] = jnp.zeros_like(o_ref)
    o_ref[...] += jnp.sum(jnp.abs(x_ref[...] - t_ref[...]), keepdims=True)


def l1_loss_mean(x, target):
    total = x.size
    if total % 128 == 0:
        xf = x.reshape(-1, 128)          # lane-dense slab
        tf = target.reshape(-1, 128)
    else:
        xf = x.reshape(-1, x.shape[-1])
        tf = target.reshape(xf.shape)
    rows, width = xf.shape
    tm = _row_tile(rows, cap=512)
    out = pl.pallas_call(
        _l1_kernel,
        out_shape=jax.ShapeDtypeStruct((1, 1), F32),
        grid=(rows // tm,),
        in_specs=[pl.BlockSpec((tm, width), lambda i: (i, 0)),
                  pl.BlockSpec((tm, width), lambda i: (i, 0))],
        out_specs=pl.BlockSpec((1, 1), lambda i: (0, 0)),
        compiler_params=pltpu.CompilerParams(
            dimension_semantics=("arbitrary",),
            vmem_limit_bytes=_VMEM_LIMIT),
    )(xf, tf)
    return out[0, 0] / float(total)


# ---------------------------------------------------------------------------
# rotary tables (computed once per forward, tiny; shared across the batch grid)
# ---------------------------------------------------------------------------

def rotary_tables(seq_len, dim_head, theta=10000.0):
    inv_freq = 1.0 / (theta ** (jnp.arange(0, dim_head, 2, dtype=F32) / dim_head))
    t = jnp.arange(seq_len, dtype=F32)
    freqs = jnp.einsum('i,j->ij', t, inv_freq)
    freqs = jnp.concatenate([freqs, freqs], axis=-1)     # (n, dim_head), split-half convention
    return jnp.cos(freqs), jnp.sin(freqs)


# ---------------------------------------------------------------------------
# parameters (matmul weights stored in bf16; gammas/biases in f32)
# ---------------------------------------------------------------------------

def init_params(key, *, num_phoneme_tokens, dim_phoneme_emb, dim, depth,
                dim_head, heads, ff_mult, conv_kernel_size):
    keys = iter(jax.random.split(key, 8 + depth * 8))

    def nrm(shape, std=0.02, dtype=BF16):
        return (jax.random.normal(next(keys), shape, F32) * std).astype(dtype)

    dim_inner = dim_head * heads
    params = {
        'phoneme_emb': nrm((num_phoneme_tokens + 1, dim_phoneme_emb), 1.0, F32),
        'w_embed': nrm((dim * 2 + dim_phoneme_emb, dim)),  # concat-folded to_embed weight (bf16)
        'to_embed_b': jnp.zeros((1, dim), F32),
        'null_cond': jnp.zeros((dim,), F32),               # unused when cond_drop_prob == 0
        'conv_w': nrm((conv_kernel_size, dim), 0.02, F32),
        'conv_b': jnp.zeros((dim,), F32),
        'layers': [],
    }
    for ind in range(depth):
        has_skip = (ind + 1) > depth // 2
        vecs = jnp.zeros((8, dim), F32)
        vecs = vecs.at[0].set(1.0).at[1].set(1.0)          # attn_g, ff_g (RMSNorm gammas)
        lp = {
            'skip_w': nrm((dim * 2, dim)) if has_skip else None,   # cat(x, skip) @ W
            'vecs': vecs,                                   # [attn_g, ff_g, skip_b, ff_b2, pad]
            'w_qkv': nrm((dim, dim_inner * 3)),
            'w_o': nrm((dim_inner, dim)),
            'ff_w1': nrm((dim, dim * ff_mult)),
            'ff_b1': jnp.zeros((1, dim * ff_mult), F32),
            'ff_w2': nrm((dim * ff_mult, dim)),
        }
        params['layers'].append(lp)
    return params


# ---------------------------------------------------------------------------
# DurationPredictor forward (cond_drop_prob=0, mask=None -> scalar L1 loss)
# ---------------------------------------------------------------------------

def duration_predictor_forward(params, x, phoneme_ids, cond, target, *,
                               dim, dim_head, heads, conv_kernel_size):
    assert cond.shape[-1] == x.shape[-1]
    b, n, _ = x.shape

    # TODO(synk): cond_drop_prob > 0 (classifier-free-guidance dropout) and the masked-loss
    # branch are not exercised here (module defaults).
    phoneme_emb = jnp.take(params['phoneme_emb'], phoneme_ids, axis=0)   # XLA gather

    h = to_embed(x.reshape(b * n, dim),
                 phoneme_emb.reshape(b * n, -1),
                 cond.reshape(b * n, dim),
                 params['w_embed'], params['to_embed_b'])

    h = conv_pos_embed_residual(h.reshape(b, n, dim), params['conv_w'],
                                params['conv_b'], conv_kernel_size)

    cos, sin = rotary_tables(n, dim_head)

    skips = []
    for lp in params['layers']:
        if lp['skip_w'] is None:
            skips.append(h)
            skip = None
        else:
            skip = skips.pop()
        h = transformer_layer(h, skip, lp, cos, sin,
                              n=n, heads=heads, dim_head=dim_head, dim=dim)

    # mask is None -> F.l1_loss(x, target) (mean over all elements)
    return l1_loss_mean(h, target)


# ---------------------------------------------------------------------------
# main
# ---------------------------------------------------------------------------

if __name__ == "__main__":
    num_phoneme_tokens = 10
    dim_phoneme_emb = 32
    dim = 32
    depth = 2
    dim_head = 16
    heads = 2
    ff_mult = 4
    conv_kernel_size = 3
    B, N = 2, 16

    key = jax.random.PRNGKey(0)
    k_par, kx, kp, kc, kt = jax.random.split(key, 5)

    params = init_params(
        k_par,
        num_phoneme_tokens=num_phoneme_tokens,
        dim_phoneme_emb=dim_phoneme_emb,
        dim=dim,
        depth=depth,
        dim_head=dim_head,
        heads=heads,
        ff_mult=ff_mult,
        conv_kernel_size=conv_kernel_size,
    )

    x = jax.random.normal(kx, (B, N, dim), F32)
    phoneme_ids = jax.random.randint(kp, (B, N), 0, num_phoneme_tokens)
    cond = jax.random.normal(kc, (B, N, dim), F32)
    target = jax.random.normal(kt, (B, N, dim), F32)

    fwd = jax.jit(functools.partial(
        duration_predictor_forward,
        dim=dim, dim_head=dim_head, heads=heads, conv_kernel_size=conv_kernel_size))

    loss = fwd(params, x, phoneme_ids, cond, target)
    loss = jax.block_until_ready(loss)
    assert loss.shape == () and bool(jnp.isfinite(loss))
    print("KERNEL_OK")
</pallas_src>

<mosaic_0001>
module attributes {stable_mosaic.version = 11 : i64} {
  func.func @_embed_kernel(%arg0: i32, %arg1: memref<32x32xf32, #tpu.memory_space<vmem>>, %arg2: memref<32x32xf32, #tpu.memory_space<vmem>>, %arg3: memref<32x32xf32, #tpu.memory_space<vmem>>, %arg4: memref<96x32xbf16, #tpu.memory_space<vmem>>, %arg5: memref<1x32xf32, #tpu.memory_space<vmem>>, %arg6: memref<32x32xf32, #tpu.memory_space<vmem>>) attributes {dimension_semantics = [#tpu.dimension_semantics<parallel>], iteration_bounds = array<i64: 1>, scalar_prefetch = 0 : i64, scratch_operands = 0 : i64, tpu.core_type = #tpu.core_type<tc>, window_params = [{transform_indices = @transform_0, window_bounds = array<i64: 32, 32>}, {transform_indices = @transform_1, window_bounds = array<i64: 32, 32>}, {transform_indices = @transform_2, window_bounds = array<i64: 32, 32>}, {pipeline_mode = #tpu.pipeline_mode<synchronous>, transform_indices = @transform_3, window_bounds = array<i64: 96, 32>}, {pipeline_mode = #tpu.pipeline_mode<synchronous>, transform_indices = @transform_4, window_bounds = array<i64: 1, 32>}, {transform_indices = @transform_5, window_bounds = array<i64: 32, 32>}]} {
    %c0 = arith.constant 0 : index
    %c0_0 = arith.constant 0 : index
    %0 = vector.load %arg1[%c0, %c0_0] : memref<32x32xf32, #tpu.memory_space<vmem>>, vector<32x32xf32>
    %c0_1 = arith.constant 0 : index
    %c0_2 = arith.constant 0 : index
    %1 = vector.load %arg2[%c0_1, %c0_2] : memref<32x32xf32, #tpu.memory_space<vmem>>, vector<32x32xf32>
    %c0_3 = arith.constant 0 : index
    %c0_4 = arith.constant 0 : index
    %2 = vector.load %arg3[%c0_3, %c0_4] : memref<32x32xf32, #tpu.memory_space<vmem>>, vector<32x32xf32>
    %3 = tpu.concatenate %0, %1, %2 in 1 : vector<32x32xf32>, vector<32x32xf32>, vector<32x32xf32> -> vector<32x96xf32>
    %4 = arith.truncf %3 : vector<32x96xf32> to vector<32x96xbf16>
    %c0_5 = arith.constant 0 : index
    %c0_6 = arith.constant 0 : index
    %5 = vector.load %arg4[%c0_5, %c0_6] : memref<96x32xbf16, #tpu.memory_space<vmem>>, vector<96x32xbf16>
    %cst = arith.constant dense<0.000000e+00> : vector<32x32xf32>
    %6 = tpu.matmul %4, %5, %cst {dimension_numbers = #tpu.dot_dimension_numbers<[1], [0], [0], [1], [0, 0, 1, 1], [], []>} : vector<32x96xbf16>, vector<96x32xbf16>, vector<32x32xf32> -> vector<32x32xf32>
    %c0_7 = arith.constant 0 : index
    %c0_8 = arith.constant 0 : index
    %7 = vector.load %arg5[%c0_7, %c0_8] : memref<1x32xf32, #tpu.memory_space<vmem>>, vector<1x32xf32>
    %8 = vector.broadcast %7 : vector<1x32xf32> to vector<32x32xf32>
    %9 = arith.addf %6, %8 : vector<32x32xf32>
    %c0_9 = arith.constant 0 : index
    %c0_10 = arith.constant 0 : index
    %10 = vector.load %arg6[%c0_9, %c0_10] : memref<32x32xf32, #tpu.memory_space<vmem>>, vector<32x32xf32>
    tpu.vector_store %arg6[%c0_9, %c0_10], %9 {strides = array<i32>} : memref<32x32xf32, #tpu.memory_space<vmem>>, vector<32x32xf32>,
    return
  }
  func.func @transform_0(%arg0: i32) -> (i32, i32) {
    %c0_i32 = arith.constant 0 : i32
    %c0_i32_0 = arith.constant 0 : i32
    return %arg0, %c0_i32 : i32, i32
  }
  func.func @transform_1(%arg0: i32) -> (i32, i32) {
    %c0_i32 = arith.constant 0 : i32
    %c0_i32_0 = arith.constant 0 : i32
    return %arg0, %c0_i32 : i32, i32
  }
  func.func @transform_2(%arg0: i32) -> (i32, i32) {
    %c0_i32 = arith.constant 0 : i32
    %c0_i32_0 = arith.constant 0 : i32
    return %arg0, %c0_i32 : i32, i32
  }
  func.func @transform_3(%arg0: i32) -> (i32, i32) {
    %c0_i32 = arith.constant 0 : i32
    %c0_i32_0 = arith.constant 0 : i32
    %c0_i32_1 = arith.constant 0 : i32
    return %c0_i32, %c0_i32_0 : i32, i32
  }
  func.func @transform_4(%arg0: i32) -> (i32, i32) {
    %c0_i32 = arith.constant 0 : i32
    %c0_i32_0 = arith.constant 0 : i32
    %c0_i32_1 = arith.constant 0 : i32
    return %c0_i32, %c0_i32_0 : i32, i32
  }
  func.func @transform_5(%arg0: i32) -> (i32, i32) {
    %c0_i32 = arith.constant 0 : i32
    %c0_i32_0 = arith.constant 0 : i32
    return %arg0, %c0_i32 : i32, i32
  }
}

module attributes {stable_mosaic.version = 11 : i64} {
  func.func @_convpos_kernel(%arg0: i32, %arg1: memref<1x16x32xf32, #tpu.memory_space<vmem>>, %arg2: memref<3x32xf32, #tpu.memory_space<vmem>>, %arg3: memref<1x32xf32, #tpu.memory_space<vmem>>, %arg4: memref<1x16x32xf32, #tpu.memory_space<vmem>>) attributes {dimension_semantics = [#tpu.dimension_semantics<parallel>], iteration_bounds = array<i64: 2>, scalar_prefetch = 0 : i64, scratch_operands = 0 : i64, tpu.core_type = #tpu.core_type<tc>, window_params = [{transform_indices = @transform_0, window_bounds = array<i64: 1, 16, 32>}, {pipeline_mode = #tpu.pipeline_mode<synchronous>, transform_indices = @transform_1, window_bounds = array<i64: 3, 32>}, {pipeline_mode = #tpu.pipeline_mode<synchronous>, transform_indices = @transform_2, window_bounds = array<i64: 1, 32>}, {transform_indices = @transform_3, window_bounds = array<i64: 1, 16, 32>}]} {
    %c0 = arith.constant 0 : index
    %c0_0 = arith.constant 0 : index
    %c0_1 = arith.constant 0 : index
    %0 = vector.load %arg1[%c0, %c0_0, %c0_1] : memref<1x16x32xf32, #tpu.memory_space<vmem>>, vector<1x16x32xf32>
    %1 = vector.shape_cast %0 : vector<1x16x32xf32> to vector<16x32xf32>
    %c0_2 = arith.constant 0 : index
    %c0_3 = arith.constant 0 : index
    %2 = vector.load %arg2[%c0_2, %c0_3] : memref<3x32xf32, #tpu.memory_space<vmem>>, vector<3x32xf32>
    %cst = arith.constant 0.000000e+00 : f32
    %3 = vector.broadcast %cst : f32 to vector<1x32xf32>
    %4 = tpu.concatenate %3, %1, %3 in 0 : vector<1x32xf32>, vector<16x32xf32>, vector<1x32xf32> -> vector<18x32xf32>
    %cst_4 = arith.constant 0.000000e+00 : f32
    %5 = vector.broadcast %cst_4 : f32 to vector<16x32xf32>
    %c0_5 = arith.constant 0 : index
    %c0_6 = arith.constant 0 : index
    %6 = vector.load %arg3[%c0_5, %c0_6] : memref<1x32xf32, #tpu.memory_space<vmem>>, vector<1x32xf32>
    %7 = vector.broadcast %6 : vector<1x32xf32> to vector<16x32xf32>
    %8 = arith.addf %5, %7 : vector<16x32xf32>
    %9 = vector.extract_strided_slice %4 {offsets = [0, 0], sizes = [16, 32], strides = [1, 1]} : vector<18x32xf32> to vector<16x32xf32>
    %10 = vector.extract_strided_slice %2 {offsets = [0, 0], sizes = [1, 32], strides = [1, 1]} : vector<3x32xf32> to vector<1x32xf32>
    %11 = vector.broadcast %10 : vector<1x32xf32> to vector<16x32xf32>
    %12 = arith.mulf %9, %11 : vector<16x32xf32>
    %13 = arith.addf %8, %12 : vector<16x32xf32>
    %14 = vector.extract_strided_slice %4 {offsets = [1, 0], sizes = [16, 32], strides = [1, 1]} : vector<18x32xf32> to vector<16x32xf32>
    %15 = vector.extract_strided_slice %2 {offsets = [1, 0], sizes = [1, 32], strides = [1, 1]} : vector<3x32xf32> to vector<1x32xf32>
    %16 = vector.broadcast %15 : vector<1x32xf32> to vector<16x32xf32>
    %17 = arith.mulf %14, %16 : vector<16x32xf32>
    %18 = arith.addf %13, %17 : vector<16x32xf32>
    %19 = vector.extract_strided_slice %4 {offsets = [2, 0], sizes = [16, 32], strides = [1, 1]} : vector<18x32xf32> to vector<16x32xf32>
    %20 = vector.extract_strided_slice %2 {offsets = [2, 0], sizes = [1, 32], strides = [1, 1]} : vector<3x32xf32> to vector<1x32xf32>
    %21 = vector.broadcast %20 : vector<1x32xf32> to vector<16x32xf32>
    %22 = arith.mulf %19, %21 : vector<16x32xf32>
    %23 = arith.addf %18, %22 : vector<16x32xf32>
    %cst_7 = arith.constant 5.000000e-01 : f32
    %24 = vector.broadcast %cst_7 : f32 to vector<16x32xf32>
    %25 = arith.mulf %24, %23 : vector<16x32xf32>
    %cst_8 = arith.constant 0.707106769 : f32
    %26 = vector.broadcast %cst_8 : f32 to vector<16x32xf32>
    %27 = arith.mulf %23, %26 : vector<16x32xf32>
    %cst_9 = arith.constant 0.000000e+00 : f32
    %28 = vector.broadcast %cst_9 : f32 to vector<16x32xf32>
    %29 = arith.cmpf oge, %27, %28 : vector<16x32xf32>
    %cst_10 = arith.constant 1.000000e+00 : f32
    %cst_11 = arith.constant -1.000000e+00 : f32
    %30 = vector.broadcast %cst_10 : f32 to vector<16x32xf32>
    %31 = vector.broadcast %cst_11 : f32 to vector<16x32xf32>
    %32 = arith.select %29, %30, %31 : vector<16x32xi1>, vector<16x32xf32>
    %33 = math.absf %27 : vector<16x32xf32>
    %cst_12 = arith.constant 0.327591091 : f32
    %34 = vector.broadcast %cst_12 : f32 to vector<16x32xf32>
    %35 = arith.mulf %34, %33 : vector<16x32xf32>
    %cst_13 = arith.constant 1.000000e+00 : f32
    %36 = vector.broadcast %cst_13 : f32 to vector<16x32xf32>
    %37 = arith.addf %36, %35 : vector<16x32xf32>
    %cst_14 = arith.constant 1.000000e+00 : f32
    %38 = vector.broadcast %cst_14 : f32 to vector<16x32xf32>
    %39 = arith.divf %38, %37 : vector<16x32xf32>
    %cst_15 = arith.constant 1.06140542 : f32
    %40 = vector.broadcast %cst_15 : f32 to vector<16x32xf32>
    %41 = arith.mulf %40, %39 : vector<16x32xf32>
    %cst_16 = arith.constant -1.45315206 : f32
    %42 = vector.broadcast %cst_16 : f32 to vector<16x32xf32>
    %43 = arith.addf %41, %42 : vector<16x32xf32>
    %44 = arith.mulf %43, %39 : vector<16x32xf32>
    %cst_17 = arith.constant 1.42141378 : f32
    %45 = vector.broadcast %cst_17 : f32 to vector<16x32xf32>
    %46 = arith.addf %44, %45 : vector<16x32xf32>
    %47 = arith.mulf %46, %39 : vector<16x32xf32>
    %cst_18 = arith.constant -0.284496725 : f32
    %48 = vector.broadcast %cst_18 : f32 to vector<16x32xf32>
    %49 = arith.addf %47, %48 : vector<16x32xf32>
    %50 = arith.mulf %49, %39 : vector<16x32xf32>
    %cst_19 = arith.constant 0.254829586 : f32
    %51 = vector.broadcast %cst_19 : f32 to vector<16x32xf32>
    %52 = arith.addf %50, %51 : vector<16x32xf32>
    %53 = arith.mulf %52, %39 : vector<16x32xf32>
    %cst_20 = arith.constant 0.000000e+00 : f32
    %54 = vector.broadcast %cst_20 : f32 to vector<16x32xf32>
    %55 = arith.subf %54, %33 : vector<16x32xf32>
    %56 = arith.mulf %55, %33 : vector<16x32xf32>
    %57 = math.exp %56 : vector<16x32xf32>
    %58 = arith.mulf %53, %57 : vector<16x32xf32>
    %cst_21 = arith.constant 1.000000e+00 : f32
    %59 = vector.broadcast %cst_21 : f32 to vector<16x32xf32>
    %60 = arith.subf %59, %58 : vector<16x32xf32>
    %61 = arith.mulf %32, %60 : vector<16x32xf32>
    %cst_22 = arith.constant 1.000000e+00 : f32
    %62 = vector.broadcast %cst_22 : f32 to vector<16x32xf32>
    %63 = arith.addf %62, %61 : vector<16x32xf32>
    %64 = arith.mulf %25, %63 : vector<16x32xf32>
    %65 = arith.addf %64, %1 : vector<16x32xf32>
    %c0_23 = arith.constant 0 : index
    %c0_24 = arith.constant 0 : index
    %c0_25 = arith.constant 0 : index
    %66 = vector.load %arg4[%c0_23, %c0_24, %c0_25] : memref<1x16x32xf32, #tpu.memory_space<vmem>>, vector<1x16x32xf32>
    %67 = vector.shape_cast %66 : vector<1x16x32xf32> to vector<16x32xf32>
    %68 = vector.shape_cast %65 : vector<16x32xf32> to vector<1x16x32xf32>
    tpu.vector_store %arg4[%c0_23, %c0_24, %c0_25], %68 {strides = array<i32>} : memref<1x16x32xf32, #tpu.memory_space<vmem>>, vector<1x16x32xf32>,
    return
  }
  func.func @transform_0(%arg0: i32) -> (i32, i32, i32) {
    %c0_i32 = arith.constant 0 : i32
    %c0_i32_0 = arith.constant 0 : i32
    %c0_i32_1 = arith.constant 0 : i32
    return %arg0, %c0_i32, %c0_i32_0 : i32, i32, i32
  }
  func.func @transform_1(%arg0: i32) -> (i32, i32) {
    %c0_i32 = arith.constant 0 : i32
    %c0_i32_0 = arith.constant 0 : i32
    %c0_i32_1 = arith.constant 0 : i32
    return %c0_i32, %c0_i32_0 : i32, i32
  }
  func.func @transform_2(%arg0: i32) -> (i32, i32) {
    %c0_i32 = arith.constant 0 : i32
    %c0_i32_0 = arith.constant 0 : i32
    %c0_i32_1 = arith.constant 0 : i32
    return %c0_i32, %c0_i32_0 : i32, i32
  }
  func.func @transform_3(%arg0: i32) -> (i32, i32, i32) {
    %c0_i32 = arith.constant 0 : i32
    %c0_i32_0 = arith.constant 0 : i32
    %c0_i32_1 = arith.constant 0 : i32
    return %arg0, %c0_i32, %c0_i32_0 : i32, i32, i32
  }
}

module attributes {stable_mosaic.version = 11 : i64} {
  func.func @_layer_kernel(%arg0: i32, %arg1: memref<1x16x32xf32, #tpu.memory_space<vmem>>, %arg2: memref<8x32xf32, #tpu.memory_space<vmem>>, %arg3: memref<32x96xbf16, #tpu.memory_space<vmem>>, %arg4: memref<32x32xbf16, #tpu.memory_space<vmem>>, %arg5: memref<32x128xbf16, #tpu.memory_space<vmem>>, %arg6: memref<1x128xf32, #tpu.memory_space<vmem>>, %arg7: memref<128x32xbf16, #tpu.memory_space<vmem>>, %arg8: memref<16x16xf32, #tpu.memory_space<vmem>>, %arg9: memref<16x16xf32, #tpu.memory_space<vmem>>, %arg10: memref<1x16x32xf32, #tpu.memory_space<vmem>>) attributes {dimension_semantics = [#tpu.dimension_semantics<parallel>], iteration_bounds = array<i64: 2>, scalar_prefetch = 0 : i64, scratch_operands = 0 : i64, tpu.core_type = #tpu.core_type<tc>, window_params = [{transform_indices = @transform_0, window_bounds = array<i64: 1, 16, 32>}, {pipeline_mode = #tpu.pipeline_mode<synchronous>, transform_indices = @transform_1, window_bounds = array<i64: 8, 32>}, {pipeline_mode = #tpu.pipeline_mode<synchronous>, transform_indices = @transform_2, window_bounds = array<i64: 32, 96>}, {pipeline_mode = #tpu.pipeline_mode<synchronous>, transform_indices = @transform_3, window_bounds = array<i64: 32, 32>}, {pipeline_mode = #tpu.pipeline_mode<synchronous>, transform_indices = @transform_4, window_bounds = array<i64: 32, 128>}, {pipeline_mode = #tpu.pipeline_mode<synchronous>, transform_indices = @transform_5, window_bounds = array<i64: 1, 128>}, {pipeline_mode = #tpu.pipeline_mode<synchronous>, transform_indices = @transform_6, window_bounds = array<i64: 128, 32>}, {pipeline_mode = #tpu.pipeline_mode<synchronous>, transform_indices = @transform_7, window_bounds = array<i64: 16, 16>}, {pipeline_mode = #tpu.pipeline_mode<synchronous>, transform_indices = @transform_8, window_bounds = array<i64: 16, 16>}, {transform_indices = @transform_9, window_bounds = array<i64: 1, 16, 32>}]} {
    %c0 = arith.constant 0 : index
    %c0_0 = arith.constant 0 : index
    %0 = vector.load %arg2[%c0, %c0_0] : memref<8x32xf32, #tpu.memory_space<vmem>>, vector<8x32xf32>
    %1 = vector.extract_strided_slice %0 {offsets = [0, 0], sizes = [1, 32], strides = [1, 1]} : vector<8x32xf32> to vector<1x32xf32>
    %2 = vector.extract_strided_slice %0 {offsets = [1, 0], sizes = [1, 32], strides = [1, 1]} : vector<8x32xf32> to vector<1x32xf32>
    %3 = vector.extract_strided_slice %0 {offsets = [3, 0], sizes = [1, 32], strides = [1, 1]} : vector<8x32xf32> to vector<1x32xf32>
    %c0_1 = arith.constant 0 : index
    %c0_2 = arith.constant 0 : index
    %c0_3 = arith.constant 0 : index
    %4 = vector.load %arg1[%c0_1, %c0_2, %c0_3] : memref<1x16x32xf32, #tpu.memory_space<vmem>>, vector<1x16x32xf32>
    %5 = vector.shape_cast %4 : vector<1x16x32xf32> to vector<16x32xf32>
    %6 = arith.mulf %5, %5 : vector<16x32xf32>
    %cst = arith.constant dense<0.000000e+00> : vector<16xf32>
    %7 = vector.multi_reduction <add>, %6, %cst [1] : vector<16x32xf32> to vector<16xf32>
    %8 = vector.shape_cast %7 : vector<16xf32> to vector<16x1xf32>
    %cst_4 = arith.constant 1.000000e-24 : f32
    %9 = vector.broadcast %cst_4 : f32 to vector<16x1xf32>
    %10 = arith.maximumf %8, %9 : vector<16x1xf32>
    %11 = math.rsqrt %10 : vector<16x1xf32>
    %12 = vector.broadcast %11 : vector<16x1xf32> to vector<16x32xf32>
    %13 = arith.mulf %5, %12 : vector<16x32xf32>
    %cst_5 = arith.constant 5.65685415 : f32
    %14 = vector.broadcast %cst_5 : f32 to vector<16x32xf32>
    %15 = arith.mulf %13, %14 : vector<16x32xf32>
    %16 = vector.broadcast %1 : vector<1x32xf32> to vector<16x32xf32>
    %17 = arith.mulf %15, %16 : vector<16x32xf32>
    %18 = arith.truncf %17 : vector<16x32xf32> to vector<16x32xbf16>
    %c0_6 = arith.constant 0 : index
    %c0_7 = arith.constant 0 : index
    %19 = vector.load %arg3[%c0_6, %c0_7] : memref<32x96xbf16, #tpu.memory_space<vmem>>, vector<32x96xbf16>
    %cst_8 = arith.constant dense<0.000000e+00> : vector<16x96xf32>
    %20 = tpu.matmul %18, %19, %cst_8 {dimension_numbers = #tpu.dot_dimension_numbers<[1], [0], [0], [1], [0, 0, 1, 1], [], []>} : vector<16x32xbf16>, vector<32x96xbf16>, vector<16x96xf32> -> vector<16x96xf32>
    %c0_9 = arith.constant 0 : index
    %c0_10 = arith.constant 0 : index
    %21 = vector.load %arg8[%c0_9, %c0_10] : memref<16x16xf32, #tpu.memory_space<vmem>>, vector<16x16xf32>
    %c0_11 = arith.constant 0 : index
    %c0_12 = arith.constant 0 : index
    %22 = vector.load %arg9[%c0_11, %c0_12] : memref<16x16xf32, #tpu.memory_space<vmem>>, vector<16x16xf32>
    %23 = vector.extract_strided_slice %20 {offsets = [0, 0], sizes = [16, 16], strides = [1, 1]} : vector<16x96xf32> to vector<16x16xf32>
    %24 = vector.extract_strided_slice %20 {offsets = [0, 32], sizes = [16, 16], strides = [1, 1]} : vector<16x96xf32> to vector<16x16xf32>
    %25 = vector.extract_strided_slice %20 {offsets = [0, 64], sizes = [16, 16], strides = [1, 1]} : vector<16x96xf32> to vector<16x16xf32>
    %26 = arith.mulf %23, %21 : vector<16x16xf32>
    %27 = vector.extract_strided_slice %23 {offsets = [0, 8], sizes = [16, 8], strides = [1, 1]} : vector<16x16xf32> to vector<16x8xf32>
    %cst_13 = arith.constant 0.000000e+00 : f32
    %28 = vector.broadcast %cst_13 : f32 to vector<16x8xf32>
    %29 = arith.subf %28, %27 : vector<16x8xf32>
    %30 = vector.extract_strided_slice %23 {offsets = [0, 0], sizes = [16, 8], strides = [1, 1]} : vector<16x16xf32> to vector<16x8xf32>
    %31 = tpu.concatenate %29, %30 in 1 : vector<16x8xf32>, vector<16x8xf32> -> vector<16x16xf32>
    %32 = arith.mulf %31, %22 : vector<16x16xf32>
    %33 = arith.addf %26, %32 : vector<16x16xf32>
    %34 = arith.mulf %24, %21 : vector<16x16xf32>
    %35 = vector.extract_strided_slice %24 {offsets = [0, 8], sizes = [16, 8], strides = [1, 1]} : vector<16x16xf32> to vector<16x8xf32>
    %cst_14 = arith.constant 0.000000e+00 : f32
    %36 = vector.broadcast %cst_14 : f32 to vector<16x8xf32>
    %37 = arith.subf %36, %35 : vector<16x8xf32>
    %38 = vector.extract_strided_slice %24 {offsets = [0, 0], sizes = [16, 8], strides = [1, 1]} : vector<16x16xf32> to vector<16x8xf32>
    %39 = tpu.concatenate %37, %38 in 1 : vector<16x8xf32>, vector<16x8xf32> -> vector<16x16xf32>
    %40 = arith.mulf %39, %22 : vector<16x16xf32>
    %41 = arith.addf %34, %40 : vector<16x16xf32>
    %42 = arith.truncf %33 : vector<16x16xf32> to vector<16x16xbf16>
    %43 = arith.truncf %41 : vector<16x16xf32> to vector<16x16xbf16>
    "tpu.trace_start"() <{level = 10 : i32, message = "qd,kd->qk"}> : () -> ()
    %cst_15 = arith.constant dense<0.000000e+00> : vector<16x16xf32>
    %44 = tpu.matmul %42, %43, %cst_15 {dimension_numbers = #tpu.dot_dimension_numbers<[1], [1], [0], [0], [0, 0, 1, 0], [], []>} : vector<16x16xbf16>, vector<16x16xbf16>, vector<16x16xf32> -> vector<16x16xf32>
    "tpu.trace_stop"() : () -> ()
    %cst_16 = arith.constant 2.500000e-01 : f32
    %45 = vector.broadcast %cst_16 : f32 to vector<16x16xf32>
    %46 = arith.mulf %44, %45 : vector<16x16xf32>
    %cst_17 = arith.constant dense<0xFF800000> : vector<16xf32>
    %47 = vector.multi_reduction <maximumf>, %46, %cst_17 [1] : vector<16x16xf32> to vector<16xf32>
    %48 = vector.shape_cast %47 : vector<16xf32> to vector<16x1xf32>
    %49 = vector.broadcast %48 : vector<16x1xf32> to vector<16x16xf32>
    %50 = arith.subf %46, %49 : vector<16x16xf32>
    %51 = math.exp %50 : vector<16x16xf32>
    %cst_18 = arith.constant dense<0.000000e+00> : vector<16xf32>
    %52 = vector.multi_reduction <add>, %51, %cst_18 [1] : vector<16x16xf32> to vector<16xf32>
    %53 = vector.shape_cast %52 : vector<16xf32> to vector<16x1xf32>
    %54 = arith.truncf %51 : vector<16x16xf32> to vector<16x16xbf16>
    %55 = arith.truncf %25 : vector<16x16xf32> to vector<16x16xbf16>
    %cst_19 = arith.constant dense<0.000000e+00> : vector<16x16xf32>
    %56 = tpu.matmul %54, %55, %cst_19 {dimension_numbers = #tpu.dot_dimension_numbers<[1], [0], [0], [1], [0, 0, 1, 1], [], []>} : vector<16x16xbf16>, vector<16x16xbf16>, vector<16x16xf32> -> vector<16x16xf32>
    %57 = vector.broadcast %53 : vector<16x1xf32> to vector<16x16xf32>
    %58 = arith.divf %56, %57 : vector<16x16xf32>
    %59 = vector.extract_strided_slice %20 {offsets = [0, 16], sizes = [16, 16], strides = [1, 1]} : vector<16x96xf32> to vector<16x16xf32>
    %60 = vector.extract_strided_slice %20 {offsets = [0, 48], sizes = [16, 16], strides = [1, 1]} : vector<16x96xf32> to vector<16x16xf32>
    %61 = vector.extract_strided_slice %20 {offsets = [0, 80], sizes = [16, 16], strides = [1, 1]} : vector<16x96xf32> to vector<16x16xf32>
    %62 = arith.mulf %59, %21 : vector<16x16xf32>
    %63 = vector.extract_strided_slice %59 {offsets = [0, 8], sizes = [16, 8], strides = [1, 1]} : vector<16x16xf32> to vector<16x8xf32>
    %cst_20 = arith.constant 0.000000e+00 : f32
    %64 = vector.broadcast %cst_20 : f32 to vector<16x8xf32>
    %65 = arith.subf %64, %63 : vector<16x8xf32>
    %66 = vector.extract_strided_slice %59 {offsets = [0, 0], sizes = [16, 8], strides = [1, 1]} : vector<16x16xf32> to vector<16x8xf32>
    %67 = tpu.concatenate %65, %66 in 1 : vector<16x8xf32>, vector<16x8xf32> -> vector<16x16xf32>
    %68 = arith.mulf %67, %22 : vector<16x16xf32>
    %69 = arith.addf %62, %68 : vector<16x16xf32>
    %70 = arith.mulf %60, %21 : vector<16x16xf32>
    %71 = vector.extract_strided_slice %60 {offsets = [0, 8], sizes = [16, 8], strides = [1, 1]} : vector<16x16xf32> to vector<16x8xf32>
    %cst_21 = arith.constant 0.000000e+00 : f32
    %72 = vector.broadcast %cst_21 : f32 to vector<16x8xf32>
    %73 = arith.subf %72, %71 : vector<16x8xf32>
    %74 = vector.extract_strided_slice %60 {offsets = [0, 0], sizes = [16, 8], strides = [1, 1]} : vector<16x16xf32> to vector<16x8xf32>
    %75 = tpu.concatenate %73, %74 in 1 : vector<16x8xf32>, vector<16x8xf32> -> vector<16x16xf32>
    %76 = arith.mulf %75, %22 : vector<16x16xf32>
    %77 = arith.addf %70, %76 : vector<16x16xf32>
    %78 = arith.truncf %69 : vector<16x16xf32> to vector<16x16xbf16>
    %79 = arith.truncf %77 : vector<16x16xf32> to vector<16x16xbf16>
    "tpu.trace_start"() <{level = 10 : i32, message = "qd,kd->qk"}> : () -> ()
    %cst_22 = arith.constant dense<0.000000e+00> : vector<16x16xf32>
    %80 = tpu.matmul %78, %79, %cst_22 {dimension_numbers = #tpu.dot_dimension_numbers<[1], [1], [0], [0], [0, 0, 1, 0], [], []>} : vector<16x16xbf16>, vector<16x16xbf16>, vector<16x16xf32> -> vector<16x16xf32>
    "tpu.trace_stop"() : () -> ()
    %cst_23 = arith.constant 2.500000e-01 : f32
    %81 = vector.broadcast %cst_23 : f32 to vector<16x16xf32>
    %82 = arith.mulf %80, %81 : vector<16x16xf32>
    %cst_24 = arith.constant dense<0xFF800000> : vector<16xf32>
    %83 = vector.multi_reduction <maximumf>, %82, %cst_24 [1] : vector<16x16xf32> to vector<16xf32>
    %84 = vector.shape_cast %83 : vector<16xf32> to vector<16x1xf32>
    %85 = vector.broadcast %84 : vector<16x1xf32> to vector<16x16xf32>
    %86 = arith.subf %82, %85 : vector<16x16xf32>
    %87 = math.exp %86 : vector<16x16xf32>
    %cst_25 = arith.constant dense<0.000000e+00> : vector<16xf32>
    %88 = vector.multi_reduction <add>, %87, %cst_25 [1] : vector<16x16xf32> to vector<16xf32>
    %89 = vector.shape_cast %88 : vector<16xf32> to vector<16x1xf32>
    %90 = arith.truncf %87 : vector<16x16xf32> to vector<16x16xbf16>
    %91 = arith.truncf %61 : vector<16x16xf32> to vector<16x16xbf16>
    %cst_26 = arith.constant dense<0.000000e+00> : vector<16x16xf32>
    %92 = tpu.matmul %90, %91, %cst_26 {dimension_numbers = #tpu.dot_dimension_numbers<[1], [0], [0], [1], [0, 0, 1, 1], [], []>} : vector<16x16xbf16>, vector<16x16xbf16>, vector<16x16xf32> -> vector<16x16xf32>
    %93 = vector.broadcast %89 : vector<16x1xf32> to vector<16x16xf32>
    %94 = arith.divf %92, %93 : vector<16x16xf32>
    %95 = tpu.concatenate %58, %94 in 1 : vector<16x16xf32>, vector<16x16xf32> -> vector<16x32xf32>
    %96 = arith.truncf %95 : vector<16x32xf32> to vector<16x32xbf16>
    %c0_27 = arith.constant 0 : index
    %c0_28 = arith.constant 0 : index
    %97 = vector.load %arg4[%c0_27, %c0_28] : memref<32x32xbf16, #tpu.memory_space<vmem>>, vector<32x32xbf16>
    %cst_29 = arith.constant dense<0.000000e+00> : vector<16x32xf32>
    %98 = tpu.matmul %96, %97, %cst_29 {dimension_numbers = #tpu.dot_dimension_numbers<[1], [0], [0], [1], [0, 0, 1, 1], [], []>} : vector<16x32xbf16>, vector<32x32xbf16>, vector<16x32xf32> -> vector<16x32xf32>
    %99 = arith.addf %5, %98 : vector<16x32xf32>
    %100 = arith.mulf %99, %99 : vector<16x32xf32>
    %cst_30 = arith.constant dense<0.000000e+00> : vector<16xf32>
    %101 = vector.multi_reduction <add>, %100, %cst_30 [1] : vector<16x32xf32> to vector<16xf32>
    %102 = vector.shape_cast %101 : vector<16xf32> to vector<16x1xf32>
    %cst_31 = arith.constant 1.000000e-24 : f32
    %103 = vector.broadcast %cst_31 : f32 to vector<16x1xf32>
    %104 = arith.maximumf %102, %103 : vector<16x1xf32>
    %105 = math.rsqrt %104 : vector<16x1xf32>
    %106 = vector.broadcast %105 : vector<16x1xf32> to vector<16x32xf32>
    %107 = arith.mulf %99, %106 : vector<16x32xf32>
    %cst_32 = arith.constant 5.65685415 : f32
    %108 = vector.broadcast %cst_32 : f32 to vector<16x32xf32>
    %109 = arith.mulf %107, %108 : vector<16x32xf32>
    %110 = vector.broadcast %2 : vector<1x32xf32> to vector<16x32xf32>
    %111 = arith.mulf %109, %110 : vector<16x32xf32>
    %112 = arith.truncf %111 : vector<16x32xf32> to vector<16x32xbf16>
    %c0_33 = arith.constant 0 : index
    %c0_34 = arith.constant 0 : index
    %113 = vector.load %arg5[%c0_33, %c0_34] : memref<32x128xbf16, #tpu.memory_space<vmem>>, vector<32x128xbf16>
    %cst_35 = arith.constant dense<0.000000e+00> : vector<16x128xf32>
    %114 = tpu.matmul %112, %113, %cst_35 {dimension_numbers = #tpu.dot_dimension_numbers<[1], [0], [0], [1], [0, 0, 1, 1], [], []>} : vector<16x32xbf16>, vector<32x128xbf16>, vector<16x128xf32> -> vector<16x128xf32>
    %c0_36 = arith.constant 0 : index
    %c0_37 = arith.constant 0 : index
    %115 = vector.load %arg6[%c0_36, %c0_37] : memref<1x128xf32, #tpu.memory_space<vmem>>, vector<1x128xf32>
    %116 = vector.broadcast %115 : vector<1x128xf32> to vector<16x128xf32>
    %117 = arith.addf %114, %116 : vector<16x128xf32>
    %cst_38 = arith.constant 5.000000e-01 : f32
    %118 = vector.broadcast %cst_38 : f32 to vector<16x128xf32>
    %119 = arith.mulf %118, %117 : vector<16x128xf32>
    %cst_39 = arith.constant 0.707106769 : f32
    %120 = vector.broadcast %cst_39 : f32 to vector<16x128xf32>
    %121 = arith.mulf %117, %120 : vector<16x128xf32>
    %cst_40 = arith.constant 0.000000e+00 : f32
    %122 = vector.broadcast %cst_40 : f32 to vector<16x128xf32>
    %123 = arith.cmpf oge, %121, %122 : vector<16x128xf32>
    %cst_41 = arith.constant 1.000000e+00 : f32
    %cst_42 = arith.constant -1.000000e+00 : f32
    %124 = vector.broadcast %cst_41 : f32 to vector<16x128xf32>
    %125 = vector.broadcast %cst_42 : f32 to vector<16x128xf32>
    %126 = arith.select %123, %124, %125 : vector<16x128xi1>, vector<16x128xf32>
    %127 = math.absf %121 : vector<16x128xf32>
    %cst_43 = arith.constant 0.327591091 : f32
    %128 = vector.broadcast %cst_43 : f32 to vector<16x128xf32>
    %129 = arith.mulf %128, %127 : vector<16x128xf32>
    %cst_44 = arith.constant 1.000000e+00 : f32
    %130 = vector.broadcast %cst_44 : f32 to vector<16x128xf32>
    %131 = arith.addf %130, %129 : vector<16x128xf32>
    %cst_45 = arith.constant 1.000000e+00 : f32
    %132 = vector.broadcast %cst_45 : f32 to vector<16x128xf32>
    %133 = arith.divf %132, %131 : vector<16x128xf32>
    %cst_46 = arith.constant 1.06140542 : f32
    %134 = vector.broadcast %cst_46 : f32 to vector<16x128xf32>
    %135 = arith.mulf %134, %133 : vector<16x128xf32>
    %cst_47 = arith.constant -1.45315206 : f32
    %136 = vector.broadcast %cst_47 : f32 to vector<16x128xf32>
    %137 = arith.addf %135, %136 : vector<16x128xf32>
    %138 = arith.mulf %137, %133 : vector<16x128xf32>
    %cst_48 = arith.constant 1.42141378 : f32
    %139 = vector.broadcast %cst_48 : f32 to vector<16x128xf32>
    %140 = arith.addf %138, %139 : vector<16x128xf32>
    %141 = arith.mulf %140, %133 : vector<16x128xf32>
    %cst_49 = arith.constant -0.284496725 : f32
    %142 = vector.broadcast %cst_49 : f32 to vector<16x128xf32>
    %143 = arith.addf %141, %142 : vector<16x128xf32>
    %144 = arith.mulf %143, %133 : vector<16x128xf32>
    %cst_50 = arith.constant 0.254829586 : f32
    %145 = vector.broadcast %cst_50 : f32 to vector<16x128xf32>
    %146 = arith.addf %144, %145 : vector<16x128xf32>
    %147 = arith.mulf %146, %133 : vector<16x128xf32>
    %cst_51 = arith.constant 0.000000e+00 : f32
    %148 = vector.broadcast %cst_51 : f32 to vector<16x128xf32>
    %149 = arith.subf %148, %127 : vector<16x128xf32>
    %150 = arith.mulf %149, %127 : vector<16x128xf32>
    %151 = math.exp %150 : vector<16x128xf32>
    %152 = arith.mulf %147, %151 : vector<16x128xf32>
    %cst_52 = arith.constant 1.000000e+00 : f32
    %153 = vector.broadcast %cst_52 : f32 to vector<16x128xf32>
    %154 = arith.subf %153, %152 : vector<16x128xf32>
    %155 = arith.mulf %126, %154 : vector<16x128xf32>
    %cst_53 = arith.constant 1.000000e+00 : f32
    %156 = vector.broadcast %cst_53 : f32 to vector<16x128xf32>
    %157 = arith.addf %156, %155 : vector<16x128xf32>
    %158 = arith.mulf %119, %157 : vector<16x128xf32>
    %159 = arith.truncf %158 : vector<16x128xf32> to vector<16x128xbf16>
    %c0_54 = arith.constant 0 : index
    %c0_55 = arith.constant 0 : index
    %160 = vector.load %arg7[%c0_54, %c0_55] : memref<128x32xbf16, #tpu.memory_space<vmem>>, vector<128x32xbf16>
    %cst_56 = arith.constant dense<0.000000e+00> : vector<16x32xf32>
    %161 = tpu.matmul %159, %160, %cst_56 {dimension_numbers = #tpu.dot_dimension_numbers<[1], [0], [0], [1], [0, 0, 1, 1], [], []>} : vector<16x128xbf16>, vector<128x32xbf16>, vector<16x32xf32> -> vector<16x32xf32>
    %162 = vector.broadcast %3 : vector<1x32xf32> to vector<16x32xf32>
    %163 = arith.addf %161, %162 : vector<16x32xf32>
    %164 = arith.addf %99, %163 : vector<16x32xf32>
    %c0_57 = arith.constant 0 : index
    %c0_58 = arith.constant 0 : index
    %c0_59 = arith.constant 0 : index
    %165 = vector.load %arg10[%c0_57, %c0_58, %c0_59] : memref<1x16x32xf32, #tpu.memory_space<vmem>>, vector<1x16x32xf32>
    %166 = vector.shape_cast %165 : vector<1x16x32xf32> to vector<16x32xf32>
    %167 = vector.shape_cast %164 : vector<16x32xf32> to vector<1x16x32xf32>
    tpu.vector_store %arg10[%c0_57, %c0_58, %c0_59], %167 {strides = array<i32>} : memref<1x16x32xf32, #tpu.memory_space<vmem>>, vector<1x16x32xf32>,
    return
  }
  func.func @transform_0(%arg0: i32) -> (i32, i32, i32) {
    %c0_i32 = arith.constant 0 : i32
    %c0_i32_0 = arith.constant 0 : i32
    %c0_i32_1 = arith.constant 0 : i32
    return %arg0, %c0_i32, %c0_i32_0 : i32, i32, i32
  }
  func.func @transform_1(%arg0: i32) -> (i32, i32) {
    %c0_i32 = arith.constant 0 : i32
    %c0_i32_0 = arith.constant 0 : i32
    %c0_i32_1 = arith.constant 0 : i32
    return %c0_i32, %c0_i32_0 : i32, i32
  }
  func.func @transform_2(%arg0: i32) -> (i32, i32) {
    %c0_i32 = arith.constant 0 : i32
    %c0_i32_0 = arith.constant 0 : i32
    %c0_i32_1 = arith.constant 0 : i32
    return %c0_i32, %c0_i32_0 : i32, i32
  }
  func.func @transform_3(%arg0: i32) -> (i32, i32) {
    %c0_i32 = arith.constant 0 : i32
    %c0_i32_0 = arith.constant 0 : i32
    %c0_i32_1 = arith.constant 0 : i32
    return %c0_i32, %c0_i32_0 : i32, i32
  }
  func.func @transform_4(%arg0: i32) -> (i32, i32) {
    %c0_i32 = arith.constant 0 : i32
    %c0_i32_0 = arith.constant 0 : i32
    %c0_i32_1 = arith.constant 0 : i32
    return %c0_i32, %c0_i32_0 : i32, i32
  }
  func.func @transform_5(%arg0: i32) -> (i32, i32) {
    %c0_i32 = arith.constant 0 : i32
    %c0_i32_0 = arith.constant 0 : i32
    %c0_i32_1 = arith.constant 0 : i32
    return %c0_i32, %c0_i32_0 : i32, i32
  }
  func.func @transform_6(%arg0: i32) -> (i32, i32) {
    %c0_i32 = arith.constant 0 : i32
    %c0_i32_0 = arith.constant 0 : i32
    %c0_i32_1 = arith.constant 0 : i32
    return %c0_i32, %c0_i32_0 : i32, i32
  }
  func.func @transform_7(%arg0: i32) -> (i32, i32) {
    %c0_i32 = arith.constant 0 : i32
    %c0_i32_0 = arith.constant 0 : i32
    %c0_i32_1 = arith.constant 0 : i32
    return %c0_i32, %c0_i32_0 : i32, i32
  }
  func.func @transform_8(%arg0: i32) -> (i32, i32) {
    %c0_i32 = arith.constant 0 : i32
    %c0_i32_0 = arith.constant 0 : i32
    %c0_i32_1 = arith.constant 0 : i32
    return %c0_i32, %c0_i32_0 : i32, i32
  }
  func.func @transform_9(%arg0: i32) -> (i32, i32, i32) {
    %c0_i32 = arith.constant 0 : i32
    %c0_i32_0 = arith.constant 0 : i32
    %c0_i32_1 = arith.constant 0 : i32
    return %arg0, %c0_i32, %c0_i32_0 : i32, i32, i32
  }
}

module attributes {stable_mosaic.version = 11 : i64} {
  func.func @_layer_kernel(%arg0: i32, %arg1: memref<1x16x32xf32, #tpu.memory_space<vmem>>, %arg2: memref<1x16x32xf32, #tpu.memory_space<vmem>>, %arg3: memref<64x32xbf16, #tpu.memory_space<vmem>>, %arg4: memref<8x32xf32, #tpu.memory_space<vmem>>, %arg5: memref<32x96xbf16, #tpu.memory_space<vmem>>, %arg6: memref<32x32xbf16, #tpu.memory_space<vmem>>, %arg7: memref<32x128xbf16, #tpu.memory_space<vmem>>, %arg8: memref<1x128xf32, #tpu.memory_space<vmem>>, %arg9: memref<128x32xbf16, #tpu.memory_space<vmem>>, %arg10: memref<16x16xf32, #tpu.memory_space<vmem>>, %arg11: memref<16x16xf32, #tpu.memory_space<vmem>>, %arg12: memref<1x16x32xf32, #tpu.memory_space<vmem>>) attributes {dimension_semantics = [#tpu.dimension_semantics<parallel>], iteration_bounds = array<i64: 2>, scalar_prefetch = 0 : i64, scratch_operands = 0 : i64, tpu.core_type = #tpu.core_type<tc>, window_params = [{transform_indices = @transform_0, window_bounds = array<i64: 1, 16, 32>}, {transform_indices = @transform_1, window_bounds = array<i64: 1, 16, 32>}, {pipeline_mode = #tpu.pipeline_mode<synchronous>, transform_indices = @transform_2, window_bounds = array<i64: 64, 32>}, {pipeline_mode = #tpu.pipeline_mode<synchronous>, transform_indices = @transform_3, window_bounds = array<i64: 8, 32>}, {pipeline_mode = #tpu.pipeline_mode<synchronous>, transform_indices = @transform_4, window_bounds = array<i64: 32, 96>}, {pipeline_mode = #tpu.pipeline_mode<synchronous>, transform_indices = @transform_5, window_bounds = array<i64: 32, 32>}, {pipeline_mode = #tpu.pipeline_mode<synchronous>, transform_indices = @transform_6, window_bounds = array<i64: 32, 128>}, {pipeline_mode = #tpu.pipeline_mode<synchronous>, transform_indices = @transform_7, window_bounds = array<i64: 1, 128>}, {pipeline_mode = #tpu.pipeline_mode<synchronous>, transform_indices = @transform_8, window_bounds = array<i64: 128, 32>}, {pipeline_mode = #tpu.pipeline_mode<synchronous>, transform_indices = @transform_9, window_bounds = array<i64: 16, 16>}, {pipeline_mode = #tpu.pipeline_mode<synchronous>, transform_indices = @transform_10, window_bounds = array<i64: 16, 16>}, {transform_indices = @transform_11, window_bounds = array<i64: 1, 16, 32>}]} {
    %c0 = arith.constant 0 : index
    %c0_0 = arith.constant 0 : index
    %0 = vector.load %arg4[%c0, %c0_0] : memref<8x32xf32, #tpu.memory_space<vmem>>, vector<8x32xf32>
    %1 = vector.extract_strided_slice %0 {offsets = [0, 0], sizes = [1, 32], strides = [1, 1]} : vector<8x32xf32> to vector<1x32xf32>
    %2 = vector.extract_strided_slice %0 {offsets = [1, 0], sizes = [1, 32], strides = [1, 1]} : vector<8x32xf32> to vector<1x32xf32>
    %3 = vector.extract_strided_slice %0 {offsets = [2, 0], sizes = [1, 32], strides = [1, 1]} : vector<8x32xf32> to vector<1x32xf32>
    %4 = vector.extract_strided_slice %0 {offsets = [3, 0], sizes = [1, 32], strides = [1, 1]} : vector<8x32xf32> to vector<1x32xf32>
    %c0_1 = arith.constant 0 : index
    %c0_2 = arith.constant 0 : index
    %c0_3 = arith.constant 0 : index
    %5 = vector.load %arg1[%c0_1, %c0_2, %c0_3] : memref<1x16x32xf32, #tpu.memory_space<vmem>>, vector<1x16x32xf32>
    %6 = vector.shape_cast %5 : vector<1x16x32xf32> to vector<16x32xf32>
    %c0_4 = arith.constant 0 : index
    %c0_5 = arith.constant 0 : index
    %c0_6 = arith.constant 0 : index
    %7 = vector.load %arg2[%c0_4, %c0_5, %c0_6] : memref<1x16x32xf32, #tpu.memory_space<vmem>>, vector<1x16x32xf32>
    %8 = vector.shape_cast %7 : vector<1x16x32xf32> to vector<16x32xf32>
    %9 = tpu.concatenate %6, %8 in 1 : vector<16x32xf32>, vector<16x32xf32> -> vector<16x64xf32>
    %10 = arith.truncf %9 : vector<16x64xf32> to vector<16x64xbf16>
    %c0_7 = arith.constant 0 : index
    %c0_8 = arith.constant 0 : index
    %11 = vector.load %arg3[%c0_7, %c0_8] : memref<64x32xbf16, #tpu.memory_space<vmem>>, vector<64x32xbf16>
    %cst = arith.constant dense<0.000000e+00> : vector<16x32xf32>
    %12 = tpu.matmul %10, %11, %cst {dimension_numbers = #tpu.dot_dimension_numbers<[1], [0], [0], [1], [0, 0, 1, 1], [], []>} : vector<16x64xbf16>, vector<64x32xbf16>, vector<16x32xf32> -> vector<16x32xf32>
    %13 = vector.broadcast %3 : vector<1x32xf32> to vector<16x32xf32>
    %14 = arith.addf %12, %13 : vector<16x32xf32>
    %15 = arith.mulf %14, %14 : vector<16x32xf32>
    %cst_9 = arith.constant dense<0.000000e+00> : vector<16xf32>
    %16 = vector.multi_reduction <add>, %15, %cst_9 [1] : vector<16x32xf32> to vector<16xf32>
    %17 = vector.shape_cast %16 : vector<16xf32> to vector<16x1xf32>
    %cst_10 = arith.constant 1.000000e-24 : f32
    %18 = vector.broadcast %cst_10 : f32 to vector<16x1xf32>
    %19 = arith.maximumf %17, %18 : vector<16x1xf32>
    %20 = math.rsqrt %19 : vector<16x1xf32>
    %21 = vector.broadcast %20 : vector<16x1xf32> to vector<16x32xf32>
    %22 = arith.mulf %14, %21 : vector<16x32xf32>
    %cst_11 = arith.constant 5.65685415 : f32
    %23 = vector.broadcast %cst_11 : f32 to vector<16x32xf32>
    %24 = arith.mulf %22, %23 : vector<16x32xf32>
    %25 = vector.broadcast %1 : vector<1x32xf32> to vector<16x32xf32>
    %26 = arith.mulf %24, %25 : vector<16x32xf32>
    %27 = arith.truncf %26 : vector<16x32xf32> to vector<16x32xbf16>
    %c0_12 = arith.constant 0 : index
    %c0_13 = arith.constant 0 : index
    %28 = vector.load %arg5[%c0_12, %c0_13] : memref<32x96xbf16, #tpu.memory_space<vmem>>, vector<32x96xbf16>
    %cst_14 = arith.constant dense<0.000000e+00> : vector<16x96xf32>
    %29 = tpu.matmul %27, %28, %cst_14 {dimension_numbers = #tpu.dot_dimension_numbers<[1], [0], [0], [1], [0, 0, 1, 1], [], []>} : vector<16x32xbf16>, vector<32x96xbf16>, vector<16x96xf32> -> vector<16x96xf32>
    %c0_15 = arith.constant 0 : index
    %c0_16 = arith.constant 0 : index
    %30 = vector.load %arg10[%c0_15, %c0_16] : memref<16x16xf32, #tpu.memory_space<vmem>>, vector<16x16xf32>
    %c0_17 = arith.constant 0 : index
    %c0_18 = arith.constant 0 : index
    %31 = vector.load %arg11[%c0_17, %c0_18] : memref<16x16xf32, #tpu.memory_space<vmem>>, vector<16x16xf32>
    %32 = vector.extract_strided_slice %29 {offsets = [0, 0], sizes = [16, 16], strides = [1, 1]} : vector<16x96xf32> to vector<16x16xf32>
    %33 = vector.extract_strided_slice %29 {offsets = [0, 32], sizes = [16, 16], strides = [1, 1]} : vector<16x96xf32> to vector<16x16xf32>
    %34 = vector.extract_strided_slice %29 {offsets = [0, 64], sizes = [16, 16], strides = [1, 1]} : vector<16x96xf32> to vector<16x16xf32>
    %35 = arith.mulf %32, %30 : vector<16x16xf32>
    %36 = vector.extract_strided_slice %32 {offsets = [0, 8], sizes = [16, 8], strides = [1, 1]} : vector<16x16xf32> to vector<16x8xf32>
    %cst_19 = arith.constant 0.000000e+00 : f32
    %37 = vector.broadcast %cst_19 : f32 to vector<16x8xf32>
    %38 = arith.subf %37, %36 : vector<16x8xf32>
    %39 = vector.extract_strided_slice %32 {offsets = [0, 0], sizes = [16, 8], strides = [1, 1]} : vector<16x16xf32> to vector<16x8xf32>
    %40 = tpu.concatenate %38, %39 in 1 : vector<16x8xf32>, vector<16x8xf32> -> vector<16x16xf32>
    %41 = arith.mulf %40, %31 : vector<16x16xf32>
    %42 = arith.addf %35, %41 : vector<16x16xf32>
    %43 = arith.mulf %33, %30 : vector<16x16xf32>
    %44 = vector.extract_strided_slice %33 {offsets = [0, 8], sizes = [16, 8], strides = [1, 1]} : vector<16x16xf32> to vector<16x8xf32>
    %cst_20 = arith.constant 0.000000e+00 : f32
    %45 = vector.broadcast %cst_20 : f32 to vector<16x8xf32>
    %46 = arith.subf %45, %44 : vector<16x8xf32>
    %47 = vector.extract_strided_slice %33 {offsets = [0, 0], sizes = [16, 8], strides = [1, 1]} : vector<16x16xf32> to vector<16x8xf32>
    %48 = tpu.concatenate %46, %47 in 1 : vector<16x8xf32>, vector<16x8xf32> -> vector<16x16xf32>
    %49 = arith.mulf %48, %31 : vector<16x16xf32>
    %50 = arith.addf %43, %49 : vector<16x16xf32>
    %51 = arith.truncf %42 : vector<16x16xf32> to vector<16x16xbf16>
    %52 = arith.truncf %50 : vector<16x16xf32> to vector<16x16xbf16>
    "tpu.trace_start"() <{level = 10 : i32, message = "qd,kd->qk"}> : () -> ()
    %cst_21 = arith.constant dense<0.000000e+00> : vector<16x16xf32>
    %53 = tpu.matmul %51, %52, %cst_21 {dimension_numbers = #tpu.dot_dimension_numbers<[1], [1], [0], [0], [0, 0, 1, 0], [], []>} : vector<16x16xbf16>, vector<16x16xbf16>, vector<16x16xf32> -> vector<16x16xf32>
    "tpu.trace_stop"() : () -> ()
    %cst_22 = arith.constant 2.500000e-01 : f32
    %54 = vector.broadcast %cst_22 : f32 to vector<16x16xf32>
    %55 = arith.mulf %53, %54 : vector<16x16xf32>
    %cst_23 = arith.constant dense<0xFF800000> : vector<16xf32>
    %56 = vector.multi_reduction <maximumf>, %55, %cst_23 [1] : vector<16x16xf32> to vector<16xf32>
    %57 = vector.shape_cast %56 : vector<16xf32> to vector<16x1xf32>
    %58 = vector.broadcast %57 : vector<16x1xf32> to vector<16x16xf32>
    %59 = arith.subf %55, %58 : vector<16x16xf32>
    %60 = math.exp %59 : vector<16x16xf32>
    %cst_24 = arith.constant dense<0.000000e+00> : vector<16xf32>
    %61 = vector.multi_reduction <add>, %60, %cst_24 [1] : vector<16x16xf32> to vector<16xf32>
    %62 = vector.shape_cast %61 : vector<16xf32> to vector<16x1xf32>
    %63 = arith.truncf %60 : vector<16x16xf32> to vector<16x16xbf16>
    %64 = arith.truncf %34 : vector<16x16xf32> to vector<16x16xbf16>
    %cst_25 = arith.constant dense<0.000000e+00> : vector<16x16xf32>
    %65 = tpu.matmul %63, %64, %cst_25 {dimension_numbers = #tpu.dot_dimension_numbers<[1], [0], [0], [1], [0, 0, 1, 1], [], []>} : vector<16x16xbf16>, vector<16x16xbf16>, vector<16x16xf32> -> vector<16x16xf32>
    %66 = vector.broadcast %62 : vector<16x1xf32> to vector<16x16xf32>
    %67 = arith.divf %65, %66 : vector<16x16xf32>
    %68 = vector.extract_strided_slice %29 {offsets = [0, 16], sizes = [16, 16], strides = [1, 1]} : vector<16x96xf32> to vector<16x16xf32>
    %69 = vector.extract_strided_slice %29 {offsets = [0, 48], sizes = [16, 16], strides = [1, 1]} : vector<16x96xf32> to vector<16x16xf32>
    %70 = vector.extract_strided_slice %29 {offsets = [0, 80], sizes = [16, 16], strides = [1, 1]} : vector<16x96xf32> to vector<16x16xf32>
    %71 = arith.mulf %68, %30 : vector<16x16xf32>
    %72 = vector.extract_strided_slice %68 {offsets = [0, 8], sizes = [16, 8], strides = [1, 1]} : vector<16x16xf32> to vector<16x8xf32>
    %cst_26 = arith.constant 0.000000e+00 : f32
    %73 = vector.broadcast %cst_26 : f32 to vector<16x8xf32>
    %74 = arith.subf %73, %72 : vector<16x8xf32>
    %75 = vector.extract_strided_slice %68 {offsets = [0, 0], sizes = [16, 8], strides = [1, 1]} : vector<16x16xf32> to vector<16x8xf32>
    %76 = tpu.concatenate %74, %75 in 1 : vector<16x8xf32>, vector<16x8xf32> -> vector<16x16xf32>
    %77 = arith.mulf %76, %31 : vector<16x16xf32>
    %78 = arith.addf %71, %77 : vector<16x16xf32>
    %79 = arith.mulf %69, %30 : vector<16x16xf32>
    %80 = vector.extract_strided_slice %69 {offsets = [0, 8], sizes = [16, 8], strides = [1, 1]} : vector<16x16xf32> to vector<16x8xf32>
    %cst_27 = arith.constant 0.000000e+00 : f32
    %81 = vector.broadcast %cst_27 : f32 to vector<16x8xf32>
    %82 = arith.subf %81, %80 : vector<16x8xf32>
    %83 = vector.extract_strided_slice %69 {offsets = [0, 0], sizes = [16, 8], strides = [1, 1]} : vector<16x16xf32> to vector<16x8xf32>
    %84 = tpu.concatenate %82, %83 in 1 : vector<16x8xf32>, vector<16x8xf32> -> vector<16x16xf32>
    %85 = arith.mulf %84, %31 : vector<16x16xf32>
    %86 = arith.addf %79, %85 : vector<16x16xf32>
    %87 = arith.truncf %78 : vector<16x16xf32> to vector<16x16xbf16>
    %88 = arith.truncf %86 : vector<16x16xf32> to vector<16x16xbf16>
    "tpu.trace_start"() <{level = 10 : i32, message = "qd,kd->qk"}> : () -> ()
    %cst_28 = arith.constant dense<0.000000e+00> : vector<16x16xf32>
    %89 = tpu.matmul %87, %88, %cst_28 {dimension_numbers = #tpu.dot_dimension_numbers<[1], [1], [0], [0], [0, 0, 1, 0], [], []>} : vector<16x16xbf16>, vector<16x16xbf16>, vector<16x16xf32> -> vector<16x16xf32>
    "tpu.trace_stop"() : () -> ()
    %cst_29 = arith.constant 2.500000e-01 : f32
    %90 = vector.broadcast %cst_29 : f32 to vector<16x16xf32>
    %91 = arith.mulf %89, %90 : vector<16x16xf32>
    %cst_30 = arith.constant dense<0xFF800000> : vector<16xf32>
    %92 = vector.multi_reduction <maximumf>, %91, %cst_30 [1] : vector<16x16xf32> to vector<16xf32>
    %93 = vector.shape_cast %92 : vector<16xf32> to vector<16x1xf32>
    %94 = vector.broadcast %93 : vector<16x1xf32> to vector<16x16xf32>
    %95 = arith.subf %91, %94 : vector<16x16xf32>
    %96 = math.exp %95 : vector<16x16xf32>
    %cst_31 = arith.constant dense<0.000000e+00> : vector<16xf32>
    %97 = vector.multi_reduction <add>, %96, %cst_31 [1] : vector<16x16xf32> to vector<16xf32>
    %98 = vector.shape_cast %97 : vector<16xf32> to vector<16x1xf32>
    %99 = arith.truncf %96 : vector<16x16xf32> to vector<16x16xbf16>
    %100 = arith.truncf %70 : vector<16x16xf32> to vector<16x16xbf16>
    %cst_32 = arith.constant dense<0.000000e+00> : vector<16x16xf32>
    %101 = tpu.matmul %99, %100, %cst_32 {dimension_numbers = #tpu.dot_dimension_numbers<[1], [0], [0], [1], [0, 0, 1, 1], [], []>} : vector<16x16xbf16>, vector<16x16xbf16>, vector<16x16xf32> -> vector<16x16xf32>
    %102 = vector.broadcast %98 : vector<16x1xf32> to vector<16x16xf32>
    %103 = arith.divf %101, %102 : vector<16x16xf32>
    %104 = tpu.concatenate %67, %103 in 1 : vector<16x16xf32>, vector<16x16xf32> -> vector<16x32xf32>
    %105 = arith.truncf %104 : vector<16x32xf32> to vector<16x32xbf16>
    %c0_33 = arith.constant 0 : index
    %c0_34 = arith.constant 0 : index
    %106 = vector.load %arg6[%c0_33, %c0_34] : memref<32x32xbf16, #tpu.memory_space<vmem>>, vector<32x32xbf16>
    %cst_35 = arith.constant dense<0.000000e+00> : vector<16x32xf32>
    %107 = tpu.matmul %105, %106, %cst_35 {dimension_numbers = #tpu.dot_dimension_numbers<[1], [0], [0], [1], [0, 0, 1, 1], [], []>} : vector<16x32xbf16>, vector<32x32xbf16>, vector<16x32xf32> -> vector<16x32xf32>
    %108 = arith.addf %14, %107 : vector<16x32xf32>
    %109 = arith.mulf %108, %108 : vector<16x32xf32>
    %cst_36 = arith.constant dense<0.000000e+00> : vector<16xf32>
    %110 = vector.multi_reduction <add>, %109, %cst_36 [1] : vector<16x32xf32> to vector<16xf32>
    %111 = vector.shape_cast %110 : vector<16xf32> to vector<16x1xf32>
    %cst_37 = arith.constant 1.000000e-24 : f32
    %112 = vector.broadcast %cst_37 : f32 to vector<16x1xf32>
    %113 = arith.maximumf %111, %112 : vector<16x1xf32>
    %114 = math.rsqrt %113 : vector<16x1xf32>
    %115 = vector.broadcast %114 : vector<16x1xf32> to vector<16x32xf32>
    %116 = arith.mulf %108, %115 : vector<16x32xf32>
    %cst_38 = arith.constant 5.65685415 : f32
    %117 = vector.broadcast %cst_38 : f32 to vector<16x32xf32>
    %118 = arith.mulf %116, %117 : vector<16x32xf32>
    %119 = vector.broadcast %2 : vector<1x32xf32> to vector<16x32xf32>
    %120 = arith.mulf %118, %119 : vector<16x32xf32>
    %121 = arith.truncf %120 : vector<16x32xf32> to vector<16x32xbf16>
    %c0_39 = arith.constant 0 : index
    %c0_40 = arith.constant 0 : index
    %122 = vector.load %arg7[%c0_39, %c0_40] : memref<32x128xbf16, #tpu.memory_space<vmem>>, vector<32x128xbf16>
    %cst_41 = arith.constant dense<0.000000e+00> : vector<16x128xf32>
    %123 = tpu.matmul %121, %122, %cst_41 {dimension_numbers = #tpu.dot_dimension_numbers<[1], [0], [0], [1], [0, 0, 1, 1], [], []>} : vector<16x32xbf16>, vector<32x128xbf16>, vector<16x128xf32> -> vector<16x128xf32>
    %c0_42 = arith.constant 0 : index
    %c0_43 = arith.constant 0 : index
    %124 = vector.load %arg8[%c0_42, %c0_43] : memref<1x128xf32, #tpu.memory_space<vmem>>, vector<1x128xf32>
    %125 = vector.broadcast %124 : vector<1x128xf32> to vector<16x128xf32>
    %126 = arith.addf %123, %125 : vector<16x128xf32>
    %cst_44 = arith.constant 5.000000e-01 : f32
    %127 = vector.broadcast %cst_44 : f32 to vector<16x128xf32>
    %128 = arith.mulf %127, %126 : vector<16x128xf32>
    %cst_45 = arith.constant 0.707106769 : f32
    %129 = vector.broadcast %cst_45 : f32 to vector<16x128xf32>
    %130 = arith.mulf %126, %129 : vector<16x128xf32>
    %cst_46 = arith.constant 0.000000e+00 : f32
    %131 = vector.broadcast %cst_46 : f32 to vector<16x128xf32>
    %132 = arith.cmpf oge, %130, %131 : vector<16x128xf32>
    %cst_47 = arith.constant 1.000000e+00 : f32
    %cst_48 = arith.constant -1.000000e+00 : f32
    %133 = vector.broadcast %cst_47 : f32 to vector<16x128xf32>
    %134 = vector.broadcast %cst_48 : f32 to vector<16x128xf32>
    %135 = arith.select %132, %133, %134 : vector<16x128xi1>, vector<16x128xf32>
    %136 = math.absf %130 : vector<16x128xf32>
    %cst_49 = arith.constant 0.327591091 : f32
    %137 = vector.broadcast %cst_49 : f32 to vector<16x128xf32>
    %138 = arith.mulf %137, %136 : vector<16x128xf32>
    %cst_50 = arith.constant 1.000000e+00 : f32
    %139 = vector.broadcast %cst_50 : f32 to vector<16x128xf32>
    %140 = arith.addf %139, %138 : vector<16x128xf32>
    %cst_51 = arith.constant 1.000000e+00 : f32
    %141 = vector.broadcast %cst_51 : f32 to vector<16x128xf32>
    %142 = arith.divf %141, %140 : vector<16x128xf32>
    %cst_52 = arith.constant 1.06140542 : f32
    %143 = vector.broadcast %cst_52 : f32 to vector<16x128xf32>
    %144 = arith.mulf %143, %142 : vector<16x128xf32>
    %cst_53 = arith.constant -1.45315206 : f32
    %145 = vector.broadcast %cst_53 : f32 to vector<16x128xf32>
    %146 = arith.addf %144, %145 : vector<16x128xf32>
    %147 = arith.mulf %146, %142 : vector<16x128xf32>
    %cst_54 = arith.constant 1.42141378 : f32
    %148 = vector.broadcast %cst_54 : f32 to vector<16x128xf32>
    %149 = arith.addf %147, %148 : vector<16x128xf32>
    %150 = arith.mulf %149, %142 : vector<16x128xf32>
    %cst_55 = arith.constant -0.284496725 : f32
    %151 = vector.broadcast %cst_55 : f32 to vector<16x128xf32>
    %152 = arith.addf %150, %151 : vector<16x128xf32>
    %153 = arith.mulf %152, %142 : vector<16x128xf32>
    %cst_56 = arith.constant 0.254829586 : f32
    %154 = vector.broadcast %cst_56 : f32 to vector<16x128xf32>
    %155 = arith.addf %153, %154 : vector<16x128xf32>
    %156 = arith.mulf %155, %142 : vector<16x128xf32>
    %cst_57 = arith.constant 0.000000e+00 : f32
    %157 = vector.broadcast %cst_57 : f32 to vector<16x128xf32>
    %158 = arith.subf %157, %136 : vector<16x128xf32>
    %159 = arith.mulf %158, %136 : vector<16x128xf32>
    %160 = math.exp %159 : vector<16x128xf32>
    %161 = arith.mulf %156, %160 : vector<16x128xf32>
    %cst_58 = arith.constant 1.000000e+00 : f32
    %162 = vector.broadcast %cst_58 : f32 to vector<16x128xf32>
    %163 = arith.subf %162, %161 : vector<16x128xf32>
    %164 = arith.mulf %135, %163 : vector<16x128xf32>
    %cst_59 = arith.constant 1.000000e+00 : f32
    %165 = vector.broadcast %cst_59 : f32 to vector<16x128xf32>
    %166 = arith.addf %165, %164 : vector<16x128xf32>
    %167 = arith.mulf %128, %166 : vector<16x128xf32>
    %168 = arith.truncf %167 : vector<16x128xf32> to vector<16x128xbf16>
    %c0_60 = arith.constant 0 : index
    %c0_61 = arith.constant 0 : index
    %169 = vector.load %arg9[%c0_60, %c0_61] : memref<128x32xbf16, #tpu.memory_space<vmem>>, vector<128x32xbf16>
    %cst_62 = arith.constant dense<0.000000e+00> : vector<16x32xf32>
    %170 = tpu.matmul %168, %169, %cst_62 {dimension_numbers = #tpu.dot_dimension_numbers<[1], [0], [0], [1], [0, 0, 1, 1], [], []>} : vector<16x128xbf16>, vector<128x32xbf16>, vector<16x32xf32> -> vector<16x32xf32>
    %171 = vector.broadcast %4 : vector<1x32xf32> to vector<16x32xf32>
    %172 = arith.addf %170, %171 : vector<16x32xf32>
    %173 = arith.addf %108, %172 : vector<16x32xf32>
    %c0_63 = arith.constant 0 : index
    %c0_64 = arith.constant 0 : index
    %c0_65 = arith.constant 0 : index
    %174 = vector.load %arg12[%c0_63, %c0_64, %c0_65] : memref<1x16x32xf32, #tpu.memory_space<vmem>>, vector<1x16x32xf32>
    %175 = vector.shape_cast %174 : vector<1x16x32xf32> to vector<16x32xf32>
    %176 = vector.shape_cast %173 : vector<16x32xf32> to vector<1x16x32xf32>
    tpu.vector_store %arg12[%c0_63, %c0_64, %c0_65], %176 {strides = array<i32>} : memref<1x16x32xf32, #tpu.memory_space<vmem>>, vector<1x16x32xf32>,
    return
  }
  func.func @transform_0(%arg0: i32) -> (i32, i32, i32) {
    %c0_i32 = arith.constant 0 : i32
    %c0_i32_0 = arith.constant 0 : i32
    %c0_i32_1 = arith.constant 0 : i32
    return %arg0, %c0_i32, %c0_i32_0 : i32, i32, i32
  }
  func.func @transform_1(%arg0: i32) -> (i32, i32, i32) {
    %c0_i32 = arith.constant 0 : i32
    %c0_i32_0 = arith.constant 0 : i32
    %c0_i32_1 = arith.constant 0 : i32
    return %arg0, %c0_i32, %c0_i32_0 : i32, i32, i32
  }
  func.func @transform_2(%arg0: i32) -> (i32, i32) {
    %c0_i32 = arith.constant 0 : i32
    %c0_i32_0 = arith.constant 0 : i32
    %c0_i32_1 = arith.constant 0 : i32
    return %c0_i32, %c0_i32_0 : i32, i32
  }
  func.func @transform_3(%arg0: i32) -> (i32, i32) {
    %c0_i32 = arith.constant 0 : i32
    %c0_i32_0 = arith.constant 0 : i32
    %c0_i32_1 = arith.constant 0 : i32
    return %c0_i32, %c0_i32_0 : i32, i32
  }
  func.func @transform_4(%arg0: i32) -> (i32, i32) {
    %c0_i32 = arith.constant 0 : i32
    %c0_i32_0 = arith.constant 0 : i32
    %c0_i32_1 = arith.constant 0 : i32
    return %c0_i32, %c0_i32_0 : i32, i32
  }
  func.func @transform_5(%arg0: i32) -> (i32, i32) {
    %c0_i32 = arith.constant 0 : i32
    %c0_i32_0 = arith.constant 0 : i32
    %c0_i32_1 = arith.constant 0 : i32
    return %c0_i32, %c0_i32_0 : i32, i32
  }
  func.func @transform_6(%arg0: i32) -> (i32, i32) {
    %c0_i32 = arith.constant 0 : i32
    %c0_i32_0 = arith.constant 0 : i32
    %c0_i32_1 = arith.constant 0 : i32
    return %c0_i32, %c0_i32_0 : i32, i32
  }
  func.func @transform_7(%arg0: i32) -> (i32, i32) {
    %c0_i32 = arith.constant 0 : i32
    %c0_i32_0 = arith.constant 0 : i32
    %c0_i32_1 = arith.constant 0 : i32
    return %c0_i32, %c0_i32_0 : i32, i32
  }
  func.func @transform_8(%arg0: i32) -> (i32, i32) {
    %c0_i32 = arith.constant 0 : i32
    %c0_i32_0 = arith.constant 0 : i32
    %c0_i32_1 = arith.constant 0 : i32
    return %c0_i32, %c0_i32_0 : i32, i32
  }
  func.func @transform_9(%arg0: i32) -> (i32, i32) {
    %c0_i32 = arith.constant 0 : i32
    %c0_i32_0 = arith.constant 0 : i32
    %c0_i32_1 = arith.constant 0 : i32
    return %c0_i32, %c0_i32_0 : i32, i32
  }
  func.func @transform_10(%arg0: i32) -> (i32, i32) {
    %c0_i32 = arith.constant 0 : i32
    %c0_i32_0 = arith.constant 0 : i32
    %c0_i32_1 = arith.constant 0 : i32
    return %c0_i32, %c0_i32_0 : i32, i32
  }
  func.func @transform_11(%arg0: i32) -> (i32, i32, i32) {
    %c0_i32 = arith.constant 0 : i32
    %c0_i32_0 = arith.constant 0 : i32
    %c0_i32_1 = arith.constant 0 : i32
    return %arg0, %c0_i32, %c0_i32_0 : i32, i32, i32
  }
}

module attributes {stable_mosaic.version = 11 : i64} {
  func.func @_l1_kernel(%arg0: i32, %arg1: memref<8x128xf32, #tpu.memory_space<vmem>>, %arg2: memref<8x128xf32, #tpu.memory_space<vmem>>, %arg3: memref<1x1xf32, #tpu.memory_space<vmem>>) attributes {dimension_semantics = [#tpu.dimension_semantics<arbitrary>], iteration_bounds = array<i64: 1>, scalar_prefetch = 0 : i64, scratch_operands = 0 : i64, tpu.core_type = #tpu.core_type<tc>, window_params = [{transform_indices = @transform_0, window_bounds = array<i64: 8, 128>}, {transform_indices = @transform_1, window_bounds = array<i64: 8, 128>}, {pipeline_mode = #tpu.pipeline_mode<synchronous>, transform_indices = @transform_2, window_bounds = array<i64: 1, 1>}]} {
    %c0_i32 = arith.constant 0 : i32
    %0 = arith.cmpi eq, %arg0, %c0_i32 : i32
    %1 = arith.extui %0 : i1 to i32
    %c0_i32_0 = arith.constant 0 : i32
    %2 = arith.cmpi ne, %1, %c0_i32_0 : i32
    scf.if %2 {
      %cst_8 = arith.constant 0.000000e+00 : f32
      %15 = vector.broadcast %cst_8 : f32 to vector<1x1xf32>
      %c0_9 = arith.constant 0 : index
      %c0_10 = arith.constant 0 : index
      %16 = vector.load %arg3[%c0_9, %c0_10] : memref<1x1xf32, #tpu.memory_space<vmem>>, vector<1x1xf32>
      tpu.vector_store %arg3[%c0_9, %c0_10], %15 {strides = array<i32>} : memref<1x1xf32, #tpu.memory_space<vmem>>, vector<1x1xf32>,
    } else {
    }
    %c0 = arith.constant 0 : index
    %c0_1 = arith.constant 0 : index
    %3 = vector.load %arg3[%c0, %c0_1] : memref<1x1xf32, #tpu.memory_space<vmem>>, vector<1x1xf32>
    %c0_2 = arith.constant 0 : index
    %c0_3 = arith.constant 0 : index
    %4 = vector.load %arg1[%c0_2, %c0_3] : memref<8x128xf32, #tpu.memory_space<vmem>>, vector<8x128xf32>
    %c0_4 = arith.constant 0 : index
    %c0_5 = arith.constant 0 : index
    %5 = vector.load %arg2[%c0_4, %c0_5] : memref<8x128xf32, #tpu.memory_space<vmem>>, vector<8x128xf32>
    %6 = arith.subf %4, %5 : vector<8x128xf32>
    %7 = math.absf %6 : vector<8x128xf32>
    %8 = vector.shape_cast %7 : vector<8x128xf32> to vector<1x8x128xf32>
    %cst = arith.constant dense<0.000000e+00> : vector<1xf32>
    %9 = vector.multi_reduction <add>, %8, %cst [1, 2] : vector<1x8x128xf32> to vector<1xf32>
    %10 = vector.shape_cast %9 : vector<1xf32> to vector<1x1x1xf32>
    %11 = vector.extract %10[0, 0, 0] : f32 from vector<1x1x1xf32>
    %12 = vector.broadcast %11 : f32 to vector<1x1xf32>
    %13 = arith.addf %3, %12 : vector<1x1xf32>
    %c0_6 = arith.constant 0 : index
    %c0_7 = arith.constant 0 : index
    %14 = vector.load %arg3[%c0_6, %c0_7] : memref<1x1xf32, #tpu.memory_space<vmem>>, vector<1x1xf32>
    tpu.vector_store %arg3[%c0_6, %c0_7], %13 {strides = array<i32>} : memref<1x1xf32, #tpu.memory_space<vmem>>, vector<1x1xf32>,
    return
  }
  func.func @transform_0(%arg0: i32) -> (i32, i32) {
    %c0_i32 = arith.constant 0 : i32
    %c0_i32_0 = arith.constant 0 : i32
    return %arg0, %c0_i32 : i32, i32
  }
  func.func @transform_1(%arg0: i32) -> (i32, i32) {
    %c0_i32 = arith.constant 0 : i32
    %c0_i32_0 = arith.constant 0 : i32
    return %arg0, %c0_i32 : i32, i32
  }
  func.func @transform_2(%arg0: i32) -> (i32, i32) {
    %c0_i32 = arith.constant 0 : i32
    %c0_i32_0 = arith.constant 0 : i32
    %c0_i32_1 = arith.constant 0 : i32
    return %c0_i32, %c0_i32_0 : i32, i32
  }
}

</mosaic_0001>

<llo_original>
// kernel: duration_predictor_forward.5
$region0: #{duration_predictor_forward.5}
  #allocation0 [shape = 'u32[]', space=smem, size = 0x4, offset = 0x4, fixed_abs, tag = 'smem constant byte address 0x4 - core index']
  #allocation1 [shape = 'u32[144,128]{1,0:T(1,128)}', space=vmem, size = 0x12000, scoped, tag = 'internal scratch']
  %s0 = inlined_call_operand.vmem [shape: f32[32,32], index: 0, kind: input, shape index: {}]
  %s1 = inlined_call_operand.vmem [shape: f32[32,32], index: 1, kind: input, shape index: {}]
  %s2 = inlined_call_operand.vmem [shape: f32[32,32], index: 2, kind: input, shape index: {}]
  %s3 = inlined_call_operand.vmem [shape: bf16[96,32], index: 3, kind: input, shape index: {}]
  %s4 = inlined_call_operand.vmem [shape: f32[1,32], index: 4, kind: input, shape index: {}]
  %s5 = inlined_call_operand.vmem [shape: f32[32,32], index: 5, kind: output, shape index: {}]
  %s6 = sld [smem:[#allocation0]]
  $region30: #{duration_predictor_forward.5} parent=0
    _
  %s8 = ssub.s32 1, %s6
  %s9 = scalar_select 0, %s8, %s6
  // Predicated region
  $region2: #{duration_predictor_forward.5} parent=0 // pred_check
    _
  $region3: #{duration_predictor_forward.5} parent=0 // pred_check_branch
    %11 = sbr.rel (0) target = $region5
  $region4: #{duration_predictor_forward.5} parent=0 // pred_region
    _
  $region5: #{duration_predictor_forward.5} parent=0 // pred_fallthru
    _
  // Predicated region
  $region6: #{duration_predictor_forward.5} parent=0 // pred_check
    _
  $region7: #{duration_predictor_forward.5} parent=0 // pred_check_branch
    %13 = sbr.rel (0) target = $region9
  $region8: #{duration_predictor_forward.5} parent=0 // pred_region
    _
  $region9: #{duration_predictor_forward.5} parent=0 // pred_fallthru
    _
  // Predicated region
  $region10: #{duration_predictor_forward.5} parent=0 // pred_check
    _
  $region11: #{duration_predictor_forward.5} parent=0 // pred_check_branch
    %15 = sbr.rel (0) target = $region13
  $region12: #{duration_predictor_forward.5} parent=0 // pred_region
    _
  $region13: #{duration_predictor_forward.5} parent=0 // pred_fallthru
    _
  // Predicated region
  $region14: #{duration_predictor_forward.5} parent=0 // pred_check
    _
  $region15: #{duration_predictor_forward.5} parent=0 // pred_check_branch
    %17 = sbr.rel (0) target = $region17
  $region16: #{duration_predictor_forward.5} parent=0 // pred_region
    _
  $region17: #{duration_predictor_forward.5} parent=0 // pred_fallthru
    _
  // Predicated region
  $region18: #{duration_predictor_forward.5} parent=0 // pred_check
    _
  $region19: #{duration_predictor_forward.5} parent=0 // pred_check_branch
    %19 = sbr.rel (0) target = $region21
  $region20: #{duration_predictor_forward.5} parent=0 // pred_region
    _
  $region21: #{duration_predictor_forward.5} parent=0 // pred_fallthru
    _
  %v21 = vld [vmem:[%s0] sm:$0xff]
  %v22 = vld [vmem:[%s0 + $0x8] sm:$0xff]
  %v23 = vld [vmem:[%s0 + $0x10] sm:$0xff]
  %v24 = vld [vmem:[%s0 + $0x18] sm:$0xff]
  %v25 = vld [vmem:[%s1] sm:$0xff]
  %v26 = vld [vmem:[%s1 + $0x8] sm:$0xff]
  %v27 = vld [vmem:[%s1 + $0x10] sm:$0xff]
  %v28 = vld [vmem:[%s1 + $0x18] sm:$0xff]
  %v29 = vld [vmem:[%s2] sm:$0xff]
  %v30 = vld [vmem:[%s2 + $0x8] sm:$0xff]
  %v31 = vld [vmem:[%s2 + $0x10] sm:$0xff]
  %v32 = vld [vmem:[%s2 + $0x18] sm:$0xff]
  %37 = vrot.lane.b32.xlu0 %v25, 32
  %v38 = vpop.permute.xlu0 %37
  %39 = vrot.lane.b32.xlu0 %v26, 32
  %v40 = vpop.permute.xlu0 %39
  %41 = vrot.lane.b32.xlu0 %v27, 32
  %v42 = vpop.permute.xlu0 %41
  %43 = vrot.lane.b32.xlu0 %v28, 32
  %v44 = vpop.permute.xlu0 %43
  %53 = vrot.lane.b32.xlu0 %v29, 64
  %v54 = vpop.permute.xlu0 %53
  %55 = vrot.lane.b32.xlu0 %v30, 64
  %v56 = vpop.permute.xlu0 %55
  %57 = vrot.lane.b32.xlu0 %v31, 64
  %v58 = vpop.permute.xlu0 %57
  %59 = vrot.lane.b32.xlu0 %v32, 64
  %v60 = vpop.permute.xlu0 %59
  %vm65 = vcmask 261120
  %v66 = vsel %vm65, %v21, %v38
  %v67 = vsel %vm65, %v22, %v40
  %v68 = vsel %vm65, %v23, %v42
  %v69 = vsel %vm65, %v24, %v44
  %vm70 = vcmask 523264
  %v71 = vsel %vm70, %v66, %v54
  %v72 = vsel %vm70, %v67, %v56
  %v73 = vsel %vm70, %v68, %v58
  %v74 = vsel %vm70, %v69, %v60
  %v75 = vpack.c.bf16 %v72, %v71
  %v76 = vpack.c.bf16 %v74, %v73
  %v77 = vld [vmem:[%s3] sm:$0xf]
  %v78 = vld [vmem:[%s3 + $0x4] sm:$0xf]
  %v79 = vld [vmem:[%s3 + $0x8] sm:$0xf]
  %v80 = vld [vmem:[%s3 + $0xc] sm:$0xf]
  %v81 = vld [vmem:[%s3 + $0x10] sm:$0xf]
  %v82 = vld [vmem:[%s3 + $0x14] sm:$0xf]
  %v83 = vld [vmem:[%s3 + $0x18] sm:$0xf]
  %v84 = vld [vmem:[%s3 + $0x1c] sm:$0xf]
  %v85 = vld [vmem:[%s3 + $0x20] sm:$0xf]
  %v86 = vld [vmem:[%s3 + $0x24] sm:$0xf]
  %v87 = vld [vmem:[%s3 + $0x28] sm:$0xf]
  %v88 = vld [vmem:[%s3 + $0x2c] sm:$0xf]
  %v89 = vld [vmem:[%s4] sm:$0x1]
  %v91 = vlaneseq
  %v92 = vshrl.u32 %v91, 7
  %v93 = vsub.s32 0, %v92
  %v94 = vrot.slane %v89, %v93
  %v108 = vunpack.c.l.b16 %v77
  %v109 = vunpack.c.l.b16 %v78
  %v110 = vunpack.c.l.b16 %v79
  %v111 = vunpack.c.l.b16 %v80
  %v112 = vunpack.c.l.b16 %v81
  %v113 = vunpack.c.l.b16 %v82
  %v114 = vunpack.c.l.b16 %v83
  %v115 = vunpack.c.l.b16 %v84
  %v116 = vunpack.c.l.b16 %v85
  %v117 = vunpack.c.l.b16 %v86
  %v118 = vunpack.c.l.b16 %v87
  %v119 = vunpack.c.l.b16 %v88
  %v120 = vpack.c.b16 %v109, %v108
  %v121 = vpack.c.b16 %v111, %v110
  %v122 = vpack.c.b16 %v113, %v112
  %v123 = vpack.c.b16 %v115, %v114
  %v124 = vpack.c.b16 %v117, %v116
  %v125 = vpack.c.b16 %v119, %v118
  %vm132 = vcmask 785408
  %v134 = vsel %vm132, %v75, 0
  %v137 = vsel %vm132, %v76, 0
  %139 = vmatprep.subr.bf16.mxu0 0
  %140 = vmatpush1.bf16.msra.mxu0 0
  %141 = vmatprep.subr.bf16.mxu0 0
  %142 = vmatpush1.bf16.msra.mxu0 0
  %143 = vmatprep.subr.bf16.mxu0 0
  %144 = vmatpush1.bf16.msra.mxu0 %v125
  %145 = vmatprep.subr.bf16.mxu0 0
  %146 = vmatpush1.bf16.msra.mxu0 %v124
  %147 = vmatprep.subr.bf16.mxu0 0
  %148 = vmatpush1.bf16.msra.mxu0 %v123
  %149 = vmatprep.subr.bf16.mxu0 0
  %150 = vmatpush1.bf16.msra.mxu0 %v122
  %151 = vmatprep.subr.bf16.mxu0 0
  %152 = vmatpush1.bf16.msra.mxu0 %v121
  %153 = vmatprep.subr.bf16.mxu0 0
  %154 = vmatpush1.bf16.msra.mxu0 %v120
  %155 = vmatprep.subr.bf16.mxu0 0
  %156 = vmatpush2.bf16.msra.mxu0 0
  %157 = vmatprep.subr.bf16.mxu0 0
  %158 = vmatpush2.bf16.msra.mxu0 0
  %159 = vmatprep.subr.bf16.mxu0 0
  %160 = vmatpush2.bf16.msra.mxu0 0
  %161 = vmatprep.subr.bf16.mxu0 0
  %162 = vmatpush2.bf16.msra.mxu0 0
  %163 = vmatprep.subr.bf16.mxu0 0
  %164 = vmatpush2.bf16.msra.mxu0 0
  %165 = vmatprep.subr.bf16.mxu0 0
  %166 = vmatpush2.bf16.msra.mxu0 0
  %167 = vmatprep.subr.bf16.mxu0 0
  %168 = vmatpush2.bf16.msra.mxu0 0
  %169 = vmatprep.subr.bf16.mxu0 0
  %170 = vmatpush2.bf16.msra.mxu0 0
  %171 = vmatprep.mubr.bf16.mxu0 0
  %172 = vmatmul.mubr.bf16.gmra.mxu0 %v134
  %v173 = vpop.f32.mrf.mxu0
  %v174 = vadd.f32 %v94, %v173
  %v175 = vpop.f32.mrf.mxu0
  %v176 = vpop.f32.mrf.mxu0
  %v177 = vadd.f32 %v94, %v176
  %v178 = vpop.f32.mrf.mxu0
  %179 = vmatprep.mubr.bf16.mxu0 0
  %180 = vmatmul.mubr.bf16.gmra.mxu0 %v137
  %v181 = vpop.f32.mrf.mxu0
  %v182 = vadd.f32 %v94, %v181
  %v183 = vpop.f32.mrf.mxu0
  %v184 = vpop.f32.mrf.mxu0
  %v185 = vadd.f32 %v94, %v184
  %v186 = vpop.f32.mrf.mxu0
  %187 = vdwg.mxu0
  %188 = vst.msk [vmem:[%s5] sm:$0xff] %vm65, %v174
  %189 = vst.msk [vmem:[%s5 + $0x8] sm:$0xff] %vm65, %v177
  %190 = vst.msk [vmem:[%s5 + $0x10] sm:$0xff] %vm65, %v182
  %191 = vst.msk [vmem:[%s5 + $0x18] sm:$0xff] %vm65, %v185
  // Predicated region
  $region22: #{duration_predictor_forward.5} parent=0 // pred_check
    _
  $region23: #{duration_predictor_forward.5} parent=0 // pred_check_branch
    %193 = sbr.rel (0) target = $region25
  $region24: #{duration_predictor_forward.5} parent=0 // pred_region
    _
  $region25: #{duration_predictor_forward.5} parent=0 // pred_fallthru
    _
  // Predicated region
  $region26: #{duration_predictor_forward.5} parent=0 // pred_check
    _
  $region27: #{duration_predictor_forward.5} parent=0 // pred_check_branch
    %195 = sbr.rel (0) target = $region29
  $region28: #{duration_predictor_forward.5} parent=0 // pred_region
    _
  $region29: #{duration_predictor_forward.5} parent=0 // pred_fallthru
    _

// kernel: duration_predictor_forward.6
$region0: #{duration_predictor_forward.6}
  #allocation0 [shape = 'u32[]', space=smem, size = 0x4, offset = 0x4, fixed_abs, tag = 'smem constant byte address 0x4 - core index']
  #allocation1 [shape = 'u32[144,128]{1,0:T(1,128)}', space=vmem, size = 0x12000, scoped, tag = 'internal scratch']
  %s0 = inlined_call_operand.vmem [shape: f32[2,16,32], index: 0, kind: input, shape index: {}]
  %s1 = inlined_call_operand.vmem [shape: f32[3,32], index: 1, kind: input, shape index: {}]
  %s2 = inlined_call_operand.vmem [shape: f32[1,32], index: 2, kind: input, shape index: {}]
  %s3 = inlined_call_operand.vmem [shape: f32[2,16,32], index: 3, kind: output, shape index: {}]
  %s4 = sld [smem:[#allocation0]]
  $region45: #{duration_predictor_forward.6} parent=0
    _
  %s6 = ssub.s32 1, %s4
  %s7 = scalar_select 0, %s6, %s4
  loop: start=0, step=1, limit=4
  $region2: #{duration_predictor_forward.6} parent=0 // loop_pre_header
    _
  $region3: #{duration_predictor_forward.6} parent=0 // loop_header
    %s9 = sphi 0, %s13
    %p10 = scmp.ge.s32.totalorder %s9, 4
    %s19 = sphi 0, %s21
    %s22 = sphi 0, %s19
    %s23 = sphi 0, %s22
    %s39 = sphi 0, %s23
    %s43 = sphi 0, %s43
    %s45 = sphi 0, %s43
    %s46 = sphi 0, %s45
    %s60 = sphi 0, %s46
    %s64 = sphi 0, %s64
    %s66 = sphi 0, %s64
    %s67 = sphi 0, %s66
    %s81 = sphi 0, %s67
    %s87 = sphi 0, %s89
    %s90 = sphi 0, %s87
    %s91 = sphi 0, %s90
    %s107 = sphi 0, %s91
  $region4: #{duration_predictor_forward.6} parent=0 // loop_header_branch
    %12 = sbr.rel (%p10) target = $region8
  $region5: #{duration_predictor_forward.6} parent=0 // loop_body
    %s14 = ssub.s32 %s9, 1
    %s15 = ssub.s32 %s9, 2
    %s16 = sadd.s32 %s9, 1
    %s17 = ssub.s32 %s9, %s16
    %p18 = scmp.eq.s32.totalorder %s17, 0
    %s20 = sadd.s32 %s19, 1
    %s21 = scalar_select %p18, %s19, %s20
    %p24 = pneg %p18
    %p25 = scmp.eq.s32.totalorder %s9, 1
    %p26 = por %p24, %p25
    %p27 = scmp.ne.s32.totalorder %s19, %s22
    %p28 = scmp.eq.s32.totalorder %s9, 0
    %p29 = por %p27, %p28
    %p30 = scmp.ne.s32.totalorder %s19, %s22
    %p31 = scmp.eq.s32.totalorder %s14, 1
    %p32 = por %p30, %p31
    %p33 = scmp.ne.s32.totalorder %s22, %s23
    %p34 = scmp.eq.s32.totalorder %s14, 0
    %p35 = por %p33, %p34
    %p36 = scmp.ne.s32.totalorder %s22, %s23
    %p37 = scmp.eq.s32.totalorder %s15, 1
    %p38 = por %p36, %p37
    %p40 = scmp.ne.s32.totalorder %s23, %s39
    %p41 = scmp.eq.s32.totalorder %s15, 0
    %p42 = por %p40, %p41
    %s44 = sadd.s32 %s43, 1
    %p47 = scmp.eq.s32.totalorder %s9, 1
    %p48 = scmp.ne.s32.totalorder %s43, %s45
    %p49 = scmp.eq.s32.totalorder %s9, 0
    %p50 = por %p48, %p49
    %p51 = scmp.ne.s32.totalorder %s43, %s45
    %p52 = scmp.eq.s32.totalorder %s14, 1
    %p53 = por %p51, %p52
    %p54 = scmp.ne.s32.totalorder %s45, %s46
    %p55 = scmp.eq.s32.totalorder %s14, 0
    %p56 = por %p54, %p55
    %p57 = scmp.ne.s32.totalorder %s45, %s46
    %p58 = scmp.eq.s32.totalorder %s15, 1
    %p59 = por %p57, %p58
    %p61 = scmp.ne.s32.totalorder %s46, %s60
    %p62 = scmp.eq.s32.totalorder %s15, 0
    %p63 = por %p61, %p62
    %s65 = sadd.s32 %s64, 1
    %p68 = scmp.eq.s32.totalorder %s9, 1
    %p69 = scmp.ne.s32.totalorder %s64, %s66
    %p70 = scmp.eq.s32.totalorder %s9, 0
    %p71 = por %p69, %p70
    %p72 = scmp.ne.s32.totalorder %s64, %s66
    %p73 = scmp.eq.s32.totalorder %s14, 1
    %p74 = por %p72, %p73
    %p75 = scmp.ne.s32.totalorder %s66, %s67
    %p76 = scmp.eq.s32.totalorder %s14, 0
    %p77 = por %p75, %p76
    %p78 = scmp.ne.s32.totalorder %s66, %s67
    %p79 = scmp.eq.s32.totalorder %s15, 1
    %p80 = por %p78, %p79
    %p82 = scmp.ne.s32.totalorder %s67, %s81
    %p83 = scmp.eq.s32.totalorder %s15, 0
    %p84 = por %p82, %p83
    %s85 = ssub.s32 %s9, %s16
    %p86 = scmp.eq.s32.totalorder %s85, 0
    %s88 = sadd.s32 %s87, 1
    %s89 = scalar_select %p86, %s87, %s88
    %p92 = pneg %p86
    %p93 = scmp.eq.s32.totalorder %s9, 1
    %p94 = por %p92, %p93
    %p95 = scmp.ne.s32.totalorder %s87, %s90
    %p96 = scmp.eq.s32.totalorder %s9, 0
    %p97 = por %p95, %p96
    %p98 = scmp.ne.s32.totalorder %s87, %s90
    %p99 = scmp.eq.s32.totalorder %s14, 1
    %p100 = por %p98, %p99
    %p101 = scmp.ne.s32.totalorder %s90, %s91
    %p102 = scmp.eq.s32.totalorder %s14, 0
    %p103 = por %p101, %p102
    %p104 = scmp.ne.s32.totalorder %s90, %s91
    %p105 = scmp.eq.s32.totalorder %s15, 1
    %p106 = por %p104, %p105
    %p108 = scmp.ne.s32.totalorder %s91, %s107
    %p109 = scmp.eq.s32.totalorder %s15, 0
    %p110 = por %p108, %p109
    %p111 = scmp.le.s32.totalorder 1, %s9
    %p112 = scmp.lt.s32.totalorder %s9, 3
    %p113 = pnand %p111, %p112
    %p114 = pneg %p113
    // Predicated region
    $region9: #{duration_predictor_forward.6} parent=5 // pred_check
      _
    $region10: #{duration_predictor_forward.6} parent=5 // pred_check_branch
      %116 = sbr.rel (%p113) target = $region12
    $region11: #{duration_predictor_forward.6} parent=5 // pred_region
      %s117 = ssub.s32 %s9, 1
      // Predicated region
      $region13: #{duration_predictor_forward.6} parent=11 // pred_check
        %p118 = pneg %p56
      $region14: #{duration_predictor_forward.6} parent=11 // pred_check_branch
        %120 = sbr.rel (%p118) target = $region16
      $region15: #{duration_predictor_forward.6} parent=11 // pred_region
        _
      $region16: #{duration_predictor_forward.6} parent=11 // pred_fallthru
        _
      // Predicated region
      $region17: #{duration_predictor_forward.6} parent=11 // pred_check
        %p121 = pneg %p77
      $region18: #{duration_predictor_forward.6} parent=11 // pred_check_branch
        %123 = sbr.rel (%p121) target = $region20
      $region19: #{duration_predictor_forward.6} parent=11 // pred_region
        _
      $region20: #{duration_predictor_forward.6} parent=11 // pred_fallthru
        _
    $region12: #{duration_predictor_forward.6} parent=5 // pred_fallthru
      _
    %p124 = scmp.lt.s32.totalorder %s9, 2
    // Predicated region
    $region21: #{duration_predictor_forward.6} parent=5 // pred_check
      %p125 = pneg %p124
    $region22: #{duration_predictor_forward.6} parent=5 // pred_check_branch
      %127 = sbr.rel (%p125) target = $region24
    $region23: #{duration_predictor_forward.6} parent=5 // pred_region
      // Predicated region
      $region25: #{duration_predictor_forward.6} parent=23 // pred_check
        %p128 = pneg %p29
      $region26: #{duration_predictor_forward.6} parent=23 // pred_check_branch
        %130 = sbr.rel (%p128) target = $region28
      $region27: #{duration_predictor_forward.6} parent=23 // pred_region
        %p131 = scmp.lt.s32.totalorder %s9, 1
        %s132 = scalar_select %p131, %s9, 1
        %s133 = smul.addr %s132, 2
        %s134 = smul.addr %s133, 8
        %s135 = scalar_lea.vmem %s0, %s134
      $region28: #{duration_predictor_forward.6} parent=23 // pred_fallthru
        _
    $region24: #{duration_predictor_forward.6} parent=5 // pred_fallthru
      _
    %p136 = scmp.le.s32.totalorder 1, %s9
    %p137 = scmp.lt.s32.totalorder %s9, 3
    %p138 = pnand %p136, %p137
    %p139 = pneg %p138
    // Predicated region
    $region29: #{duration_predictor_forward.6} parent=5 // pred_check
      _
    $region30: #{duration_predictor_forward.6} parent=5 // pred_check_branch
      %141 = sbr.rel (%p138) target = $region32
    $region31: #{duration_predictor_forward.6} parent=5 // pred_region
      %s142 = ssub.s32 %s9, 1
      %p143 = scmp.lt.s32.totalorder %s14, 1
      %s144 = scalar_select %p143, %s14, 1
      %s145 = smul.addr %s144, 2
      %s146 = smul.addr %s145, 8
      %s147 = scalar_lea.vmem %s0, %s146
      %p148 = pneg %p35
      %p149 = pneg %p32
      %p150 = pneg %p56
      %p151 = pneg %p53
      %p152 = pneg %p77
      %p153 = pneg %p74
      %p154 = pneg %p103
      %p155 = pneg %p100
      %p156 = scmp.lt.s32.totalorder %s14, 1
      %s157 = scalar_select %p156, %s14, 1
      %s158 = smul.addr %s157, 2
      %s159 = smul.addr %s158, 8
      %s160 = scalar_lea.vmem %s3, %s159
      %p161 = scmp.lt.s32.totalorder %s14, 1
      %s162 = scalar_select %p161, %s14, 1
      %s163 = smul.addr %s162, 2
      %s164 = smul.addr %s163, 8
      %s165 = scalar_lea.vmem %s0, %s164
      %p166 = scmp.lt.s32.totalorder %s14, 1
      %s167 = scalar_select %p166, %s14, 1
      %s168 = smul.addr %s167, 2
      %s169 = smul.addr %s168, 8
      %s170 = scalar_lea.vmem %s3, %s169
      %v171 = vld [vmem:[%s165] sm:$0xff]
      %v172 = vld [vmem:[%s165 + $0x8] sm:$0xff]
      %v173 = vld [vmem:[%s1] sm:$0x7]
      %vm176 = vcmask 1040384
      %v177 = vrot.slane %v171, 7
      %v178 = vrot.slane %v172, 7
      %v179 = vsel %vm176, %v177, %v178
      %v183 = vsel %vm176, 0.0, %v177
      %v184 = vsel %vm176, %v178, 0.0
      %v185 = vld [vmem:[%s2] sm:$0x1]
      %v187 = vlaneseq
      %v188 = vshrl.u32 %v187, 7
      %v189 = vsub.s32 0, %v188
      %v190 = vrot.slane %v185, %v189
      %v192 = vadd.f32 %v190, 0.0
      %v193 = vlaneseq
      %v194 = vshrl.u32 %v193, 7
      %v195 = vsub.s32 0, %v194
      %v196 = vrot.slane %v173, %v195
      %v197 = vmul.f32 %v183, %v196
      %v198 = vmul.f32 %v179, %v196
      %v199 = vadd.f32 %v192, %v197
      %v200 = vadd.f32 %v192, %v198
      %v201 = vlaneseq
      %v202 = vshrl.u32 %v201, 7
      %v203 = vsub.s32 1, %v202
      %v204 = vrot.slane %v173, %v203
      %v205 = vmul.f32 %v183, %v204
      %v206 = vmul.f32 %v179, %v204
      %v207 = vmul.f32 %v184, %v204
      %vm211 = vcmask 1046528
      %v212 = vrot.slane %v205, 1
      %v213 = vrot.slane %v206, 1
      %v214 = vsel %vm211, %v212, %v213
      %v215 = vrot.slane %v207, 1
      %v216 = vsel %vm211, %v213, %v215
      %v219 = vadd.f32 %v199, %v214
      %v220 = vadd.f32 %v200, %v216
      %v221 = vlaneseq
      %v222 = vshrl.u32 %v221, 7
      %v223 = vsub.s32 2, %v222
      %v224 = vrot.slane %v173, %v223
      %v225 = vmul.f32 %v183, %v224
      %v226 = vmul.f32 %v179, %v224
      %v227 = vmul.f32 %v184, %v224
      %vm231 = vcmask 1045504
      %v232 = vrot.slane %v225, 2
      %v233 = vrot.slane %v226, 2
      %v234 = vsel %vm231, %v232, %v233
      %v235 = vrot.slane %v227, 2
      %v236 = vsel %vm231, %v233, %v235
      %v239 = vadd.f32 %v219, %v234
      %v240 = vadd.f32 %v220, %v236
      %v241 = vmul.f32 %v239, 0.5
      %v242 = vmul.f32 %v240, 0.5
      %v243 = vmul.f32 %v239, 0.70710677
      %v244 = vmul.f32 %v240, 0.70710677
      %vm245 = vcmp.ge.f32.partialorder %v243, 0.0
      %vm246 = vcmp.ge.f32.partialorder %v244, 0.0
      %v247 = vsel %vm245, 1.0, -1.0
      %v248 = vsel %vm246, 1.0, -1.0
      %v249 = vand.u32 2147483647, %v243
      %v250 = vand.u32 2147483647, %v244
      %v251 = vmul.f32 %v249, 0.3275911
      %v252 = vmul.f32 %v250, 0.3275911
      %v253 = vadd.f32 %v251, 1.0
      %v254 = vadd.f32 %v252, 1.0
      %v255 = vrcp.pop %v253
      %v256 = vmul.f32 1.0, %v255
      %v257 = vrcp.pop %v254
      %v258 = vmul.f32 1.0, %v257
      %v259 = vmul.f32 %v256, 1.0614054
      %v260 = vmul.f32 %v258, 1.0614054
      %v261 = vadd.f32 %v259, -1.4531521
      %v262 = vadd.f32 %v260, -1.4531521
      %v263 = vmul.f32 %v261, %v256
      %v264 = vmul.f32 %v262, %v258
      %v265 = vadd.f32 %v263, 1.4214138
      %v266 = vadd.f32 %v264, 1.4214138
      %v267 = vmul.f32 %v265, %v256
      %v268 = vmul.f32 %v266, %v258
      %v269 = vadd.f32 %v267, -0.28449672
      %v270 = vadd.f32 %v268, -0.28449672
      %v271 = vmul.f32 %v269, %v256
      %v272 = vmul.f32 %v270, %v258
      %v273 = vadd.f32 %v271, 0.2548296
      %v274 = vadd.f32 %v272, 0.2548296
      %v275 = vmul.f32 %v273, %v256
      %v276 = vmul.f32 %v274, %v258
      %v277 = vsub.f32 0.0, %v249
      %v278 = vsub.f32 0.0, %v250
      %v279 = vmul.f32 %v277, %v249
      %v280 = vmul.f32 %v278, %v250
      %v281 = vmul.f32 %v279, 1.442695
      %v282 = vpow.pop %v281
      %v283 = vmul.f32 %v280, 1.442695
      %v284 = vpow.pop %v283
      %v285 = vmul.f32 %v275, %v282
      %v286 = vmul.f32 %v276, %v284
      %v287 = vsub.f32 1.0, %v285
      %v288 = vsub.f32 1.0, %v286
      %v289 = vmul.f32 %v247, %v287
      %v290 = vmul.f32 %v248, %v288
      %v291 = vadd.f32 %v289, 1.0
      %v292 = vadd.f32 %v290, 1.0
      %v293 = vmul.f32 %v241, %v291
      %v294 = vmul.f32 %v242, %v292
      %v295 = vadd.f32 %v293, %v171
      %v296 = vadd.f32 %v294, %v172
      %vm297 = vcmask 261120
      %298 = vst.msk [vmem:[%s170] sm:$0xff] %vm297, %v295
      %299 = vst.msk [vmem:[%s170 + $0x8] sm:$0xff] %vm297, %v296
      %p300 = scmp.lt.s32.totalorder %s14, 1
      %s301 = scalar_select %p300, %s14, 1
      %s302 = smul.addr %s301, 2
      %s303 = smul.addr %s302, 8
      %s304 = scalar_lea.vmem %s3, %s303
      // Predicated region
      $region33: #{duration_predictor_forward.6} parent=31 // pred_check
        %p305 = pneg %p100
      $region34: #{duration_predictor_forward.6} parent=31 // pred_check_branch
        %307 = sbr.rel (%p305) target = $region36
      $region35: #{duration_predictor_forward.6} parent=31 // pred_region
        _
      $region36: #{duration_predictor_forward.6} parent=31 // pred_fallthru
        _
    $region32: #{duration_predictor_forward.6} parent=5 // pred_fallthru
      _
    %p308 = scmp.le.s32.totalorder 2, %s9
    // Predicated region
    $region37: #{duration_predictor_forward.6} parent=5 // pred_check
      %p309 = pneg %p308
    $region38: #{duration_predictor_forward.6} parent=5 // pred_check_branch
      %311 = sbr.rel (%p309) target = $region40
    $region39: #{duration_predictor_forward.6} parent=5 // pred_region
      %s312 = ssub.s32 %s9, 2
      // Predicated region
      $region41: #{duration_predictor_forward.6} parent=39 // pred_check
        %p313 = pneg %p106
      $region42: #{duration_predictor_forward.6} parent=39 // pred_check_branch
        %315 = sbr.rel (%p313) target = $region44
      $region43: #{duration_predictor_forward.6} parent=39 // pred_region
        %p316 = scmp.lt.s32.totalorder %s15, 1
        %s317 = scalar_select %p316, %s15, 1
        %s318 = smul.addr %s317, 2
        %s319 = smul.addr %s318, 8
        %s320 = scalar_lea.vmem %s3, %s319
      $region44: #{duration_predictor_forward.6} parent=39 // pred_fallthru
        _
    $region40: #{duration_predictor_forward.6} parent=5 // pred_fallthru
      _
  $region6: #{duration_predictor_forward.6} parent=0 // loop_footer
    %s13 = sadd.s32 1, %s9
  $region7: #{duration_predictor_forward.6} parent=0 // loop_footer_branch
    %8 = sbr.rel target = $region3
  $region8: #{duration_predictor_forward.6} parent=0 // loop_exit
    _

// kernel: duration_predictor_forward.7
$region0: #{duration_predictor_forward.7}
  #allocation0 [shape = 'u32[]', space=smem, size = 0x4, offset = 0x4, fixed_abs, tag = 'smem constant byte address 0x4 - core index']
  #allocation1 [shape = 'u32[144,128]{1,0:T(1,128)}', space=vmem, size = 0x12000, scoped, tag = 'internal scratch']
  %s0 = inlined_call_operand.vmem [shape: f32[2,16,32], index: 0, kind: input, shape index: {}]
  %s1 = inlined_call_operand.vmem [shape: f32[8,32], index: 1, kind: input, shape index: {}]
  %s2 = inlined_call_operand.vmem [shape: bf16[32,96], index: 2, kind: input, shape index: {}]
  %s3 = inlined_call_operand.vmem [shape: bf16[32,32], index: 3, kind: input, shape index: {}]
  %s4 = inlined_call_operand.vmem [shape: bf16[32,128], index: 4, kind: input, shape index: {}]
  %s5 = inlined_call_operand.vmem [shape: f32[1,128], index: 5, kind: input, shape index: {}]
  %s6 = inlined_call_operand.vmem [shape: bf16[128,32], index: 6, kind: input, shape index: {}]
  %s7 = inlined_call_operand.vmem [shape: f32[16,16], index: 7, kind: input, shape index: {}]
  %s8 = inlined_call_operand.vmem [shape: f32[16,16], index: 8, kind: input, shape index: {}]
  %s9 = inlined_call_operand.vmem [shape: f32[2,16,32], index: 9, kind: output, shape index: {}]
  %s10 = sld [smem:[#allocation0]]
  $region69: #{duration_predictor_forward.7} parent=0
    _
  %s12 = ssub.s32 1, %s10
  %s13 = scalar_select 0, %s12, %s10
  loop: start=0, step=1, limit=4
  $region2: #{duration_predictor_forward.7} parent=0 // loop_pre_header
    _
  $region3: #{duration_predictor_forward.7} parent=0 // loop_header
    %s15 = sphi 0, %s19
    %p16 = scmp.ge.s32.totalorder %s15, 4
    %s25 = sphi 0, %s27
    %s28 = sphi 0, %s25
    %s29 = sphi 0, %s28
    %s45 = sphi 0, %s29
    %s49 = sphi 0, %s49
    %s51 = sphi 0, %s49
    %s52 = sphi 0, %s51
    %s66 = sphi 0, %s52
    %s70 = sphi 0, %s70
    %s72 = sphi 0, %s70
    %s73 = sphi 0, %s72
    %s87 = sphi 0, %s73
    %s91 = sphi 0, %s91
    %s93 = sphi 0, %s91
    %s94 = sphi 0, %s93
    %s108 = sphi 0, %s94
    %s112 = sphi 0, %s112
    %s114 = sphi 0, %s112
    %s115 = sphi 0, %s114
    %s129 = sphi 0, %s115
    %s133 = sphi 0, %s133
    %s135 = sphi 0, %s133
    %s136 = sphi 0, %s135
    %s150 = sphi 0, %s136
    %s154 = sphi 0, %s154
    %s156 = sphi 0, %s154
    %s157 = sphi 0, %s156
    %s171 = sphi 0, %s157
    %s175 = sphi 0, %s175
    %s177 = sphi 0, %s175
    %s178 = sphi 0, %s177
    %s192 = sphi 0, %s178
    %s196 = sphi 0, %s196
    %s198 = sphi 0, %s196
    %s199 = sphi 0, %s198
    %s213 = sphi 0, %s199
    %s219 = sphi 0, %s221
    %s222 = sphi 0, %s219
    %s223 = sphi 0, %s222
    %s239 = sphi 0, %s223
  $region4: #{duration_predictor_forward.7} parent=0 // loop_header_branch
    %18 = sbr.rel (%p16) target = $region8
  $region5: #{duration_predictor_forward.7} parent=0 // loop_body
    %s20 = ssub.s32 %s15, 1
    %s21 = ssub.s32 %s15, 2
    %s22 = sadd.s32 %s15, 1
    %s23 = ssub.s32 %s15, %s22
    %p24 = scmp.eq.s32.totalorder %s23, 0
    %s26 = sadd.s32 %s25, 1
    %s27 = scalar_select %p24, %s25, %s26
    %p30 = pneg %p24
    %p31 = scmp.eq.s32.totalorder %s15, 1
    %p32 = por %p30, %p31
    %p33 = scmp.ne.s32.totalorder %s25, %s28
    %p34 = scmp.eq.s32.totalorder %s15, 0
    %p35 = por %p33, %p34
    %p36 = scmp.ne.s32.totalorder %s25, %s28
    %p37 = scmp.eq.s32.totalorder %s20, 1
    %p38 = por %p36, %p37
    %p39 = scmp.ne.s32.totalorder %s28, %s29
    %p40 = scmp.eq.s32.totalorder %s20, 0
    %p41 = por %p39, %p40
    %p42 = scmp.ne.s32.totalorder %s28, %s29
    %p43 = scmp.eq.s32.totalorder %s21, 1
    %p44 = por %p42, %p43
    %p46 = scmp.ne.s32.totalorder %s29, %s45
    %p47 = scmp.eq.s32.totalorder %s21, 0
    %p48 = por %p46, %p47
    %s50 = sadd.s32 %s49, 1
    %p53 = scmp.eq.s32.totalorder %s15, 1
    %p54 = scmp.ne.s32.totalorder %s49, %s51
    %p55 = scmp.eq.s32.totalorder %s15, 0
    %p56 = por %p54, %p55
    %p57 = scmp.ne.s32.totalorder %s49, %s51
    %p58 = scmp.eq.s32.totalorder %s20, 1
    %p59 = por %p57, %p58
    %p60 = scmp.ne.s32.totalorder %s51, %s52
    %p61 = scmp.eq.s32.totalorder %s20, 0
    %p62 = por %p60, %p61
    %p63 = scmp.ne.s32.totalorder %s51, %s52
    %p64 = scmp.eq.s32.totalorder %s21, 1
    %p65 = por %p63, %p64
    %p67 = scmp.ne.s32.totalorder %s52, %s66
    %p68 = scmp.eq.s32.totalorder %s21, 0
    %p69 = por %p67, %p68
    %s71 = sadd.s32 %s70, 1
    %p74 = scmp.eq.s32.totalorder %s15, 1
    %p75 = scmp.ne.s32.totalorder %s70, %s72
    %p76 = scmp.eq.s32.totalorder %s15, 0
    %p77 = por %p75, %p76
    %p78 = scmp.ne.s32.totalorder %s70, %s72
    %p79 = scmp.eq.s32.totalorder %s20, 1
    %p80 = por %p78, %p79
    %p81 = scmp.ne.s32.totalorder %s72, %s73
    %p82 = scmp.eq.s32.totalorder %s20, 0
    %p83 = por %p81, %p82
    %p84 = scmp.ne.s32.totalorder %s72, %s73
    %p85 = scmp.eq.s32.totalorder %s21, 1
    %p86 = por %p84, %p85
    %p88 = scmp.ne.s32.totalorder %s73, %s87
    %p89 = scmp.eq.s32.totalorder %s21, 0
    %p90 = por %p88, %p89
    %s92 = sadd.s32 %s91, 1
    %p95 = scmp.eq.s32.totalorder %s15, 1
    %p96 = scmp.ne.s32.totalorder %s91, %s93
    %p97 = scmp.eq.s32.totalorder %s15, 0
    %p98 = por %p96, %p97
    %p99 = scmp.ne.s32.totalorder %s91, %s93
    %p100 = scmp.eq.s32.totalorder %s20, 1
    %p101 = por %p99, %p100
    %p102 = scmp.ne.s32.totalorder %s93, %s94
    %p103 = scmp.eq.s32.totalorder %s20, 0
    %p104 = por %p102, %p103
    %p105 = scmp.ne.s32.totalorder %s93, %s94
    %p106 = scmp.eq.s32.totalorder %s21, 1
    %p107 = por %p105, %p106
    %p109 = scmp.ne.s32.totalorder %s94, %s108
    %p110 = scmp.eq.s32.totalorder %s21, 0
    %p111 = por %p109, %p110
    %s113 = sadd.s32 %s112, 1
    %p116 = scmp.eq.s32.totalorder %s15, 1
    %p117 = scmp.ne.s32.totalorder %s112, %s114
    %p118 = scmp.eq.s32.totalorder %s15, 0
    %p119 = por %p117, %p118
    %p120 = scmp.ne.s32.totalorder %s112, %s114
    %p121 = scmp.eq.s32.totalorder %s20, 1
    %p122 = por %p120, %p121
    %p123 = scmp.ne.s32.totalorder %s114, %s115
    %p124 = scmp.eq.s32.totalorder %s20, 0
    %p125 = por %p123, %p124
    %p126 = scmp.ne.s32.totalorder %s114, %s115
    %p127 = scmp.eq.s32.totalorder %s21, 1
    %p128 = por %p126, %p127
    %p130 = scmp.ne.s32.totalorder %s115, %s129
    %p131 = scmp.eq.s32.totalorder %s21, 0
    %p132 = por %p130, %p131
    %s134 = sadd.s32 %s133, 1
    %p137 = scmp.eq.s32.totalorder %s15, 1
    %p138 = scmp.ne.s32.totalorder %s133, %s135
    %p139 = scmp.eq.s32.totalorder %s15, 0
    %p140 = por %p138, %p139
    %p141 = scmp.ne.s32.totalorder %s133, %s135
    %p142 = scmp.eq.s32.totalorder %s20, 1
    %p143 = por %p141, %p142
    %p144 = scmp.ne.s32.totalorder %s135, %s136
    %p145 = scmp.eq.s32.totalorder %s20, 0
    %p146 = por %p144, %p145
    %p147 = scmp.ne.s32.totalorder %s135, %s136
    %p148 = scmp.eq.s32.totalorder %s21, 1
    %p149 = por %p147, %p148
    %p151 = scmp.ne.s32.totalorder %s136, %s150
    %p152 = scmp.eq.s32.totalorder %s21, 0
    %p153 = por %p151, %p152
    %s155 = sadd.s32 %s154, 1
    %p158 = scmp.eq.s32.totalorder %s15, 1
    %p159 = scmp.ne.s32.totalorder %s154, %s156
    %p160 = scmp.eq.s32.totalorder %s15, 0
    %p161 = por %p159, %p160
    %p162 = scmp.ne.s32.totalorder %s154, %s156
    %p163 = scmp.eq.s32.totalorder %s20, 1
    %p164 = por %p162, %p163
    %p165 = scmp.ne.s32.totalorder %s156, %s157
    %p166 = scmp.eq.s32.totalorder %s20, 0
    %p167 = por %p165, %p166
    %p168 = scmp.ne.s32.totalorder %s156, %s157
    %p169 = scmp.eq.s32.totalorder %s21, 1
    %p170 = por %p168, %p169
    %p172 = scmp.ne.s32.totalorder %s157, %s171
    %p173 = scmp.eq.s32.totalorder %s21, 0
    %p174 = por %p172, %p173
    %s176 = sadd.s32 %s175, 1
    %p179 = scmp.eq.s32.totalorder %s15, 1
    %p180 = scmp.ne.s32.totalorder %s175, %s177
    %p181 = scmp.eq.s32.totalorder %s15, 0
    %p182 = por %p180, %p181
    %p183 = scmp.ne.s32.totalorder %s175, %s177
    %p184 = scmp.eq.s32.totalorder %s20, 1
    %p185 = por %p183, %p184
    %p186 = scmp.ne.s32.totalorder %s177, %s178
    %p187 = scmp.eq.s32.totalorder %s20, 0
    %p188 = por %p186, %p187
    %p189 = scmp.ne.s32.totalorder %s177, %s178
    %p190 = scmp.eq.s32.totalorder %s21, 1
    %p191 = por %p189, %p190
    %p193 = scmp.ne.s32.totalorder %s178, %s192
    %p194 = scmp.eq.s32.totalorder %s21, 0
    %p195 = por %p193, %p194
    %s197 = sadd.s32 %s196, 1
    %p200 = scmp.eq.s32.totalorder %s15, 1
    %p201 = scmp.ne.s32.totalorder %s196, %s198
    %p202 = scmp.eq.s32.totalorder %s15, 0
    %p203 = por %p201, %p202
    %p204 = scmp.ne.s32.totalorder %s196, %s198
    %p205 = scmp.eq.s32.totalorder %s20, 1
    %p206 = por %p204, %p205
    %p207 = scmp.ne.s32.totalorder %s198, %s199
    %p208 = scmp.eq.s32.totalorder %s20, 0
    %p209 = por %p207, %p208
    %p210 = scmp.ne.s32.totalorder %s198, %s199
    %p211 = scmp.eq.s32.totalorder %s21, 1
    %p212 = por %p210, %p211
    %p214 = scmp.ne.s32.totalorder %s199, %s213
    %p215 = scmp.eq.s32.totalorder %s21, 0
    %p216 = por %p214, %p215
    %s217 = ssub.s32 %s15, %s22
    %p218 = scmp.eq.s32.totalorder %s217, 0
    %s220 = sadd.s32 %s219, 1
    %s221 = scalar_select %p218, %s219, %s220
    %p224 = pneg %p218
    %p225 = scmp.eq.s32.totalorder %s15, 1
    %p226 = por %p224, %p225
    %p227 = scmp.ne.s32.totalorder %s219, %s222
    %p228 = scmp.eq.s32.totalorder %s15, 0
    %p229 = por %p227, %p228
    %p230 = scmp.ne.s32.totalorder %s219, %s222
    %p231 = scmp.eq.s32.totalorder %s20, 1
    %p232 = por %p230, %p231
    %p233 = scmp.ne.s32.totalorder %s222, %s223
    %p234 = scmp.eq.s32.totalorder %s20, 0
    %p235 = por %p233, %p234
    %p236 = scmp.ne.s32.totalorder %s222, %s223
    %p237 = scmp.eq.s32.totalorder %s21, 1
    %p238 = por %p236, %p237
    %p240 = scmp.ne.s32.totalorder %s223, %s239
    %p241 = scmp.eq.s32.totalorder %s21, 0
    %p242 = por %p240, %p241
    %p243 = scmp.le.s32.totalorder 1, %s15
    %p244 = scmp.lt.s32.totalorder %s15, 3
    %p245 = pnand %p243, %p244
    %p246 = pneg %p245
    // Predicated region
    $region9: #{duration_predictor_forward.7} parent=5 // pred_check
      _
    $region10: #{duration_predictor_forward.7} parent=5 // pred_check_branch
      %248 = sbr.rel (%p245) target = $region12
    $region11: #{duration_predictor_forward.7} parent=5 // pred_region
      %s249 = ssub.s32 %s15, 1
      // Predicated region
      $region13: #{duration_predictor_forward.7} parent=11 // pred_check
        %p250 = pneg %p62
      $region14: #{duration_predictor_forward.7} parent=11 // pred_check_branch
        %252 = sbr.rel (%p250) target = $region16
      $region15: #{duration_predictor_forward.7} parent=11 // pred_region
        _
      $region16: #{duration_predictor_forward.7} parent=11 // pred_fallthru
        _
      // Predicated region
      $region17: #{duration_predictor_forward.7} parent=11 // pred_check
        %p253 = pneg %p83
      $region18: #{duration_predictor_forward.7} parent=11 // pred_check_branch
        %255 = sbr.rel (%p253) target = $region20
      $region19: #{duration_predictor_forward.7} parent=11 // pred_region
        _
      $region20: #{duration_predictor_forward.7} parent=11 // pred_fallthru
        _
      // Predicated region
      $region21: #{duration_predictor_forward.7} parent=11 // pred_check
        %p256 = pneg %p104
      $region22: #{duration_predictor_forward.7} parent=11 // pred_check_branch
        %258 = sbr.rel (%p256) target = $region24
      $region23: #{duration_predictor_forward.7} parent=11 // pred_region
        _
      $region24: #{duration_predictor_forward.7} parent=11 // pred_fallthru
        _
      // Predicated region
      $region25: #{duration_predictor_forward.7} parent=11 // pred_check
        %p259 = pneg %p125
      $region26: #{duration_predictor_forward.7} parent=11 // pred_check_branch
        %261 = sbr.rel (%p259) target = $region28
      $region27: #{duration_predictor_forward.7} parent=11 // pred_region
        _
      $region28: #{duration_predictor_forward.7} parent=11 // pred_fallthru
        _
      // Predicated region
      $region29: #{duration_predictor_forward.7} parent=11 // pred_check
        %p262 = pneg %p146
      $region30: #{duration_predictor_forward.7} parent=11 // pred_check_branch
        %264 = sbr.rel (%p262) target = $region32
      $region31: #{duration_predictor_forward.7} parent=11 // pred_region
        _
      $region32: #{duration_predictor_forward.7} parent=11 // pred_fallthru
        _
      // Predicated region
      $region33: #{duration_predictor_forward.7} parent=11 // pred_check
        %p265 = pneg %p167
      $region34: #{duration_predictor_forward.7} parent=11 // pred_check_branch
        %267 = sbr.rel (%p265) target = $region36
      $region35: #{duration_predictor_forward.7} parent=11 // pred_region
        _
      $region36: #{duration_predictor_forward.7} parent=11 // pred_fallthru
        _
      // Predicated region
      $region37: #{duration_predictor_forward.7} parent=11 // pred_check
        %p268 = pneg %p188
      $region38: #{duration_predictor_forward.7} parent=11 // pred_check_branch
        %270 = sbr.rel (%p268) target = $region40
      $region39: #{duration_predictor_forward.7} parent=11 // pred_region
        _
      $region40: #{duration_predictor_forward.7} parent=11 // pred_fallthru
        _
      // Predicated region
      $region41: #{duration_predictor_forward.7} parent=11 // pred_check
        %p271 = pneg %p209
      $region42: #{duration_predictor_forward.7} parent=11 // pred_check_branch
        %273 = sbr.rel (%p271) target = $region44
      $region43: #{duration_predictor_forward.7} parent=11 // pred_region
        _
      $region44: #{duration_predictor_forward.7} parent=11 // pred_fallthru
        _
    $region12: #{duration_predictor_forward.7} parent=5 // pred_fallthru
      _
    %p274 = scmp.lt.s32.totalorder %s15, 2
    // Predicated region
    $region45: #{duration_predictor_forward.7} parent=5 // pred_check
      %p275 = pneg %p274
    $region46: #{duration_predictor_forward.7} parent=5 // pred_check_branch
      %277 = sbr.rel (%p275) target = $region48
    $region47: #{duration_predictor_forward.7} parent=5 // pred_region
      // Predicated region
      $region49: #{duration_predictor_forward.7} parent=47 // pred_check
        %p278 = pneg %p35
      $region50: #{duration_predictor_forward.7} parent=47 // pred_check_branch
        %280 = sbr.rel (%p278) target = $region52
      $region51: #{duration_predictor_forward.7} parent=47 // pred_region
        %p281 = scmp.lt.s32.totalorder %s15, 1
        %s282 = scalar_select %p281, %s15, 1
        %s283 = smul.addr %s282, 2
        %s284 = smul.addr %s283, 8
        %s285 = scalar_lea.vmem %s0, %s284
      $region52: #{duration_predictor_forward.7} parent=47 // pred_fallthru
        _
    $region48: #{duration_predictor_forward.7} parent=5 // pred_fallthru
      _
    %p286 = scmp.le.s32.totalorder 1, %s15
    %p287 = scmp.lt.s32.totalorder %s15, 3
    %p288 = pnand %p286, %p287
    %p289 = pneg %p288
    // Predicated region
    $region53: #{duration_predictor_forward.7} parent=5 // pred_check
      _
    $region54: #{duration_predictor_forward.7} parent=5 // pred_check_branch
      %291 = sbr.rel (%p288) target = $region56
    $region55: #{duration_predictor_forward.7} parent=5 // pred_region
      %s292 = ssub.s32 %s15, 1
      %p293 = scmp.lt.s32.totalorder %s20, 1
      %s294 = scalar_select %p293, %s20, 1
      %s295 = smul.addr %s294, 2
      %s296 = smul.addr %s295, 8
      %s297 = scalar_lea.vmem %s0, %s296
      %p298 = pneg %p41
      %p299 = pneg %p38
      %p300 = pneg %p62
      %p301 = pneg %p59
      %p302 = pneg %p83
      %p303 = pneg %p80
      %p304 = pneg %p104
      %p305 = pneg %p101
      %p306 = pneg %p125
      %p307 = pneg %p122
      %p308 = pneg %p146
      %p309 = pneg %p143
      %p310 = pneg %p167
      %p311 = pneg %p164
      %p312 = pneg %p188
      %p313 = pneg %p185
      %p314 = pneg %p209
      %p315 = pneg %p206
      %p316 = pneg %p235
      %p317 = pneg %p232
      %p318 = scmp.lt.s32.totalorder %s20, 1
      %s319 = scalar_select %p318, %s20, 1
      %s320 = smul.addr %s319, 2
      %s321 = smul.addr %s320, 8
      %s322 = scalar_lea.vmem %s9, %s321
      %p323 = scmp.lt.s32.totalorder %s20, 1
      %s324 = scalar_select %p323, %s20, 1
      %s325 = smul.addr %s324, 2
      %s326 = smul.addr %s325, 8
      %s327 = scalar_lea.vmem %s0, %s326
      %p328 = scmp.lt.s32.totalorder %s20, 1
      %s329 = scalar_select %p328, %s20, 1
      %s330 = smul.addr %s329, 2
      %s331 = smul.addr %s330, 8
      %s332 = scalar_lea.vmem %s9, %s331
      %v334 = vld [vmem:[%s1] sm:$0xff]
      %v335 = vld [vmem:[%s327] sm:$0xff]
      %v336 = vld [vmem:[%s327 + $0x8] sm:$0xff]
      %v337 = vmul.f32 %v335, %v335
      %v338 = vmul.f32 %v336, %v336
      %vm339 = vcmask 261120
      %v340 = vsel %vm339, %v337, 0.0
      %341 = vadd.xlane.f32.xlu0 %v340
      %v342 = vpop.xlane.xlu0 %341
      %v343 = vsel %vm339, %v338, 0.0
      %344 = vadd.xlane.f32.xlu0 %v343
      %v345 = vpop.xlane.xlu0 %344
      %v346 = vmax.f32 %v342, 1e-24
      %v347 = vmax.f32 %v345, 1e-24
      %v348 = vrsqrt.pop %v346
      %v349 = vrsqrt.pop %v347
      %v350 = vmul.f32 %v335, %v348
      %v351 = vmul.f32 %v336, %v349
      %v352 = vmul.f32 %v350, 5.656854
      %v353 = vmul.f32 %v351, 5.656854
      %v354 = vlaneseq
      %v355 = vshrl.u32 %v354, 7
      %v356 = vsub.s32 0, %v355
      %v357 = vrot.slane %v334, %v356
      %v358 = vmul.f32 %v352, %v357
      %v359 = vmul.f32 %v353, %v357
      %v360 = vpack.c.bf16 %v359, %v358
      %v361 = vld [vmem:[%s2] sm:$0xf]
      %v362 = vld [vmem:[%s2 + $0x4] sm:$0xf]
      %v363 = vld [vmem:[%s2 + $0x8] sm:$0xf]
      %v364 = vld [vmem:[%s2 + $0xc] sm:$0xf]
      %v369 = vunpack.c.l.b16 %v361
      %v370 = vunpack.c.l.b16 %v362
      %v371 = vunpack.c.l.b16 %v363
      %v372 = vunpack.c.l.b16 %v364
      %v373 = vpack.c.b16 %v370, %v369
      %v374 = vpack.c.b16 %v372, %v371
      %v378 = vsel %vm339, %v360, 0
      %380 = vmatprep.subr.bf16.mxu0 0
      %381 = vmatpush1.bf16.msra.mxu0 0
      %382 = vmatprep.subr.bf16.mxu0 0
      %383 = vmatpush1.bf16.msra.mxu0 0
      %384 = vmatprep.subr.bf16.mxu0 0
      %385 = vmatpush1.bf16.msra.mxu0 0
      %386 = vmatprep.subr.bf16.mxu0 0
      %387 = vmatpush1.bf16.msra.mxu0 0
      %388 = vmatprep.subr.bf16.mxu0 0
      %389 = vmatpush1.bf16.msra.mxu0 0
      %390 = vmatprep.subr.bf16.mxu0 0
      %391 = vmatpush1.bf16.msra.mxu0 0
      %392 = vmatprep.subr.bf16.mxu0 0
      %393 = vmatpush1.bf16.msra.mxu0 %v374
      %394 = vmatprep.subr.bf16.mxu0 0
      %395 = vmatpush1.bf16.msra.mxu0 %v373
      %396 = vmatprep.subr.bf16.mxu0 0
      %397 = vmatpush2.bf16.msra.mxu0 0
      %398 = vmatprep.subr.bf16.mxu0 0
      %399 = vmatpush2.bf16.msra.mxu0 0
      %400 = vmatprep.subr.bf16.mxu0 0
      %401 = vmatpush2.bf16.msra.mxu0 0
      %402 = vmatprep.subr.bf16.mxu0 0
      %403 = vmatpush2.bf16.msra.mxu0 0
      %404 = vmatprep.subr.bf16.mxu0 0
      %405 = vmatpush2.bf16.msra.mxu0 0
      %406 = vmatprep.subr.bf16.mxu0 0
      %407 = vmatpush2.bf16.msra.mxu0 0
      %408 = vmatprep.subr.bf16.mxu0 0
      %409 = vmatpush2.bf16.msra.mxu0 0
      %410 = vmatprep.subr.bf16.mxu0 0
      %411 = vmatpush2.bf16.msra.mxu0 0
      %412 = vmatprep.mubr.bf16.mxu0 0
      %413 = vmatmul.mubr.bf16.gmra.mxu0 %v378
      %v414 = vpop.f32.mrf.mxu0
      %v415 = vadd.f32 0.0, %v414
      %v416 = vpop.f32.mrf.mxu0
      %v417 = vpop.f32.mrf.mxu0
      %v418 = vadd.f32 0.0, %v417
      %v419 = vpop.f32.mrf.mxu0
      %420 = vdwg.mxu0
      %v421 = vld [vmem:[%s7] sm:$0xff]
      %v422 = vld [vmem:[%s7 + $0x8] sm:$0xff]
      %v423 = vld [vmem:[%s8] sm:$0xff]
      %v424 = vld [vmem:[%s8 + $0x8] sm:$0xff]
      %v425 = vmul.f32 %v415, %v421
      %v426 = vmul.f32 %v418, %v422
      %v427 = vsub.f32 0.0, %v415
      %v428 = vsub.f32 0.0, %v418
      %431 = vrot.lane.b32.xlu0 %v427, 120
      %v432 = vpop.permute.xlu0 %431
      %433 = vrot.lane.b32.xlu0 %v428, 120
      %v434 = vpop.permute.xlu0 %433
      %439 = vrot.lane.b32.xlu0 %v415, 8
      %v440 = vpop.permute.xlu0 %439
      %441 = vrot.lane.b32.xlu0 %v418, 8
      %v442 = vpop.permute.xlu0 %441
      %vm445 = vcmask 64512
      %v446 = vsel %vm445, %v432, %v440
      %v447 = vsel %vm445, %v434, %v442
      %v448 = vmul.f32 %v446, %v423
      %v449 = vmul.f32 %v447, %v424
      %v450 = vadd.f32 %v425, %v448
      %v451 = vadd.f32 %v426, %v449
      %454 = vrot.lane.b32.xlu0 %v421, 32
      %v455 = vpop.permute.xlu0 %454
      %456 = vrot.lane.b32.xlu0 %v422, 32
      %v457 = vpop.permute.xlu0 %456
      %v460 = vmul.f32 %v415, %v455
      %v461 = vmul.f32 %v418, %v457
      %462 = vrot.lane.b32.xlu0 %v427, 88
      %v463 = vpop.permute.xlu0 %462
      %464 = vrot.lane.b32.xlu0 %v428, 88
      %v465 = vpop.permute.xlu0 %464
      %468 = vrot.lane.b32.xlu0 %v415, 104
      %v469 = vpop.permute.xlu0 %468
      %470 = vrot.lane.b32.xlu0 %v418, 104
      %v471 = vpop.permute.xlu0 %470
      %v474 = vsel %vm445, %v463, %v469
      %v475 = vsel %vm445, %v465, %v471
      %v476 = vmul.f32 %v474, %v423
      %v477 = vmul.f32 %v475, %v424
      %480 = vrot.lane.b32.xlu0 %v476, 32
      %v481 = vpop.permute.xlu0 %480
      %482 = vrot.lane.b32.xlu0 %v477, 32
      %v483 = vpop.permute.xlu0 %482
      %v486 = vadd.f32 %v460, %v481
      %v487 = vadd.f32 %v461, %v483
      %v488 = vpack.c.bf16 %v451, %v450
      %v489 = vpack.c.bf16 %v487, %v486
      %491 = vrot.lane.b32.xlu0 %v489, 96
      %v492 = vpop.permute.xlu0 %491
      %vm493 = vcmask 130048
      %v495 = vsel %vm493, %v488, 0
      %v498 = vsel %vm493, %v492, 0
      %500 = vmatprep.subr.bf16.mxu0 0
      %501 = vmatpush1.bf16.xpose.msra.mxu0 0
      %502 = vmatprep.subr.bf16.mxu0 0
      %503 = vmatpush1.bf16.xpose.msra.mxu0 0
      %504 = vmatprep.subr.bf16.mxu0 0
      %505 = vmatpush1.bf16.xpose.msra.mxu0 0
      %506 = vmatprep.subr.bf16.mxu0 0
      %507 = vmatpush1.bf16.xpose.msra.mxu0 0
      %508 = vmatprep.subr.bf16.mxu0 0
      %509 = vmatpush1.bf16.xpose.msra.mxu0 0
      %510 = vmatprep.subr.bf16.mxu0 0
      %511 = vmatpush1.bf16.xpose.msra.mxu0 0
      %512 = vmatprep.subr.bf16.mxu0 0
      %513 = vmatpush1.bf16.xpose.msra.mxu0 0
      %514 = vmatprep.subr.bf16.mxu0 0
      %515 = vmatpush1.bf16.xpose.msra.mxu0 %v498
      %516 = vmatprep.subr.bf16.mxu0 0
      %517 = vmatpush2.bf16.xpose.msra.mxu0 0
      %518 = vmatprep.subr.bf16.mxu0 0
      %519 = vmatpush2.bf16.xpose.msra.mxu0 0
      %520 = vmatprep.subr.bf16.mxu0 0
      %521 = vmatpush2.bf16.xpose.msra.mxu0 0
      %522 = vmatprep.subr.bf16.mxu0 0
      %523 = vmatpush2.bf16.xpose.msra.mxu0 0
      %524 = vmatprep.subr.bf16.mxu0 0
      %525 = vmatpush2.bf16.xpose.msra.mxu0 0
      %526 = vmatprep.subr.bf16.mxu0 0
      %527 = vmatpush2.bf16.xpose.msra.mxu0 0
      %528 = vmatprep.subr.bf16.mxu0 0
      %529 = vmatpush2.bf16.xpose.msra.mxu0 0
      %530 = vmatprep.subr.bf16.mxu0 0
      %531 = vmatpush2.bf16.xpose.msra.mxu0 0
      %532 = vmatprep.mubr.bf16.mxu0 0
      %533 = vmatmul.mubr.bf16.gmra.mxu0 %v495
      %v534 = vpop.f32.mrf.mxu0
      %v535 = vadd.f32 0.0, %v534
      %v536 = vpop.f32.mrf.mxu0
      %v537 = vpop.f32.mrf.mxu0
      %v538 = vadd.f32 0.0, %v537
      %v539 = vpop.f32.mrf.mxu0
      %540 = vdwg.mxu0
      %v541 = vmul.f32 %v535, 0.25
      %v542 = vmul.f32 %v538, 0.25
      %v543 = vsel %vm493, %v541, -inf
      %544 = vmax.xlane.f32.xlu0 %v543
      %v545 = vpop.xlane.xlu0 %544
      %v546 = vsel %vm493, %v542, -inf
      %547 = vmax.xlane.f32.xlu0 %v546
      %v548 = vpop.xlane.xlu0 %547
      %v549 = vsub.f32 %v541, %v545
      %v550 = vsub.f32 %v542, %v548
      %v551 = vmul.f32 %v549, 1.442695
      %v552 = vpow.pop %v551
      %v553 = vmul.f32 %v550, 1.442695
      %v554 = vpow.pop %v553
      %v555 = vsel %vm493, %v552, 0.0
      %556 = vadd.xlane.f32.xlu0 %v555
      %v557 = vpop.xlane.xlu0 %556
      %v558 = vsel %vm493, %v554, 0.0
      %559 = vadd.xlane.f32.xlu0 %v558
      %v560 = vpop.xlane.xlu0 %559
      %v561 = vpack.c.bf16 %v554, %v552
      %v562 = vpack.c.bf16 %v418, %v415
      %564 = vrot.lane.b32.xlu0 %v562, 64
      %v565 = vpop.permute.xlu0 %564
      %v568 = vsel %vm493, %v561, 0
      %570 = vmatprep.subr.bf16.mxu0 0
      %571 = vmatpush1.bf16.msra.mxu0 0
      %572 = vmatprep.subr.bf16.mxu0 0
      %573 = vmatpush1.bf16.msra.mxu0 0
      %574 = vmatprep.subr.bf16.mxu0 0
      %575 = vmatpush1.bf16.msra.mxu0 0
      %576 = vmatprep.subr.bf16.mxu0 0
      %577 = vmatpush1.bf16.msra.mxu0 0
      %578 = vmatprep.subr.bf16.mxu0 0
      %579 = vmatpush1.bf16.msra.mxu0 0
      %580 = vmatprep.subr.bf16.mxu0 0
      %581 = vmatpush1.bf16.msra.mxu0 0
      %582 = vmatprep.subr.bf16.mxu0 0
      %583 = vmatpush1.bf16.msra.mxu0 0
      %584 = vmatprep.subr.bf16.mxu0 0
      %585 = vmatpush1.bf16.msra.mxu0 %v565
      %586 = vmatprep.subr.bf16.mxu0 0
      %587 = vmatpush2.bf16.msra.mxu0 0
      %588 = vmatprep.subr.bf16.mxu0 0
      %589 = vmatpush2.bf16.msra.mxu0 0
      %590 = vmatprep.subr.bf16.mxu0 0
      %591 = vmatpush2.bf16.msra.mxu0 0
      %592 = vmatprep.subr.bf16.mxu0 0
      %593 = vmatpush2.bf16.msra.mxu0 0
      %594 = vmatprep.subr.bf16.mxu0 0
      %595 = vmatpush2.bf16.msra.mxu0 0
      %596 = vmatprep.subr.bf16.mxu0 0
      %597 = vmatpush2.bf16.msra.mxu0 0
      %598 = vmatprep.subr.bf16.mxu0 0
      %599 = vmatpush2.bf16.msra.mxu0 0
      %600 = vmatprep.subr.bf16.mxu0 0
      %601 = vmatpush2.bf16.msra.mxu0 0
      %602 = vmatprep.mubr.bf16.mxu0 0
      %603 = vmatmul.mubr.bf16.gmra.mxu0 %v568
      %v604 = vpop.f32.mrf.mxu0
      %v605 = vadd.f32 0.0, %v604
      %v606 = vpop.f32.mrf.mxu0
      %v607 = vpop.f32.mrf.mxu0
      %v608 = vadd.f32 0.0, %v607
      %v609 = vpop.f32.mrf.mxu0
      %610 = vdwg.mxu0
      %v611 = vrcp.pop %v557
      %v612 = vmul.f32 %v605, %v611
      %v613 = vrcp.pop %v560
      %v614 = vmul.f32 %v608, %v613
      %615 = vrot.lane.b32.xlu0 %v421, 16
      %v616 = vpop.permute.xlu0 %615
      %617 = vrot.lane.b32.xlu0 %v422, 16
      %v618 = vpop.permute.xlu0 %617
      %v621 = vmul.f32 %v415, %v616
      %v622 = vmul.f32 %v418, %v618
      %623 = vrot.lane.b32.xlu0 %v427, 104
      %v624 = vpop.permute.xlu0 %623
      %625 = vrot.lane.b32.xlu0 %v428, 104
      %v626 = vpop.permute.xlu0 %625
      %629 = vrot.lane.b32.xlu0 %v415, 120
      %v630 = vpop.permute.xlu0 %629
      %631 = vrot.lane.b32.xlu0 %v418, 120
      %v632 = vpop.permute.xlu0 %631
      %v635 = vsel %vm445, %v624, %v630
      %v636 = vsel %vm445, %v626, %v632
      %v637 = vmul.f32 %v635, %v423
      %v638 = vmul.f32 %v636, %v424
      %641 = vrot.lane.b32.xlu0 %v637, 16
      %v642 = vpop.permute.xlu0 %641
      %643 = vrot.lane.b32.xlu0 %v638, 16
      %v644 = vpop.permute.xlu0 %643
      %v647 = vadd.f32 %v621, %v642
      %v648 = vadd.f32 %v622, %v644
      %649 = vrot.lane.b32.xlu0 %v421, 48
      %v650 = vpop.permute.xlu0 %649
      %651 = vrot.lane.b32.xlu0 %v422, 48
      %v652 = vpop.permute.xlu0 %651
      %v655 = vmul.f32 %v415, %v650
      %v656 = vmul.f32 %v418, %v652
      %657 = vrot.lane.b32.xlu0 %v427, 72
      %v658 = vpop.permute.xlu0 %657
      %659 = vrot.lane.b32.xlu0 %v428, 72
      %v660 = vpop.permute.xlu0 %659
      %663 = vrot.lane.b32.xlu0 %v415, 88
      %v664 = vpop.permute.xlu0 %663
      %665 = vrot.lane.b32.xlu0 %v418, 88
      %v666 = vpop.permute.xlu0 %665
      %v669 = vsel %vm445, %v658, %v664
      %v670 = vsel %vm445, %v660, %v666
      %v671 = vmul.f32 %v669, %v423
      %v672 = vmul.f32 %v670, %v424
      %675 = vrot.lane.b32.xlu0 %v671, 48
      %v676 = vpop.permute.xlu0 %675
      %677 = vrot.lane.b32.xlu0 %v672, 48
      %v678 = vpop.permute.xlu0 %677
      %v681 = vadd.f32 %v655, %v676
      %v682 = vadd.f32 %v656, %v678
      %v683 = vpack.c.bf16 %v648, %v647
      %v684 = vpack.c.bf16 %v682, %v681
      %686 = vrot.lane.b32.xlu0 %v683, 112
      %v687 = vpop.permute.xlu0 %686
      %689 = vrot.lane.b32.xlu0 %v684, 80
      %v690 = vpop.permute.xlu0 %689
      %v692 = vsel %vm493, %v687, 0
      %v695 = vsel %vm493, %v690, 0
      %697 = vmatprep.subr.bf16.mxu0 0
      %698 = vmatpush1.bf16.xpose.msra.mxu0 0
      %699 = vmatprep.subr.bf16.mxu0 0
      %700 = vmatpush1.bf16.xpose.msra.mxu0 0
      %701 = vmatprep.subr.bf16.mxu0 0
      %702 = vmatpush1.bf16.xpose.msra.mxu0 0
      %703 = vmatprep.subr.bf16.mxu0 0
      %704 = vmatpush1.bf16.xpose.msra.mxu0 0
      %705 = vmatprep.subr.bf16.mxu0 0
      %706 = vmatpush1.bf16.xpose.msra.mxu0 0
      %707 = vmatprep.subr.bf16.mxu0 0
      %708 = vmatpush1.bf16.xpose.msra.mxu0 0
      %709 = vmatprep.subr.bf16.mxu0 0
      %710 = vmatpush1.bf16.xpose.msra.mxu0 0
      %711 = vmatprep.subr.bf16.mxu0 0
      %712 = vmatpush1.bf16.xpose.msra.mxu0 %v695
      %713 = vmatprep.subr.bf16.mxu0 0
      %714 = vmatpush2.bf16.xpose.msra.mxu0 0
      %715 = vmatprep.subr.bf16.mxu0 0
      %716 = vmatpush2.bf16.xpose.msra.mxu0 0
      %717 = vmatprep.subr.bf16.mxu0 0
      %718 = vmatpush2.bf16.xpose.msra.mxu0 0
      %719 = vmatprep.subr.bf16.mxu0 0
      %720 = vmatpush2.bf16.xpose.msra.mxu0 0
      %721 = vmatprep.subr.bf16.mxu0 0
      %722 = vmatpush2.bf16.xpose.msra.mxu0 0
      %723 = vmatprep.subr.bf16.mxu0 0
      %724 = vmatpush2.bf16.xpose.msra.mxu0 0
      %725 = vmatprep.subr.bf16.mxu0 0
      %726 = vmatpush2.bf16.xpose.msra.mxu0 0
      %727 = vmatprep.subr.bf16.mxu0 0
      %728 = vmatpush2.bf16.xpose.msra.mxu0 0
      %729 = vmatprep.mubr.bf16.mxu0 0
      %730 = vmatmul.mubr.bf16.gmra.mxu0 %v692
      %v731 = vpop.f32.mrf.mxu0
      %v732 = vadd.f32 0.0, %v731
      %v733 = vpop.f32.mrf.mxu0
      %v734 = vpop.f32.mrf.mxu0
      %v735 = vadd.f32 0.0, %v734
      %v736 = vpop.f32.mrf.mxu0
      %737 = vdwg.mxu0
      %v738 = vmul.f32 %v732, 0.25
      %v739 = vmul.f32 %v735, 0.25
      %v740 = vsel %vm493, %v738, -inf
      %741 = vmax.xlane.f32.xlu0 %v740
      %v742 = vpop.xlane.xlu0 %741
      %v743 = vsel %vm493, %v739, -inf
      %744 = vmax.xlane.f32.xlu0 %v743
      %v745 = vpop.xlane.xlu0 %744
      %v746 = vsub.f32 %v738, %v742
      %v747 = vsub.f32 %v739, %v745
      %v748 = vmul.f32 %v746, 1.442695
      %v749 = vpow.pop %v748
      %v750 = vmul.f32 %v747, 1.442695
      %v751 = vpow.pop %v750
      %v752 = vsel %vm493, %v749, 0.0
      %753 = vadd.xlane.f32.xlu0 %v752
      %v754 = vpop.xlane.xlu0 %753
      %v755 = vsel %vm493, %v751, 0.0
      %756 = vadd.xlane.f32.xlu0 %v755
      %v757 = vpop.xlane.xlu0 %756
      %v758 = vpack.c.bf16 %v751, %v749
      %759 = vrot.lane.b32.xlu0 %v562, 48
      %v760 = vpop.permute.xlu0 %759
      %v763 = vsel %vm493, %v758, 0
      %765 = vmatprep.subr.bf16.mxu0 0
      %766 = vmatpush1.bf16.msra.mxu0 0
      %767 = vmatprep.subr.bf16.mxu0 0
      %768 = vmatpush1.bf16.msra.mxu0 0
      %769 = vmatprep.subr.bf16.mxu0 0
      %770 = vmatpush1.bf16.msra.mxu0 0
      %771 = vmatprep.subr.bf16.mxu0 0
      %772 = vmatpush1.bf16.msra.mxu0 0
      %773 = vmatprep.subr.bf16.mxu0 0
      %774 = vmatpush1.bf16.msra.mxu0 0
      %775 = vmatprep.subr.bf16.mxu0 0
      %776 = vmatpush1.bf16.msra.mxu0 0
      %777 = vmatprep.subr.bf16.mxu0 0
      %778 = vmatpush1.bf16.msra.mxu0 0
      %779 = vmatprep.subr.bf16.mxu0 0
      %780 = vmatpush1.bf16.msra.mxu0 %v760
      %781 = vmatprep.subr.bf16.mxu0 0
      %782 = vmatpush2.bf16.msra.mxu0 0
      %783 = vmatprep.subr.bf16.mxu0 0
      %784 = vmatpush2.bf16.msra.mxu0 0
      %785 = vmatprep.subr.bf16.mxu0 0
      %786 = vmatpush2.bf16.msra.mxu0 0
      %787 = vmatprep.subr.bf16.mxu0 0
      %788 = vmatpush2.bf16.msra.mxu0 0
      %789 = vmatprep.subr.bf16.mxu0 0
      %790 = vmatpush2.bf16.msra.mxu0 0
      %791 = vmatprep.subr.bf16.mxu0 0
      %792 = vmatpush2.bf16.msra.mxu0 0
      %793 = vmatprep.subr.bf16.mxu0 0
      %794 = vmatpush2.bf16.msra.mxu0 0
      %795 = vmatprep.subr.bf16.mxu0 0
      %796 = vmatpush2.bf16.msra.mxu0 0
      %797 = vmatprep.mubr.bf16.mxu0 0
      %798 = vmatmul.mubr.bf16.gmra.mxu0 %v763
      %v799 = vpop.f32.mrf.mxu0
      %v800 = vadd.f32 0.0, %v799
      %v801 = vpop.f32.mrf.mxu0
      %v802 = vpop.f32.mrf.mxu0
      %v803 = vadd.f32 0.0, %v802
      %v804 = vpop.f32.mrf.mxu0
      %805 = vdwg.mxu0
      %v806 = vrcp.pop %v754
      %v807 = vmul.f32 %v800, %v806
      %v808 = vrcp.pop %v757
      %v809 = vmul.f32 %v803, %v808
      %812 = vrot.lane.b32.xlu0 %v807, 16
      %v813 = vpop.permute.xlu0 %812
      %814 = vrot.lane.b32.xlu0 %v809, 16
      %v815 = vpop.permute.xlu0 %814
      %v818 = vsel %vm493, %v612, %v813
      %v819 = vsel %vm493, %v614, %v815
      %v820 = vpack.c.bf16 %v819, %v818
      %v821 = vld [vmem:[%s3] sm:$0xf]
      %v822 = vld [vmem:[%s3 + $0x4] sm:$0xf]
      %v823 = vld [vmem:[%s3 + $0x8] sm:$0xf]
      %v824 = vld [vmem:[%s3 + $0xc] sm:$0xf]
      %v829 = vunpack.c.l.b16 %v821
      %v830 = vunpack.c.l.b16 %v822
      %v831 = vunpack.c.l.b16 %v823
      %v832 = vunpack.c.l.b16 %v824
      %v833 = vpack.c.b16 %v830, %v829
      %v834 = vpack.c.b16 %v832, %v831
      %v838 = vsel %vm339, %v820, 0
      %840 = vmatprep.subr.bf16.mxu0 0
      %841 = vmatpush1.bf16.msra.mxu0 0
      %842 = vmatprep.subr.bf16.mxu0 0
      %843 = vmatpush1.bf16.msra.mxu0 0
      %844 = vmatprep.subr.bf16.mxu0 0
      %845 = vmatpush1.bf16.msra.mxu0 0
      %846 = vmatprep.subr.bf16.mxu0 0
      %847 = vmatpush1.bf16.msra.mxu0 0
      %848 = vmatprep.subr.bf16.mxu0 0
      %849 = vmatpush1.bf16.msra.mxu0 0
      %850 = vmatprep.subr.bf16.mxu0 0
      %851 = vmatpush1.bf16.msra.mxu0 0
      %852 = vmatprep.subr.bf16.mxu0 0
      %853 = vmatpush1.bf16.msra.mxu0 %v834
      %854 = vmatprep.subr.bf16.mxu0 0
      %855 = vmatpush1.bf16.msra.mxu0 %v833
      %856 = vmatprep.subr.bf16.mxu0 0
      %857 = vmatpush2.bf16.msra.mxu0 0
      %858 = vmatprep.subr.bf16.mxu0 0
      %859 = vmatpush2.bf16.msra.mxu0 0
      %860 = vmatprep.subr.bf16.mxu0 0
      %861 = vmatpush2.bf16.msra.mxu0 0
      %862 = vmatprep.subr.bf16.mxu0 0
      %863 = vmatpush2.bf16.msra.mxu0 0
      %864 = vmatprep.subr.bf16.mxu0 0
      %865 = vmatpush2.bf16.msra.mxu0 0
      %866 = vmatprep.subr.bf16.mxu0 0
      %867 = vmatpush2.bf16.msra.mxu0 0
      %868 = vmatprep.subr.bf16.mxu0 0
      %869 = vmatpush2.bf16.msra.mxu0 0
      %870 = vmatprep.subr.bf16.mxu0 0
      %871 = vmatpush2.bf16.msra.mxu0 0
      %872 = vmatprep.mubr.bf16.mxu0 0
      %873 = vmatmul.mubr.bf16.gmra.mxu0 %v838
      %v874 = vpop.f32.mrf.mxu0
      %v875 = vadd.f32 0.0, %v874
      %v876 = vpop.f32.mrf.mxu0
      %v877 = vpop.f32.mrf.mxu0
      %v878 = vadd.f32 0.0, %v877
      %v879 = vpop.f32.mrf.mxu0
      %880 = vdwg.mxu0
      %v881 = vadd.f32 %v335, %v875
      %v882 = vadd.f32 %v336, %v878
      %v883 = vmul.f32 %v881, %v881
      %v884 = vmul.f32 %v882, %v882
      %v885 = vsel %vm339, %v883, 0.0
      %886 = vadd.xlane.f32.xlu0 %v885
      %v887 = vpop.xlane.xlu0 %886
      %v888 = vsel %vm339, %v884, 0.0
      %889 = vadd.xlane.f32.xlu0 %v888
      %v890 = vpop.xlane.xlu0 %889
      %v891 = vmax.f32 %v887, 1e-24
      %v892 = vmax.f32 %v890, 1e-24
      %v893 = vrsqrt.pop %v891
      %v894 = vrsqrt.pop %v892
      %v895 = vmul.f32 %v881, %v893
      %v896 = vmul.f32 %v882, %v894
      %v897 = vmul.f32 %v895, 5.656854
      %v898 = vmul.f32 %v896, 5.656854
      %v899 = vlaneseq
      %v900 = vshrl.u32 %v899, 7
      %v901 = vsub.s32 1, %v900
      %v902 = vrot.slane %v334, %v901
      %v903 = vmul.f32 %v897, %v902
      %v904 = vmul.f32 %v898, %v902
      %v905 = vpack.c.bf16 %v904, %v903
      %v906 = vld [vmem:[%s4] sm:$0xf]
      %v907 = vld [vmem:[%s4 + $0x4] sm:$0xf]
      %v908 = vld [vmem:[%s4 + $0x8] sm:$0xf]
      %v909 = vld [vmem:[%s4 + $0xc] sm:$0xf]
      %v910 = vld [vmem:[%s5] sm:$0x1]
      %v912 = vlaneseq
      %v913 = vshrl.u32 %v912, 7
      %v914 = vsub.s32 0, %v913
      %v915 = vrot.slane %v910, %v914
      %v921 = vunpack.c.l.b16 %v906
      %v922 = vunpack.c.l.b16 %v907
      %v923 = vunpack.c.l.b16 %v908
      %v924 = vunpack.c.l.b16 %v909
      %v925 = vpack.c.b16 %v922, %v921
      %v926 = vpack.c.b16 %v924, %v923
      %v930 = vsel %vm339, %v905, 0
      %932 = vmatprep.subr.bf16.mxu0 0
      %933 = vmatpush1.bf16.msra.mxu0 0
      %934 = vmatprep.subr.bf16.mxu0 0
      %935 = vmatpush1.bf16.msra.mxu0 0
      %936 = vmatprep.subr.bf16.mxu0 0
      %937 = vmatpush1.bf16.msra.mxu0 0
      %938 = vmatprep.subr.bf16.mxu0 0
      %939 = vmatpush1.bf16.msra.mxu0 0
      %940 = vmatprep.subr.bf16.mxu0 0
      %941 = vmatpush1.bf16.msra.mxu0 0
      %942 = vmatprep.subr.bf16.mxu0 0
      %943 = vmatpush1.bf16.msra.mxu0 0
      %944 = vmatprep.subr.bf16.mxu0 0
      %945 = vmatpush1.bf16.msra.mxu0 %v926
      %946 = vmatprep.subr.bf16.mxu0 0
      %947 = vmatpush1.bf16.msra.mxu0 %v925
      %948 = vmatprep.subr.bf16.mxu0 0
      %949 = vmatpush2.bf16.msra.mxu0 0
      %950 = vmatprep.subr.bf16.mxu0 0
      %951 = vmatpush2.bf16.msra.mxu0 0
      %952 = vmatprep.subr.bf16.mxu0 0
      %953 = vmatpush2.bf16.msra.mxu0 0
      %954 = vmatprep.subr.bf16.mxu0 0
      %955 = vmatpush2.bf16.msra.mxu0 0
      %956 = vmatprep.subr.bf16.mxu0 0
      %957 = vmatpush2.bf16.msra.mxu0 0
      %958 = vmatprep.subr.bf16.mxu0 0
      %959 = vmatpush2.bf16.msra.mxu0 0
      %960 = vmatprep.subr.bf16.mxu0 0
      %961 = vmatpush2.bf16.msra.mxu0 0
      %962 = vmatprep.subr.bf16.mxu0 0
      %963 = vmatpush2.bf16.msra.mxu0 0
      %964 = vmatprep.mubr.bf16.mxu0 0
      %965 = vmatmul.mubr.bf16.gmra.mxu0 %v930
      %v966 = vpop.f32.mrf.mxu0
      %v967 = vadd.f32 %v915, %v966
      %v968 = vpop.f32.mrf.mxu0
      %v969 = vpop.f32.mrf.mxu0
      %v970 = vadd.f32 %v915, %v969
      %v971 = vpop.f32.mrf.mxu0
      %972 = vdwg.mxu0
      %v973 = vmul.f32 %v967, 0.5
      %v974 = vmul.f32 %v970, 0.5
      %v975 = vmul.f32 %v967, 0.70710677
      %v976 = vmul.f32 %v970, 0.70710677
      %vm977 = vcmp.ge.f32.partialorder %v975, 0.0
      %vm978 = vcmp.ge.f32.partialorder %v976, 0.0
      %v979 = vsel %vm977, 1.0, -1.0
      %v980 = vsel %vm978, 1.0, -1.0
      %v981 = vand.u32 2147483647, %v975
      %v982 = vand.u32 2147483647, %v976
      %v983 = vmul.f32 %v981, 0.3275911
      %v984 = vmul.f32 %v982, 0.3275911
      %v985 = vadd.f32 %v983, 1.0
      %v986 = vadd.f32 %v984, 1.0
      %v987 = vrcp.pop %v985
      %v988 = vmul.f32 1.0, %v987
      %v989 = vrcp.pop %v986
      %v990 = vmul.f32 1.0, %v989
      %v991 = vmul.f32 %v988, 1.0614054
      %v992 = vmul.f32 %v990, 1.0614054
      %v993 = vadd.f32 %v991, -1.4531521
      %v994 = vadd.f32 %v992, -1.4531521
      %v995 = vmul.f32 %v993, %v988
      %v996 = vmul.f32 %v994, %v990
      %v997 = vadd.f32 %v995, 1.4214138
      %v998 = vadd.f32 %v996, 1.4214138
      %v999 = vmul.f32 %v997, %v988
      %v1000 = vmul.f32 %v998, %v990
      %v1001 = vadd.f32 %v999, -0.28449672
      %v1002 = vadd.f32 %v1000, -0.28449672
      %v1003 = vmul.f32 %v1001, %v988
      %v1004 = vmul.f32 %v1002, %v990
      %v1005 = vadd.f32 %v1003, 0.2548296
      %v1006 = vadd.f32 %v1004, 0.2548296
      %v1007 = vmul.f32 %v1005, %v988
      %v1008 = vmul.f32 %v1006, %v990
      %v1009 = vsub.f32 0.0, %v981
      %v1010 = vsub.f32 0.0, %v982
      %v1011 = vmul.f32 %v1009, %v981
      %v1012 = vmul.f32 %v1010, %v982
      %v1013 = vmul.f32 %v1011, 1.442695
      %v1014 = vpow.pop %v1013
      %v1015 = vmul.f32 %v1012, 1.442695
      %v1016 = vpow.pop %v1015
      %v1017 = vmul.f32 %v1007, %v1014
      %v1018 = vmul.f32 %v1008, %v1016
      %v1019 = vsub.f32 1.0, %v1017
      %v1020 = vsub.f32 1.0, %v1018
      %v1021 = vmul.f32 %v979, %v1019
      %v1022 = vmul.f32 %v980, %v1020
      %v1023 = vadd.f32 %v1021, 1.0
      %v1024 = vadd.f32 %v1022, 1.0
      %v1025 = vmul.f32 %v973, %v1023
      %v1026 = vmul.f32 %v974, %v1024
      %v1027 = vpack.c.bf16 %v1026, %v1025
      %v1028 = vld [vmem:[%s6] sm:$0xf]
      %v1029 = vld [vmem:[%s6 + $0x4] sm:$0xf]
      %v1030 = vld [vmem:[%s6 + $0x8] sm:$0xf]
      %v1031 = vld [vmem:[%s6 + $0xc] sm:$0xf]
      %v1032 = vld [vmem:[%s6 + $0x10] sm:$0xf]
      %v1033 = vld [vmem:[%s6 + $0x14] sm:$0xf]
      %v1034 = vld [vmem:[%s6 + $0x18] sm:$0xf]
      %v1035 = vld [vmem:[%s6 + $0x1c] sm:$0xf]
      %v1036 = vld [vmem:[%s6 + $0x20] sm:$0xf]
      %v1037 = vld [vmem:[%s6 + $0x24] sm:$0xf]
      %v1038 = vld [vmem:[%s6 + $0x28] sm:$0xf]
      %v1039 = vld [vmem:[%s6 + $0x2c] sm:$0xf]
      %v1040 = vld [vmem:[%s6 + $0x30] sm:$0xf]
      %v1041 = vld [vmem:[%s6 + $0x34] sm:$0xf]
      %v1042 = vld [vmem:[%s6 + $0x38] sm:$0xf]
      %v1043 = vld [vmem:[%s6 + $0x3c] sm:$0xf]
      %v1044 = vlaneseq
      %v1045 = vshrl.u32 %v1044, 7
      %v1046 = vsub.s32 3, %v1045
      %v1047 = vrot.slane %v334, %v1046
      %v1064 = vunpack.c.l.b16 %v1028
      %v1065 = vunpack.c.l.b16 %v1029
      %v1066 = vunpack.c.l.b16 %v1030
      %v1067 = vunpack.c.l.b16 %v1031
      %v1068 = vunpack.c.l.b16 %v1032
      %v1069 = vunpack.c.l.b16 %v1033
      %v1070 = vunpack.c.l.b16 %v1034
      %v1071 = vunpack.c.l.b16 %v1035
      %v1072 = vunpack.c.l.b16 %v1036
      %v1073 = vunpack.c.l.b16 %v1037
      %v1074 = vunpack.c.l.b16 %v1038
      %v1075 = vunpack.c.l.b16 %v1039
      %v1076 = vunpack.c.l.b16 %v1040
      %v1077 = vunpack.c.l.b16 %v1041
      %v1078 = vunpack.c.l.b16 %v1042
      %v1079 = vunpack.c.l.b16 %v1043
      %v1080 = vpack.c.b16 %v1065, %v1064
      %v1081 = vpack.c.b16 %v1067, %v1066
      %v1082 = vpack.c.b16 %v1069, %v1068
      %v1083 = vpack.c.b16 %v1071, %v1070
      %v1084 = vpack.c.b16 %v1073, %v1072
      %v1085 = vpack.c.b16 %v1075, %v1074
      %v1086 = vpack.c.b16 %v1077, %v1076
      %v1087 = vpack.c.b16 %v1079, %v1078
      %1096 = vmatprep.subr.bf16.mxu0 0
      %1097 = vmatpush1.bf16.msra.mxu0 %v1087
      %1098 = vmatprep.subr.bf16.mxu0 0
      %1099 = vmatpush1.bf16.msra.mxu0 %v1086
      %1100 = vmatprep.subr.bf16.mxu0 0
      %1101 = vmatpush1.bf16.msra.mxu0 %v1085
      %1102 = vmatprep.subr.bf16.mxu0 0
      %1103 = vmatpush1.bf16.msra.mxu0 %v1084
      %1104 = vmatprep.subr.bf16.mxu0 0
      %1105 = vmatpush1.bf16.msra.mxu0 %v1083
      %1106 = vmatprep.subr.bf16.mxu0 0
      %1107 = vmatpush1.bf16.msra.mxu0 %v1082
      %1108 = vmatprep.subr.bf16.mxu0 0
      %1109 = vmatpush1.bf16.msra.mxu0 %v1081
      %1110 = vmatprep.subr.bf16.mxu0 0
      %1111 = vmatpush1.bf16.msra.mxu0 %v1080
      %1112 = vmatprep.subr.bf16.mxu0 0
      %1113 = vmatpush2.bf16.msra.mxu0 0
      %1114 = vmatprep.subr.bf16.mxu0 0
      %1115 = vmatpush2.bf16.msra.mxu0 0
      %1116 = vmatprep.subr.bf16.mxu0 0
      %1117 = vmatpush2.bf16.msra.mxu0 0
      %1118 = vmatprep.subr.bf16.mxu0 0
      %1119 = vmatpush2.bf16.msra.mxu0 0
      %1120 = vmatprep.subr.bf16.mxu0 0
      %1121 = vmatpush2.bf16.msra.mxu0 0
      %1122 = vmatprep.subr.bf16.mxu0 0
      %1123 = vmatpush2.bf16.msra.mxu0 0
      %1124 = vmatprep.subr.bf16.mxu0 0
      %1125 = vmatpush2.bf16.msra.mxu0 0
      %1126 = vmatprep.subr.bf16.mxu0 0
      %1127 = vmatpush2.bf16.msra.mxu0 0
      %1128 = vmatprep.mubr.bf16.mxu0 0
      %1129 = vmatmul.mubr.bf16.gmra.mxu0 %v1027
      %v1130 = vpop.f32.mrf.mxu0
      %v1131 = vadd.f32 %v1047, %v1130
      %v1132 = vpop.f32.mrf.mxu0
      %v1133 = vpop.f32.mrf.mxu0
      %v1134 = vadd.f32 %v1047, %v1133
      %v1135 = vpop.f32.mrf.mxu0
      %1136 = vdwg.mxu0
      %v1137 = vadd.f32 %v881, %v1131
      %v1138 = vadd.f32 %v882, %v1134
      %1139 = vst.msk [vmem:[%s332] sm:$0xff] %vm339, %v1137
      %1140 = vst.msk [vmem:[%s332 + $0x8] sm:$0xff] %vm339, %v1138
      %p1141 = scmp.lt.s32.totalorder %s20, 1
      %s1142 = scalar_select %p1141, %s20, 1
      %s1143 = smul.addr %s1142, 2
      %s1144 = smul.addr %s1143, 8
      %s1145 = scalar_lea.vmem %s9, %s1144
      // Predicated region
      $region57: #{duration_predictor_forward.7} parent=55 // pred_check
        %p1146 = pneg %p232
      $region58: #{duration_predictor_forward.7} parent=55 // pred_check_branch
        %1148 = sbr.rel (%p1146) target = $region60
      $region59: #{duration_predictor_forward.7} parent=55 // pred_region
        _
      $region60: #{duration_predictor_forward.7} parent=55 // pred_fallthru
        _
    $region56: #{duration_predictor_forward.7} parent=5 // pred_fallthru
      _
    %p1149 = scmp.le.s32.totalorder 2, %s15
    // Predicated region
    $region61: #{duration_predictor_forward.7} parent=5 // pred_check
      %p1150 = pneg %p1149
    $region62: #{duration_predictor_forward.7} parent=5 // pred_check_branch
      %1152 = sbr.rel (%p1150) target = $region64
    $region63: #{duration_predictor_forward.7} parent=5 // pred_region
      %s1153 = ssub.s32 %s15, 2
      // Predicated region
      $region65: #{duration_predictor_forward.7} parent=63 // pred_check
        %p1154 = pneg %p238
      $region66: #{duration_predictor_forward.7} parent=63 // pred_check_branch
        %1156 = sbr.rel (%p1154) target = $region68
      $region67: #{duration_predictor_forward.7} parent=63 // pred_region
        %p1157 = scmp.lt.s32.totalorder %s21, 1
        %s1158 = scalar_select %p1157, %s21, 1
        %s1159 = smul.addr %s1158, 2
        %s1160 = smul.addr %s1159, 8
        %s1161 = scalar_lea.vmem %s9, %s1160
      $region68: #{duration_predictor_forward.7} parent=63 // pred_fallthru
        _
    $region64: #{duration_predictor_forward.7} parent=5 // pred_fallthru
      _
  $region6: #{duration_predictor_forward.7} parent=0 // loop_footer
    %s19 = sadd.s32 1, %s15
  $region7: #{duration_predictor_forward.7} parent=0 // loop_footer_branch
    %14 = sbr.rel target = $region3
  $region8: #{duration_predictor_forward.7} parent=0 // loop_exit
    _

// kernel: duration_predictor_forward.8
$region0: #{duration_predictor_forward.8}
  #allocation0 [shape = 'u32[]', space=smem, size = 0x4, offset = 0x4, fixed_abs, tag = 'smem constant byte address 0x4 - core index']
  #allocation1 [shape = 'u32[144,128]{1,0:T(1,128)}', space=vmem, size = 0x12000, scoped, tag = 'internal scratch']
  %s0 = inlined_call_operand.vmem [shape: f32[2,16,32], index: 0, kind: input, shape index: {}]
  %s1 = inlined_call_operand.vmem [shape: f32[2,16,32], index: 1, kind: input, shape index: {}]
  %s2 = inlined_call_operand.vmem [shape: bf16[64,32], index: 2, kind: input, shape index: {}]
  %s3 = inlined_call_operand.vmem [shape: f32[8,32], index: 3, kind: input, shape index: {}]
  %s4 = inlined_call_operand.vmem [shape: bf16[32,96], index: 4, kind: input, shape index: {}]
  %s5 = inlined_call_operand.vmem [shape: bf16[32,32], index: 5, kind: input, shape index: {}]
  %s6 = inlined_call_operand.vmem [shape: bf16[32,128], index: 6, kind: input, shape index: {}]
  %s7 = inlined_call_operand.vmem [shape: f32[1,128], index: 7, kind: input, shape index: {}]
  %s8 = inlined_call_operand.vmem [shape: bf16[128,32], index: 8, kind: input, shape index: {}]
  %s9 = inlined_call_operand.vmem [shape: f32[16,16], index: 9, kind: input, shape index: {}]
  %s10 = inlined_call_operand.vmem [shape: f32[16,16], index: 10, kind: input, shape index: {}]
  %s11 = inlined_call_operand.vmem [shape: f32[2,16,32], index: 11, kind: output, shape index: {}]
  %s12 = sld [smem:[#allocation0]]
  $region77: #{duration_predictor_forward.8} parent=0
    _
  %s14 = ssub.s32 1, %s12
  %s15 = scalar_select 0, %s14, %s12
  loop: start=0, step=1, limit=4
  $region2: #{duration_predictor_forward.8} parent=0 // loop_pre_header
    _
  $region3: #{duration_predictor_forward.8} parent=0 // loop_header
    %s17 = sphi 0, %s21
    %p18 = scmp.ge.s32.totalorder %s17, 4
    %s27 = sphi 0, %s29
    %s30 = sphi 0, %s27
    %s31 = sphi 0, %s30
    %s47 = sphi 0, %s31
    %s53 = sphi 0, %s55
    %s56 = sphi 0, %s53
    %s57 = sphi 0, %s56
    %s73 = sphi 0, %s57
    %s77 = sphi 0, %s77
    %s79 = sphi 0, %s77
    %s80 = sphi 0, %s79
    %s94 = sphi 0, %s80
    %s98 = sphi 0, %s98
    %s100 = sphi 0, %s98
    %s101 = sphi 0, %s100
    %s115 = sphi 0, %s101
    %s119 = sphi 0, %s119
    %s121 = sphi 0, %s119
    %s122 = sphi 0, %s121
    %s136 = sphi 0, %s122
    %s140 = sphi 0, %s140
    %s142 = sphi 0, %s140
    %s143 = sphi 0, %s142
    %s157 = sphi 0, %s143
    %s161 = sphi 0, %s161
    %s163 = sphi 0, %s161
    %s164 = sphi 0, %s163
    %s178 = sphi 0, %s164
    %s182 = sphi 0, %s182
    %s184 = sphi 0, %s182
    %s185 = sphi 0, %s184
    %s199 = sphi 0, %s185
    %s203 = sphi 0, %s203
    %s205 = sphi 0, %s203
    %s206 = sphi 0, %s205
    %s220 = sphi 0, %s206
    %s224 = sphi 0, %s224
    %s226 = sphi 0, %s224
    %s227 = sphi 0, %s226
    %s241 = sphi 0, %s227
    %s245 = sphi 0, %s245
    %s247 = sphi 0, %s245
    %s248 = sphi 0, %s247
    %s262 = sphi 0, %s248
    %s268 = sphi 0, %s270
    %s271 = sphi 0, %s268
    %s272 = sphi 0, %s271
    %s288 = sphi 0, %s272
  $region4: #{duration_predictor_forward.8} parent=0 // loop_header_branch
    %20 = sbr.rel (%p18) target = $region8
  $region5: #{duration_predictor_forward.8} parent=0 // loop_body
    %s22 = ssub.s32 %s17, 1
    %s23 = ssub.s32 %s17, 2
    %s24 = sadd.s32 %s17, 1
    %s25 = ssub.s32 %s17, %s24
    %p26 = scmp.eq.s32.totalorder %s25, 0
    %s28 = sadd.s32 %s27, 1
    %s29 = scalar_select %p26, %s27, %s28
    %p32 = pneg %p26
    %p33 = scmp.eq.s32.totalorder %s17, 1
    %p34 = por %p32, %p33
    %p35 = scmp.ne.s32.totalorder %s27, %s30
    %p36 = scmp.eq.s32.totalorder %s17, 0
    %p37 = por %p35, %p36
    %p38 = scmp.ne.s32.totalorder %s27, %s30
    %p39 = scmp.eq.s32.totalorder %s22, 1
    %p40 = por %p38, %p39
    %p41 = scmp.ne.s32.totalorder %s30, %s31
    %p42 = scmp.eq.s32.totalorder %s22, 0
    %p43 = por %p41, %p42
    %p44 = scmp.ne.s32.totalorder %s30, %s31
    %p45 = scmp.eq.s32.totalorder %s23, 1
    %p46 = por %p44, %p45
    %p48 = scmp.ne.s32.totalorder %s31, %s47
    %p49 = scmp.eq.s32.totalorder %s23, 0
    %p50 = por %p48, %p49
    %s51 = ssub.s32 %s17, %s24
    %p52 = scmp.eq.s32.totalorder %s51, 0
    %s54 = sadd.s32 %s53, 1
    %s55 = scalar_select %p52, %s53, %s54
    %p58 = pneg %p52
    %p59 = scmp.eq.s32.totalorder %s17, 1
    %p60 = por %p58, %p59
    %p61 = scmp.ne.s32.totalorder %s53, %s56
    %p62 = scmp.eq.s32.totalorder %s17, 0
    %p63 = por %p61, %p62
    %p64 = scmp.ne.s32.totalorder %s53, %s56
    %p65 = scmp.eq.s32.totalorder %s22, 1
    %p66 = por %p64, %p65
    %p67 = scmp.ne.s32.totalorder %s56, %s57
    %p68 = scmp.eq.s32.totalorder %s22, 0
    %p69 = por %p67, %p68
    %p70 = scmp.ne.s32.totalorder %s56, %s57
    %p71 = scmp.eq.s32.totalorder %s23, 1
    %p72 = por %p70, %p71
    %p74 = scmp.ne.s32.totalorder %s57, %s73
    %p75 = scmp.eq.s32.totalorder %s23, 0
    %p76 = por %p74, %p75
    %s78 = sadd.s32 %s77, 1
    %p81 = scmp.eq.s32.totalorder %s17, 1
    %p82 = scmp.ne.s32.totalorder %s77, %s79
    %p83 = scmp.eq.s32.totalorder %s17, 0
    %p84 = por %p82, %p83
    %p85 = scmp.ne.s32.totalorder %s77, %s79
    %p86 = scmp.eq.s32.totalorder %s22, 1
    %p87 = por %p85, %p86
    %p88 = scmp.ne.s32.totalorder %s79, %s80
    %p89 = scmp.eq.s32.totalorder %s22, 0
    %p90 = por %p88, %p89
    %p91 = scmp.ne.s32.totalorder %s79, %s80
    %p92 = scmp.eq.s32.totalorder %s23, 1
    %p93 = por %p91, %p92
    %p95 = scmp.ne.s32.totalorder %s80, %s94
    %p96 = scmp.eq.s32.totalorder %s23, 0
    %p97 = por %p95, %p96
    %s99 = sadd.s32 %s98, 1
    %p102 = scmp.eq.s32.totalorder %s17, 1
    %p103 = scmp.ne.s32.totalorder %s98, %s100
    %p104 = scmp.eq.s32.totalorder %s17, 0
    %p105 = por %p103, %p104
    %p106 = scmp.ne.s32.totalorder %s98, %s100
    %p107 = scmp.eq.s32.totalorder %s22, 1
    %p108 = por %p106, %p107
    %p109 = scmp.ne.s32.totalorder %s100, %s101
    %p110 = scmp.eq.s32.totalorder %s22, 0
    %p111 = por %p109, %p110
    %p112 = scmp.ne.s32.totalorder %s100, %s101
    %p113 = scmp.eq.s32.totalorder %s23, 1
    %p114 = por %p112, %p113
    %p116 = scmp.ne.s32.totalorder %s101, %s115
    %p117 = scmp.eq.s32.totalorder %s23, 0
    %p118 = por %p116, %p117
    %s120 = sadd.s32 %s119, 1
    %p123 = scmp.eq.s32.totalorder %s17, 1
    %p124 = scmp.ne.s32.totalorder %s119, %s121
    %p125 = scmp.eq.s32.totalorder %s17, 0
    %p126 = por %p124, %p125
    %p127 = scmp.ne.s32.totalorder %s119, %s121
    %p128 = scmp.eq.s32.totalorder %s22, 1
    %p129 = por %p127, %p128
    %p130 = scmp.ne.s32.totalorder %s121, %s122
    %p131 = scmp.eq.s32.totalorder %s22, 0
    %p132 = por %p130, %p131
    %p133 = scmp.ne.s32.totalorder %s121, %s122
    %p134 = scmp.eq.s32.totalorder %s23, 1
    %p135 = por %p133, %p134
    %p137 = scmp.ne.s32.totalorder %s122, %s136
    %p138 = scmp.eq.s32.totalorder %s23, 0
    %p139 = por %p137, %p138
    %s141 = sadd.s32 %s140, 1
    %p144 = scmp.eq.s32.totalorder %s17, 1
    %p145 = scmp.ne.s32.totalorder %s140, %s142
    %p146 = scmp.eq.s32.totalorder %s17, 0
    %p147 = por %p145, %p146
    %p148 = scmp.ne.s32.totalorder %s140, %s142
    %p149 = scmp.eq.s32.totalorder %s22, 1
    %p150 = por %p148, %p149
    %p151 = scmp.ne.s32.totalorder %s142, %s143
    %p152 = scmp.eq.s32.totalorder %s22, 0
    %p153 = por %p151, %p152
    %p154 = scmp.ne.s32.totalorder %s142, %s143
    %p155 = scmp.eq.s32.totalorder %s23, 1
    %p156 = por %p154, %p155
    %p158 = scmp.ne.s32.totalorder %s143, %s157
    %p159 = scmp.eq.s32.totalorder %s23, 0
    %p160 = por %p158, %p159
    %s162 = sadd.s32 %s161, 1
    %p165 = scmp.eq.s32.totalorder %s17, 1
    %p166 = scmp.ne.s32.totalorder %s161, %s163
    %p167 = scmp.eq.s32.totalorder %s17, 0
    %p168 = por %p166, %p167
    %p169 = scmp.ne.s32.totalorder %s161, %s163
    %p170 = scmp.eq.s32.totalorder %s22, 1
    %p171 = por %p169, %p170
    %p172 = scmp.ne.s32.totalorder %s163, %s164
    %p173 = scmp.eq.s32.totalorder %s22, 0
    %p174 = por %p172, %p173
    %p175 = scmp.ne.s32.totalorder %s163, %s164
    %p176 = scmp.eq.s32.totalorder %s23, 1
    %p177 = por %p175, %p176
    %p179 = scmp.ne.s32.totalorder %s164, %s178
    %p180 = scmp.eq.s32.totalorder %s23, 0
    %p181 = por %p179, %p180
    %s183 = sadd.s32 %s182, 1
    %p186 = scmp.eq.s32.totalorder %s17, 1
    %p187 = scmp.ne.s32.totalorder %s182, %s184
    %p188 = scmp.eq.s32.totalorder %s17, 0
    %p189 = por %p187, %p188
    %p190 = scmp.ne.s32.totalorder %s182, %s184
    %p191 = scmp.eq.s32.totalorder %s22, 1
    %p192 = por %p190, %p191
    %p193 = scmp.ne.s32.totalorder %s184, %s185
    %p194 = scmp.eq.s32.totalorder %s22, 0
    %p195 = por %p193, %p194
    %p196 = scmp.ne.s32.totalorder %s184, %s185
    %p197 = scmp.eq.s32.totalorder %s23, 1
    %p198 = por %p196, %p197
    %p200 = scmp.ne.s32.totalorder %s185, %s199
    %p201 = scmp.eq.s32.totalorder %s23, 0
    %p202 = por %p200, %p201
    %s204 = sadd.s32 %s203, 1
    %p207 = scmp.eq.s32.totalorder %s17, 1
    %p208 = scmp.ne.s32.totalorder %s203, %s205
    %p209 = scmp.eq.s32.totalorder %s17, 0
    %p210 = por %p208, %p209
    %p211 = scmp.ne.s32.totalorder %s203, %s205
    %p212 = scmp.eq.s32.totalorder %s22, 1
    %p213 = por %p211, %p212
    %p214 = scmp.ne.s32.totalorder %s205, %s206
    %p215 = scmp.eq.s32.totalorder %s22, 0
    %p216 = por %p214, %p215
    %p217 = scmp.ne.s32.totalorder %s205, %s206
    %p218 = scmp.eq.s32.totalorder %s23, 1
    %p219 = por %p217, %p218
    %p221 = scmp.ne.s32.totalorder %s206, %s220
    %p222 = scmp.eq.s32.totalorder %s23, 0
    %p223 = por %p221, %p222
    %s225 = sadd.s32 %s224, 1
    %p228 = scmp.eq.s32.totalorder %s17, 1
    %p229 = scmp.ne.s32.totalorder %s224, %s226
    %p230 = scmp.eq.s32.totalorder %s17, 0
    %p231 = por %p229, %p230
    %p232 = scmp.ne.s32.totalorder %s224, %s226
    %p233 = scmp.eq.s32.totalorder %s22, 1
    %p234 = por %p232, %p233
    %p235 = scmp.ne.s32.totalorder %s226, %s227
    %p236 = scmp.eq.s32.totalorder %s22, 0
    %p237 = por %p235, %p236
    %p238 = scmp.ne.s32.totalorder %s226, %s227
    %p239 = scmp.eq.s32.totalorder %s23, 1
    %p240 = por %p238, %p239
    %p242 = scmp.ne.s32.totalorder %s227, %s241
    %p243 = scmp.eq.s32.totalorder %s23, 0
    %p244 = por %p242, %p243
    %s246 = sadd.s32 %s245, 1
    %p249 = scmp.eq.s32.totalorder %s17, 1
    %p250 = scmp.ne.s32.totalorder %s245, %s247
    %p251 = scmp.eq.s32.totalorder %s17, 0
    %p252 = por %p250, %p251
    %p253 = scmp.ne.s32.totalorder %s245, %s247
    %p254 = scmp.eq.s32.totalorder %s22, 1
    %p255 = por %p253, %p254
    %p256 = scmp.ne.s32.totalorder %s247, %s248
    %p257 = scmp.eq.s32.totalorder %s22, 0
    %p258 = por %p256, %p257
    %p259 = scmp.ne.s32.totalorder %s247, %s248
    %p260 = scmp.eq.s32.totalorder %s23, 1
    %p261 = por %p259, %p260
    %p263 = scmp.ne.s32.totalorder %s248, %s262
    %p264 = scmp.eq.s32.totalorder %s23, 0
    %p265 = por %p263, %p264
    %s266 = ssub.s32 %s17, %s24
    %p267 = scmp.eq.s32.totalorder %s266, 0
    %s269 = sadd.s32 %s268, 1
    %s270 = scalar_select %p267, %s268, %s269
    %p273 = pneg %p267
    %p274 = scmp.eq.s32.totalorder %s17, 1
    %p275 = por %p273, %p274
    %p276 = scmp.ne.s32.totalorder %s268, %s271
    %p277 = scmp.eq.s32.totalorder %s17, 0
    %p278 = por %p276, %p277
    %p279 = scmp.ne.s32.totalorder %s268, %s271
    %p280 = scmp.eq.s32.totalorder %s22, 1
    %p281 = por %p279, %p280
    %p282 = scmp.ne.s32.totalorder %s271, %s272
    %p283 = scmp.eq.s32.totalorder %s22, 0
    %p284 = por %p282, %p283
    %p285 = scmp.ne.s32.totalorder %s271, %s272
    %p286 = scmp.eq.s32.totalorder %s23, 1
    %p287 = por %p285, %p286
    %p289 = scmp.ne.s32.totalorder %s272, %s288
    %p290 = scmp.eq.s32.totalorder %s23, 0
    %p291 = por %p289, %p290
    %p292 = scmp.le.s32.totalorder 1, %s17
    %p293 = scmp.lt.s32.totalorder %s17, 3
    %p294 = pnand %p292, %p293
    %p295 = pneg %p294
    // Predicated region
    $region9: #{duration_predictor_forward.8} parent=5 // pred_check
      _
    $region10: #{duration_predictor_forward.8} parent=5 // pred_check_branch
      %297 = sbr.rel (%p294) target = $region12
    $region11: #{duration_predictor_forward.8} parent=5 // pred_region
      %s298 = ssub.s32 %s17, 1
      // Predicated region
      $region13: #{duration_predictor_forward.8} parent=11 // pred_check
        %p299 = pneg %p90
      $region14: #{duration_predictor_forward.8} parent=11 // pred_check_branch
        %301 = sbr.rel (%p299) target = $region16
      $region15: #{duration_predictor_forward.8} parent=11 // pred_region
        _
      $region16: #{duration_predictor_forward.8} parent=11 // pred_fallthru
        _
      // Predicated region
      $region17: #{duration_predictor_forward.8} parent=11 // pred_check
        %p302 = pneg %p111
      $region18: #{duration_predictor_forward.8} parent=11 // pred_check_branch
        %304 = sbr.rel (%p302) target = $region20
      $region19: #{duration_predictor_forward.8} parent=11 // pred_region
        _
      $region20: #{duration_predictor_forward.8} parent=11 // pred_fallthru
        _
      // Predicated region
      $region21: #{duration_predictor_forward.8} parent=11 // pred_check
        %p305 = pneg %p132
      $region22: #{duration_predictor_forward.8} parent=11 // pred_check_branch
        %307 = sbr.rel (%p305) target = $region24
      $region23: #{duration_predictor_forward.8} parent=11 // pred_region
        _
      $region24: #{duration_predictor_forward.8} parent=11 // pred_fallthru
        _
      // Predicated region
      $region25: #{duration_predictor_forward.8} parent=11 // pred_check
        %p308 = pneg %p153
      $region26: #{duration_predictor_forward.8} parent=11 // pred_check_branch
        %310 = sbr.rel (%p308) target = $region28
      $region27: #{duration_predictor_forward.8} parent=11 // pred_region
        _
      $region28: #{duration_predictor_forward.8} parent=11 // pred_fallthru
        _
      // Predicated region
      $region29: #{duration_predictor_forward.8} parent=11 // pred_check
        %p311 = pneg %p174
      $region30: #{duration_predictor_forward.8} parent=11 // pred_check_branch
        %313 = sbr.rel (%p311) target = $region32
      $region31: #{duration_predictor_forward.8} parent=11 // pred_region
        _
      $region32: #{duration_predictor_forward.8} parent=11 // pred_fallthru
        _
      // Predicated region
      $region33: #{duration_predictor_forward.8} parent=11 // pred_check
        %p314 = pneg %p195
      $region34: #{duration_predictor_forward.8} parent=11 // pred_check_branch
        %316 = sbr.rel (%p314) target = $region36
      $region35: #{duration_predictor_forward.8} parent=11 // pred_region
        _
      $region36: #{duration_predictor_forward.8} parent=11 // pred_fallthru
        _
      // Predicated region
      $region37: #{duration_predictor_forward.8} parent=11 // pred_check
        %p317 = pneg %p216
      $region38: #{duration_predictor_forward.8} parent=11 // pred_check_branch
        %319 = sbr.rel (%p317) target = $region40
      $region39: #{duration_predictor_forward.8} parent=11 // pred_region
        _
      $region40: #{duration_predictor_forward.8} parent=11 // pred_fallthru
        _
      // Predicated region
      $region41: #{duration_predictor_forward.8} parent=11 // pred_check
        %p320 = pneg %p237
      $region42: #{duration_predictor_forward.8} parent=11 // pred_check_branch
        %322 = sbr.rel (%p320) target = $region44
      $region43: #{duration_predictor_forward.8} parent=11 // pred_region
        _
      $region44: #{duration_predictor_forward.8} parent=11 // pred_fallthru
        _
      // Predicated region
      $region45: #{duration_predictor_forward.8} parent=11 // pred_check
        %p323 = pneg %p258
      $region46: #{duration_predictor_forward.8} parent=11 // pred_check_branch
        %325 = sbr.rel (%p323) target = $region48
      $region47: #{duration_predictor_forward.8} parent=11 // pred_region
        _
      $region48: #{duration_predictor_forward.8} parent=11 // pred_fallthru
        _
    $region12: #{duration_predictor_forward.8} parent=5 // pred_fallthru
      _
    %p326 = scmp.lt.s32.totalorder %s17, 2
    // Predicated region
    $region49: #{duration_predictor_forward.8} parent=5 // pred_check
      %p327 = pneg %p326
    $region50: #{duration_predictor_forward.8} parent=5 // pred_check_branch
      %329 = sbr.rel (%p327) target = $region52
    $region51: #{duration_predictor_forward.8} parent=5 // pred_region
      // Predicated region
      $region53: #{duration_predictor_forward.8} parent=51 // pred_check
        %p330 = pneg %p37
      $region54: #{duration_predictor_forward.8} parent=51 // pred_check_branch
        %332 = sbr.rel (%p330) target = $region56
      $region55: #{duration_predictor_forward.8} parent=51 // pred_region
        %p333 = scmp.lt.s32.totalorder %s17, 1
        %s334 = scalar_select %p333, %s17, 1
        %s335 = smul.addr %s334, 2
        %s336 = smul.addr %s335, 8
        %s337 = scalar_lea.vmem %s0, %s336
      $region56: #{duration_predictor_forward.8} parent=51 // pred_fallthru
        _
      // Predicated region
      $region57: #{duration_predictor_forward.8} parent=51 // pred_check
        %p338 = pneg %p63
      $region58: #{duration_predictor_forward.8} parent=51 // pred_check_branch
        %340 = sbr.rel (%p338) target = $region60
      $region59: #{duration_predictor_forward.8} parent=51 // pred_region
        %p341 = scmp.lt.s32.totalorder %s17, 1
        %s342 = scalar_select %p341, %s17, 1
        %s343 = smul.addr %s342, 2
        %s344 = smul.addr %s343, 8
        %s345 = scalar_lea.vmem %s1, %s344
      $region60: #{duration_predictor_forward.8} parent=51 // pred_fallthru
        _
    $region52: #{duration_predictor_forward.8} parent=5 // pred_fallthru
      _
    %p346 = scmp.le.s32.totalorder 1, %s17
    %p347 = scmp.lt.s32.totalorder %s17, 3
    %p348 = pnand %p346, %p347
    %p349 = pneg %p348
    // Predicated region
    $region61: #{duration_predictor_forward.8} parent=5 // pred_check
      _
    $region62: #{duration_predictor_forward.8} parent=5 // pred_check_branch
      %351 = sbr.rel (%p348) target = $region64
    $region63: #{duration_predictor_forward.8} parent=5 // pred_region
      %s352 = ssub.s32 %s17, 1
      %p353 = scmp.lt.s32.totalorder %s22, 1
      %s354 = scalar_select %p353, %s22, 1
      %s355 = smul.addr %s354, 2
      %s356 = smul.addr %s355, 8
      %s357 = scalar_lea.vmem %s0, %s356
      %p358 = pneg %p43
      %p359 = pneg %p40
      %p360 = scmp.lt.s32.totalorder %s22, 1
      %s361 = scalar_select %p360, %s22, 1
      %s362 = smul.addr %s361, 2
      %s363 = smul.addr %s362, 8
      %s364 = scalar_lea.vmem %s1, %s363
      %p365 = pneg %p69
      %p366 = pneg %p66
      %p367 = pneg %p90
      %p368 = pneg %p87
      %p369 = pneg %p111
      %p370 = pneg %p108
      %p371 = pneg %p132
      %p372 = pneg %p129
      %p373 = pneg %p153
      %p374 = pneg %p150
      %p375 = pneg %p174
      %p376 = pneg %p171
      %p377 = pneg %p195
      %p378 = pneg %p192
      %p379 = pneg %p216
      %p380 = pneg %p213
      %p381 = pneg %p237
      %p382 = pneg %p234
      %p383 = pneg %p258
      %p384 = pneg %p255
      %p385 = pneg %p284
      %p386 = pneg %p281
      %p387 = scmp.lt.s32.totalorder %s22, 1
      %s388 = scalar_select %p387, %s22, 1
      %s389 = smul.addr %s388, 2
      %s390 = smul.addr %s389, 8
      %s391 = scalar_lea.vmem %s11, %s390
      %p392 = scmp.lt.s32.totalorder %s22, 1
      %s393 = scalar_select %p392, %s22, 1
      %s394 = smul.addr %s393, 2
      %s395 = smul.addr %s394, 8
      %s396 = scalar_lea.vmem %s0, %s395
      %p397 = scmp.lt.s32.totalorder %s22, 1
      %s398 = scalar_select %p397, %s22, 1
      %s399 = smul.addr %s398, 2
      %s400 = smul.addr %s399, 8
      %s401 = scalar_lea.vmem %s1, %s400
      %p402 = scmp.lt.s32.totalorder %s22, 1
      %s403 = scalar_select %p402, %s22, 1
      %s404 = smul.addr %s403, 2
      %s405 = smul.addr %s404, 8
      %s406 = scalar_lea.vmem %s11, %s405
      %v408 = vld [vmem:[%s3] sm:$0xff]
      %v409 = vld [vmem:[%s396] sm:$0xff]
      %v410 = vld [vmem:[%s396 + $0x8] sm:$0xff]
      %v411 = vld [vmem:[%s401] sm:$0xff]
      %v412 = vld [vmem:[%s401 + $0x8] sm:$0xff]
      %415 = vrot.lane.b32.xlu0 %v411, 32
      %v416 = vpop.permute.xlu0 %415
      %417 = vrot.lane.b32.xlu0 %v412, 32
      %v418 = vpop.permute.xlu0 %417
      %vm421 = vcmask 261120
      %v422 = vsel %vm421, %v409, %v416
      %v423 = vsel %vm421, %v410, %v418
      %v424 = vpack.c.bf16 %v423, %v422
      %v425 = vld [vmem:[%s2] sm:$0xf]
      %v426 = vld [vmem:[%s2 + $0x4] sm:$0xf]
      %v427 = vld [vmem:[%s2 + $0x8] sm:$0xf]
      %v428 = vld [vmem:[%s2 + $0xc] sm:$0xf]
      %v429 = vld [vmem:[%s2 + $0x10] sm:$0xf]
      %v430 = vld [vmem:[%s2 + $0x14] sm:$0xf]
      %v431 = vld [vmem:[%s2 + $0x18] sm:$0xf]
      %v432 = vld [vmem:[%s2 + $0x1c] sm:$0xf]
      %v433 = vlaneseq
      %v434 = vshrl.u32 %v433, 7
      %v435 = vsub.s32 2, %v434
      %v436 = vrot.slane %v408, %v435
      %v445 = vunpack.c.l.b16 %v425
      %v446 = vunpack.c.l.b16 %v426
      %v447 = vunpack.c.l.b16 %v427
      %v448 = vunpack.c.l.b16 %v428
      %v449 = vunpack.c.l.b16 %v429
      %v450 = vunpack.c.l.b16 %v430
      %v451 = vunpack.c.l.b16 %v431
      %v452 = vunpack.c.l.b16 %v432
      %v453 = vpack.c.b16 %v446, %v445
      %v454 = vpack.c.b16 %v448, %v447
      %v455 = vpack.c.b16 %v450, %v449
      %v456 = vpack.c.b16 %v452, %v451
      %vm461 = vcmask 523264
      %v463 = vsel %vm461, %v424, 0
      %465 = vmatprep.subr.bf16.mxu0 0
      %466 = vmatpush1.bf16.msra.mxu0 0
      %467 = vmatprep.subr.bf16.mxu0 0
      %468 = vmatpush1.bf16.msra.mxu0 0
      %469 = vmatprep.subr.bf16.mxu0 0
      %470 = vmatpush1.bf16.msra.mxu0 0
      %471 = vmatprep.subr.bf16.mxu0 0
      %472 = vmatpush1.bf16.msra.mxu0 0
      %473 = vmatprep.subr.bf16.mxu0 0
      %474 = vmatpush1.bf16.msra.mxu0 %v456
      %475 = vmatprep.subr.bf16.mxu0 0
      %476 = vmatpush1.bf16.msra.mxu0 %v455
      %477 = vmatprep.subr.bf16.mxu0 0
      %478 = vmatpush1.bf16.msra.mxu0 %v454
      %479 = vmatprep.subr.bf16.mxu0 0
      %480 = vmatpush1.bf16.msra.mxu0 %v453
      %481 = vmatprep.subr.bf16.mxu0 0
      %482 = vmatpush2.bf16.msra.mxu0 0
      %483 = vmatprep.subr.bf16.mxu0 0
      %484 = vmatpush2.bf16.msra.mxu0 0
      %485 = vmatprep.subr.bf16.mxu0 0
      %486 = vmatpush2.bf16.msra.mxu0 0
      %487 = vmatprep.subr.bf16.mxu0 0
      %488 = vmatpush2.bf16.msra.mxu0 0
      %489 = vmatprep.subr.bf16.mxu0 0
      %490 = vmatpush2.bf16.msra.mxu0 0
      %491 = vmatprep.subr.bf16.mxu0 0
      %492 = vmatpush2.bf16.msra.mxu0 0
      %493 = vmatprep.subr.bf16.mxu0 0
      %494 = vmatpush2.bf16.msra.mxu0 0
      %495 = vmatprep.subr.bf16.mxu0 0
      %496 = vmatpush2.bf16.msra.mxu0 0
      %497 = vmatprep.mubr.bf16.mxu0 0
      %498 = vmatmul.mubr.bf16.gmra.mxu0 %v463
      %v499 = vpop.f32.mrf.mxu0
      %v500 = vadd.f32 %v436, %v499
      %v501 = vpop.f32.mrf.mxu0
      %v502 = vpop.f32.mrf.mxu0
      %v503 = vadd.f32 %v436, %v502
      %v504 = vpop.f32.mrf.mxu0
      %505 = vdwg.mxu0
      %v506 = vmul.f32 %v500, %v500
      %v507 = vmul.f32 %v503, %v503
      %v508 = vsel %vm421, %v506, 0.0
      %509 = vadd.xlane.f32.xlu0 %v508
      %v510 = vpop.xlane.xlu0 %509
      %v511 = vsel %vm421, %v507, 0.0
      %512 = vadd.xlane.f32.xlu0 %v511
      %v513 = vpop.xlane.xlu0 %512
      %v514 = vmax.f32 %v510, 1e-24
      %v515 = vmax.f32 %v513, 1e-24
      %v516 = vrsqrt.pop %v514
      %v517 = vrsqrt.pop %v515
      %v518 = vmul.f32 %v500, %v516
      %v519 = vmul.f32 %v503, %v517
      %v520 = vmul.f32 %v518, 5.656854
      %v521 = vmul.f32 %v519, 5.656854
      %v522 = vlaneseq
      %v523 = vshrl.u32 %v522, 7
      %v524 = vsub.s32 0, %v523
      %v525 = vrot.slane %v408, %v524
      %v526 = vmul.f32 %v520, %v525
      %v527 = vmul.f32 %v521, %v525
      %v528 = vpack.c.bf16 %v527, %v526
      %v529 = vld [vmem:[%s4] sm:$0xf]
      %v530 = vld [vmem:[%s4 + $0x4] sm:$0xf]
      %v531 = vld [vmem:[%s4 + $0x8] sm:$0xf]
      %v532 = vld [vmem:[%s4 + $0xc] sm:$0xf]
      %v537 = vunpack.c.l.b16 %v529
      %v538 = vunpack.c.l.b16 %v530
      %v539 = vunpack.c.l.b16 %v531
      %v540 = vunpack.c.l.b16 %v532
      %v541 = vpack.c.b16 %v538, %v537
      %v542 = vpack.c.b16 %v540, %v539
      %v546 = vsel %vm421, %v528, 0
      %548 = vmatprep.subr.bf16.mxu0 0
      %549 = vmatpush1.bf16.msra.mxu0 0
      %550 = vmatprep.subr.bf16.mxu0 0
      %551 = vmatpush1.bf16.msra.mxu0 0
      %552 = vmatprep.subr.bf16.mxu0 0
      %553 = vmatpush1.bf16.msra.mxu0 0
      %554 = vmatprep.subr.bf16.mxu0 0
      %555 = vmatpush1.bf16.msra.mxu0 0
      %556 = vmatprep.subr.bf16.mxu0 0
      %557 = vmatpush1.bf16.msra.mxu0 0
      %558 = vmatprep.subr.bf16.mxu0 0
      %559 = vmatpush1.bf16.msra.mxu0 0
      %560 = vmatprep.subr.bf16.mxu0 0
      %561 = vmatpush1.bf16.msra.mxu0 %v542
      %562 = vmatprep.subr.bf16.mxu0 0
      %563 = vmatpush1.bf16.msra.mxu0 %v541
      %564 = vmatprep.subr.bf16.mxu0 0
      %565 = vmatpush2.bf16.msra.mxu0 0
      %566 = vmatprep.subr.bf16.mxu0 0
      %567 = vmatpush2.bf16.msra.mxu0 0
      %568 = vmatprep.subr.bf16.mxu0 0
      %569 = vmatpush2.bf16.msra.mxu0 0
      %570 = vmatprep.subr.bf16.mxu0 0
      %571 = vmatpush2.bf16.msra.mxu0 0
      %572 = vmatprep.subr.bf16.mxu0 0
      %573 = vmatpush2.bf16.msra.mxu0 0
      %574 = vmatprep.subr.bf16.mxu0 0
      %575 = vmatpush2.bf16.msra.mxu0 0
      %576 = vmatprep.subr.bf16.mxu0 0
      %577 = vmatpush2.bf16.msra.mxu0 0
      %578 = vmatprep.subr.bf16.mxu0 0
      %579 = vmatpush2.bf16.msra.mxu0 0
      %580 = vmatprep.mubr.bf16.mxu0 0
      %581 = vmatmul.mubr.bf16.gmra.mxu0 %v546
      %v582 = vpop.f32.mrf.mxu0
      %v583 = vadd.f32 0.0, %v582
      %v584 = vpop.f32.mrf.mxu0
      %v585 = vpop.f32.mrf.mxu0
      %v586 = vadd.f32 0.0, %v585
      %v587 = vpop.f32.mrf.mxu0
      %588 = vdwg.mxu0
      %v589 = vld [vmem:[%s9] sm:$0xff]
      %v590 = vld [vmem:[%s9 + $0x8] sm:$0xff]
      %v591 = vld [vmem:[%s10] sm:$0xff]
      %v592 = vld [vmem:[%s10 + $0x8] sm:$0xff]
      %v593 = vmul.f32 %v583, %v589
      %v594 = vmul.f32 %v586, %v590
      %v595 = vsub.f32 0.0, %v583
      %v596 = vsub.f32 0.0, %v586
      %599 = vrot.lane.b32.xlu0 %v595, 120
      %v600 = vpop.permute.xlu0 %599
      %601 = vrot.lane.b32.xlu0 %v596, 120
      %v602 = vpop.permute.xlu0 %601
      %607 = vrot.lane.b32.xlu0 %v583, 8
      %v608 = vpop.permute.xlu0 %607
      %609 = vrot.lane.b32.xlu0 %v586, 8
      %v610 = vpop.permute.xlu0 %609
      %vm613 = vcmask 64512
      %v614 = vsel %vm613, %v600, %v608
      %v615 = vsel %vm613, %v602, %v610
      %v616 = vmul.f32 %v614, %v591
      %v617 = vmul.f32 %v615, %v592
      %v618 = vadd.f32 %v593, %v616
      %v619 = vadd.f32 %v594, %v617
      %622 = vrot.lane.b32.xlu0 %v589, 32
      %v623 = vpop.permute.xlu0 %622
      %624 = vrot.lane.b32.xlu0 %v590, 32
      %v625 = vpop.permute.xlu0 %624
      %v628 = vmul.f32 %v583, %v623
      %v629 = vmul.f32 %v586, %v625
      %630 = vrot.lane.b32.xlu0 %v595, 88
      %v631 = vpop.permute.xlu0 %630
      %632 = vrot.lane.b32.xlu0 %v596, 88
      %v633 = vpop.permute.xlu0 %632
      %636 = vrot.lane.b32.xlu0 %v583, 104
      %v637 = vpop.permute.xlu0 %636
      %638 = vrot.lane.b32.xlu0 %v586, 104
      %v639 = vpop.permute.xlu0 %638
      %v642 = vsel %vm613, %v631, %v637
      %v643 = vsel %vm613, %v633, %v639
      %v644 = vmul.f32 %v642, %v591
      %v645 = vmul.f32 %v643, %v592
      %648 = vrot.lane.b32.xlu0 %v644, 32
      %v649 = vpop.permute.xlu0 %648
      %650 = vrot.lane.b32.xlu0 %v645, 32
      %v651 = vpop.permute.xlu0 %650
      %v654 = vadd.f32 %v628, %v649
      %v655 = vadd.f32 %v629, %v651
      %v656 = vpack.c.bf16 %v619, %v618
      %v657 = vpack.c.bf16 %v655, %v654
      %659 = vrot.lane.b32.xlu0 %v657, 96
      %v660 = vpop.permute.xlu0 %659
      %vm661 = vcmask 130048
      %v663 = vsel %vm661, %v656, 0
      %v666 = vsel %vm661, %v660, 0
      %668 = vmatprep.subr.bf16.mxu0 0
      %669 = vmatpush1.bf16.xpose.msra.mxu0 0
      %670 = vmatprep.subr.bf16.mxu0 0
      %671 = vmatpush1.bf16.xpose.msra.mxu0 0
      %672 = vmatprep.subr.bf16.mxu0 0
      %673 = vmatpush1.bf16.xpose.msra.mxu0 0
      %674 = vmatprep.subr.bf16.mxu0 0
      %675 = vmatpush1.bf16.xpose.msra.mxu0 0
      %676 = vmatprep.subr.bf16.mxu0 0
      %677 = vmatpush1.bf16.xpose.msra.mxu0 0
      %678 = vmatprep.subr.bf16.mxu0 0
      %679 = vmatpush1.bf16.xpose.msra.mxu0 0
      %680 = vmatprep.subr.bf16.mxu0 0
      %681 = vmatpush1.bf16.xpose.msra.mxu0 0
      %682 = vmatprep.subr.bf16.mxu0 0
      %683 = vmatpush1.bf16.xpose.msra.mxu0 %v666
      %684 = vmatprep.subr.bf16.mxu0 0
      %685 = vmatpush2.bf16.xpose.msra.mxu0 0
      %686 = vmatprep.subr.bf16.mxu0 0
      %687 = vmatpush2.bf16.xpose.msra.mxu0 0
      %688 = vmatprep.subr.bf16.mxu0 0
      %689 = vmatpush2.bf16.xpose.msra.mxu0 0
      %690 = vmatprep.subr.bf16.mxu0 0
      %691 = vmatpush2.bf16.xpose.msra.mxu0 0
      %692 = vmatprep.subr.bf16.mxu0 0
      %693 = vmatpush2.bf16.xpose.msra.mxu0 0
      %694 = vmatprep.subr.bf16.mxu0 0
      %695 = vmatpush2.bf16.xpose.msra.mxu0 0
      %696 = vmatprep.subr.bf16.mxu0 0
      %697 = vmatpush2.bf16.xpose.msra.mxu0 0
      %698 = vmatprep.subr.bf16.mxu0 0
      %699 = vmatpush2.bf16.xpose.msra.mxu0 0
      %700 = vmatprep.mubr.bf16.mxu0 0
      %701 = vmatmul.mubr.bf16.gmra.mxu0 %v663
      %v702 = vpop.f32.mrf.mxu0
      %v703 = vadd.f32 0.0, %v702
      %v704 = vpop.f32.mrf.mxu0
      %v705 = vpop.f32.mrf.mxu0
      %v706 = vadd.f32 0.0, %v705
      %v707 = vpop.f32.mrf.mxu0
      %708 = vdwg.mxu0
      %v709 = vmul.f32 %v703, 0.25
      %v710 = vmul.f32 %v706, 0.25
      %v711 = vsel %vm661, %v709, -inf
      %712 = vmax.xlane.f32.xlu0 %v711
      %v713 = vpop.xlane.xlu0 %712
      %v714 = vsel %vm661, %v710, -inf
      %715 = vmax.xlane.f32.xlu0 %v714
      %v716 = vpop.xlane.xlu0 %715
      %v717 = vsub.f32 %v709, %v713
      %v718 = vsub.f32 %v710, %v716
      %v719 = vmul.f32 %v717, 1.442695
      %v720 = vpow.pop %v719
      %v721 = vmul.f32 %v718, 1.442695
      %v722 = vpow.pop %v721
      %v723 = vsel %vm661, %v720, 0.0
      %724 = vadd.xlane.f32.xlu0 %v723
      %v725 = vpop.xlane.xlu0 %724
      %v726 = vsel %vm661, %v722, 0.0
      %727 = vadd.xlane.f32.xlu0 %v726
      %v728 = vpop.xlane.xlu0 %727
      %v729 = vpack.c.bf16 %v722, %v720
      %v730 = vpack.c.bf16 %v586, %v583
      %732 = vrot.lane.b32.xlu0 %v730, 64
      %v733 = vpop.permute.xlu0 %732
      %v736 = vsel %vm661, %v729, 0
      %738 = vmatprep.subr.bf16.mxu0 0
      %739 = vmatpush1.bf16.msra.mxu0 0
      %740 = vmatprep.subr.bf16.mxu0 0
      %741 = vmatpush1.bf16.msra.mxu0 0
      %742 = vmatprep.subr.bf16.mxu0 0
      %743 = vmatpush1.bf16.msra.mxu0 0
      %744 = vmatprep.subr.bf16.mxu0 0
      %745 = vmatpush1.bf16.msra.mxu0 0
      %746 = vmatprep.subr.bf16.mxu0 0
      %747 = vmatpush1.bf16.msra.mxu0 0
      %748 = vmatprep.subr.bf16.mxu0 0
      %749 = vmatpush1.bf16.msra.mxu0 0
      %750 = vmatprep.subr.bf16.mxu0 0
      %751 = vmatpush1.bf16.msra.mxu0 0
      %752 = vmatprep.subr.bf16.mxu0 0
      %753 = vmatpush1.bf16.msra.mxu0 %v733
      %754 = vmatprep.subr.bf16.mxu0 0
      %755 = vmatpush2.bf16.msra.mxu0 0
      %756 = vmatprep.subr.bf16.mxu0 0
      %757 = vmatpush2.bf16.msra.mxu0 0
      %758 = vmatprep.subr.bf16.mxu0 0
      %759 = vmatpush2.bf16.msra.mxu0 0
      %760 = vmatprep.subr.bf16.mxu0 0
      %761 = vmatpush2.bf16.msra.mxu0 0
      %762 = vmatprep.subr.bf16.mxu0 0
      %763 = vmatpush2.bf16.msra.mxu0 0
      %764 = vmatprep.subr.bf16.mxu0 0
      %765 = vmatpush2.bf16.msra.mxu0 0
      %766 = vmatprep.subr.bf16.mxu0 0
      %767 = vmatpush2.bf16.msra.mxu0 0
      %768 = vmatprep.subr.bf16.mxu0 0
      %769 = vmatpush2.bf16.msra.mxu0 0
      %770 = vmatprep.mubr.bf16.mxu0 0
      %771 = vmatmul.mubr.bf16.gmra.mxu0 %v736
      %v772 = vpop.f32.mrf.mxu0
      %v773 = vadd.f32 0.0, %v772
      %v774 = vpop.f32.mrf.mxu0
      %v775 = vpop.f32.mrf.mxu0
      %v776 = vadd.f32 0.0, %v775
      %v777 = vpop.f32.mrf.mxu0
      %778 = vdwg.mxu0
      %v779 = vrcp.pop %v725
      %v780 = vmul.f32 %v773, %v779
      %v781 = vrcp.pop %v728
      %v782 = vmul.f32 %v776, %v781
      %783 = vrot.lane.b32.xlu0 %v589, 16
      %v784 = vpop.permute.xlu0 %783
      %785 = vrot.lane.b32.xlu0 %v590, 16
      %v786 = vpop.permute.xlu0 %785
      %v789 = vmul.f32 %v583, %v784
      %v790 = vmul.f32 %v586, %v786
      %791 = vrot.lane.b32.xlu0 %v595, 104
      %v792 = vpop.permute.xlu0 %791
      %793 = vrot.lane.b32.xlu0 %v596, 104
      %v794 = vpop.permute.xlu0 %793
      %797 = vrot.lane.b32.xlu0 %v583, 120
      %v798 = vpop.permute.xlu0 %797
      %799 = vrot.lane.b32.xlu0 %v586, 120
      %v800 = vpop.permute.xlu0 %799
      %v803 = vsel %vm613, %v792, %v798
      %v804 = vsel %vm613, %v794, %v800
      %v805 = vmul.f32 %v803, %v591
      %v806 = vmul.f32 %v804, %v592
      %809 = vrot.lane.b32.xlu0 %v805, 16
      %v810 = vpop.permute.xlu0 %809
      %811 = vrot.lane.b32.xlu0 %v806, 16
      %v812 = vpop.permute.xlu0 %811
      %v815 = vadd.f32 %v789, %v810
      %v816 = vadd.f32 %v790, %v812
      %817 = vrot.lane.b32.xlu0 %v589, 48
      %v818 = vpop.permute.xlu0 %817
      %819 = vrot.lane.b32.xlu0 %v590, 48
      %v820 = vpop.permute.xlu0 %819
      %v823 = vmul.f32 %v583, %v818
      %v824 = vmul.f32 %v586, %v820
      %825 = vrot.lane.b32.xlu0 %v595, 72
      %v826 = vpop.permute.xlu0 %825
      %827 = vrot.lane.b32.xlu0 %v596, 72
      %v828 = vpop.permute.xlu0 %827
      %831 = vrot.lane.b32.xlu0 %v583, 88
      %v832 = vpop.permute.xlu0 %831
      %833 = vrot.lane.b32.xlu0 %v586, 88
      %v834 = vpop.permute.xlu0 %833
      %v837 = vsel %vm613, %v826, %v832
      %v838 = vsel %vm613, %v828, %v834
      %v839 = vmul.f32 %v837, %v591
      %v840 = vmul.f32 %v838, %v592
      %843 = vrot.lane.b32.xlu0 %v839, 48
      %v844 = vpop.permute.xlu0 %843
      %845 = vrot.lane.b32.xlu0 %v840, 48
      %v846 = vpop.permute.xlu0 %845
      %v849 = vadd.f32 %v823, %v844
      %v850 = vadd.f32 %v824, %v846
      %v851 = vpack.c.bf16 %v816, %v815
      %v852 = vpack.c.bf16 %v850, %v849
      %854 = vrot.lane.b32.xlu0 %v851, 112
      %v855 = vpop.permute.xlu0 %854
      %857 = vrot.lane.b32.xlu0 %v852, 80
      %v858 = vpop.permute.xlu0 %857
      %v860 = vsel %vm661, %v855, 0
      %v863 = vsel %vm661, %v858, 0
      %865 = vmatprep.subr.bf16.mxu0 0
      %866 = vmatpush1.bf16.xpose.msra.mxu0 0
      %867 = vmatprep.subr.bf16.mxu0 0
      %868 = vmatpush1.bf16.xpose.msra.mxu0 0
      %869 = vmatprep.subr.bf16.mxu0 0
      %870 = vmatpush1.bf16.xpose.msra.mxu0 0
      %871 = vmatprep.subr.bf16.mxu0 0
      %872 = vmatpush1.bf16.xpose.msra.mxu0 0
      %873 = vmatprep.subr.bf16.mxu0 0
      %874 = vmatpush1.bf16.xpose.msra.mxu0 0
      %875 = vmatprep.subr.bf16.mxu0 0
      %876 = vmatpush1.bf16.xpose.msra.mxu0 0
      %877 = vmatprep.subr.bf16.mxu0 0
      %878 = vmatpush1.bf16.xpose.msra.mxu0 0
      %879 = vmatprep.subr.bf16.mxu0 0
      %880 = vmatpush1.bf16.xpose.msra.mxu0 %v863
      %881 = vmatprep.subr.bf16.mxu0 0
      %882 = vmatpush2.bf16.xpose.msra.mxu0 0
      %883 = vmatprep.subr.bf16.mxu0 0
      %884 = vmatpush2.bf16.xpose.msra.mxu0 0
      %885 = vmatprep.subr.bf16.mxu0 0
      %886 = vmatpush2.bf16.xpose.msra.mxu0 0
      %887 = vmatprep.subr.bf16.mxu0 0
      %888 = vmatpush2.bf16.xpose.msra.mxu0 0
      %889 = vmatprep.subr.bf16.mxu0 0
      %890 = vmatpush2.bf16.xpose.msra.mxu0 0
      %891 = vmatprep.subr.bf16.mxu0 0
      %892 = vmatpush2.bf16.xpose.msra.mxu0 0
      %893 = vmatprep.subr.bf16.mxu0 0
      %894 = vmatpush2.bf16.xpose.msra.mxu0 0
      %895 = vmatprep.subr.bf16.mxu0 0
      %896 = vmatpush2.bf16.xpose.msra.mxu0 0
      %897 = vmatprep.mubr.bf16.mxu0 0
      %898 = vmatmul.mubr.bf16.gmra.mxu0 %v860
      %v899 = vpop.f32.mrf.mxu0
      %v900 = vadd.f32 0.0, %v899
      %v901 = vpop.f32.mrf.mxu0
      %v902 = vpop.f32.mrf.mxu0
      %v903 = vadd.f32 0.0, %v902
      %v904 = vpop.f32.mrf.mxu0
      %905 = vdwg.mxu0
      %v906 = vmul.f32 %v900, 0.25
      %v907 = vmul.f32 %v903, 0.25
      %v908 = vsel %vm661, %v906, -inf
      %909 = vmax.xlane.f32.xlu0 %v908
      %v910 = vpop.xlane.xlu0 %909
      %v911 = vsel %vm661, %v907, -inf
      %912 = vmax.xlane.f32.xlu0 %v911
      %v913 = vpop.xlane.xlu0 %912
      %v914 = vsub.f32 %v906, %v910
      %v915 = vsub.f32 %v907, %v913
      %v916 = vmul.f32 %v914, 1.442695
      %v917 = vpow.pop %v916
      %v918 = vmul.f32 %v915, 1.442695
      %v919 = vpow.pop %v918
      %v920 = vsel %vm661, %v917, 0.0
      %921 = vadd.xlane.f32.xlu0 %v920
      %v922 = vpop.xlane.xlu0 %921
      %v923 = vsel %vm661, %v919, 0.0
      %924 = vadd.xlane.f32.xlu0 %v923
      %v925 = vpop.xlane.xlu0 %924
      %v926 = vpack.c.bf16 %v919, %v917
      %927 = vrot.lane.b32.xlu0 %v730, 48
      %v928 = vpop.permute.xlu0 %927
      %v931 = vsel %vm661, %v926, 0
      %933 = vmatprep.subr.bf16.mxu0 0
      %934 = vmatpush1.bf16.msra.mxu0 0
      %935 = vmatprep.subr.bf16.mxu0 0
      %936 = vmatpush1.bf16.msra.mxu0 0
      %937 = vmatprep.subr.bf16.mxu0 0
      %938 = vmatpush1.bf16.msra.mxu0 0
      %939 = vmatprep.subr.bf16.mxu0 0
      %940 = vmatpush1.bf16.msra.mxu0 0
      %941 = vmatprep.subr.bf16.mxu0 0
      %942 = vmatpush1.bf16.msra.mxu0 0
      %943 = vmatprep.subr.bf16.mxu0 0
      %944 = vmatpush1.bf16.msra.mxu0 0
      %945 = vmatprep.subr.bf16.mxu0 0
      %946 = vmatpush1.bf16.msra.mxu0 0
      %947 = vmatprep.subr.bf16.mxu0 0
      %948 = vmatpush1.bf16.msra.mxu0 %v928
      %949 = vmatprep.subr.bf16.mxu0 0
      %950 = vmatpush2.bf16.msra.mxu0 0
      %951 = vmatprep.subr.bf16.mxu0 0
      %952 = vmatpush2.bf16.msra.mxu0 0
      %953 = vmatprep.subr.bf16.mxu0 0
      %954 = vmatpush2.bf16.msra.mxu0 0
      %955 = vmatprep.subr.bf16.mxu0 0
      %956 = vmatpush2.bf16.msra.mxu0 0
      %957 = vmatprep.subr.bf16.mxu0 0
      %958 = vmatpush2.bf16.msra.mxu0 0
      %959 = vmatprep.subr.bf16.mxu0 0
      %960 = vmatpush2.bf16.msra.mxu0 0
      %961 = vmatprep.subr.bf16.mxu0 0
      %962 = vmatpush2.bf16.msra.mxu0 0
      %963 = vmatprep.subr.bf16.mxu0 0
      %964 = vmatpush2.bf16.msra.mxu0 0
      %965 = vmatprep.mubr.bf16.mxu0 0
      %966 = vmatmul.mubr.bf16.gmra.mxu0 %v931
      %v967 = vpop.f32.mrf.mxu0
      %v968 = vadd.f32 0.0, %v967
      %v969 = vpop.f32.mrf.mxu0
      %v970 = vpop.f32.mrf.mxu0
      %v971 = vadd.f32 0.0, %v970
      %v972 = vpop.f32.mrf.mxu0
      %973 = vdwg.mxu0
      %v974 = vrcp.pop %v922
      %v975 = vmul.f32 %v968, %v974
      %v976 = vrcp.pop %v925
      %v977 = vmul.f32 %v971, %v976
      %980 = vrot.lane.b32.xlu0 %v975, 16
      %v981 = vpop.permute.xlu0 %980
      %982 = vrot.lane.b32.xlu0 %v977, 16
      %v983 = vpop.permute.xlu0 %982
      %v986 = vsel %vm661, %v780, %v981
      %v987 = vsel %vm661, %v782, %v983
      %v988 = vpack.c.bf16 %v987, %v986
      %v989 = vld [vmem:[%s5] sm:$0xf]
      %v990 = vld [vmem:[%s5 + $0x4] sm:$0xf]
      %v991 = vld [vmem:[%s5 + $0x8] sm:$0xf]
      %v992 = vld [vmem:[%s5 + $0xc] sm:$0xf]
      %v997 = vunpack.c.l.b16 %v989
      %v998 = vunpack.c.l.b16 %v990
      %v999 = vunpack.c.l.b16 %v991
      %v1000 = vunpack.c.l.b16 %v992
      %v1001 = vpack.c.b16 %v998, %v997
      %v1002 = vpack.c.b16 %v1000, %v999
      %v1006 = vsel %vm421, %v988, 0
      %1008 = vmatprep.subr.bf16.mxu0 0
      %1009 = vmatpush1.bf16.msra.mxu0 0
      %1010 = vmatprep.subr.bf16.mxu0 0
      %1011 = vmatpush1.bf16.msra.mxu0 0
      %1012 = vmatprep.subr.bf16.mxu0 0
      %1013 = vmatpush1.bf16.msra.mxu0 0
      %1014 = vmatprep.subr.bf16.mxu0 0
      %1015 = vmatpush1.bf16.msra.mxu0 0
      %1016 = vmatprep.subr.bf16.mxu0 0
      %1017 = vmatpush1.bf16.msra.mxu0 0
      %1018 = vmatprep.subr.bf16.mxu0 0
      %1019 = vmatpush1.bf16.msra.mxu0 0
      %1020 = vmatprep.subr.bf16.mxu0 0
      %1021 = vmatpush1.bf16.msra.mxu0 %v1002
      %1022 = vmatprep.subr.bf16.mxu0 0
      %1023 = vmatpush1.bf16.msra.mxu0 %v1001
      %1024 = vmatprep.subr.bf16.mxu0 0
      %1025 = vmatpush2.bf16.msra.mxu0 0
      %1026 = vmatprep.subr.bf16.mxu0 0
      %1027 = vmatpush2.bf16.msra.mxu0 0
      %1028 = vmatprep.subr.bf16.mxu0 0
      %1029 = vmatpush2.bf16.msra.mxu0 0
      %1030 = vmatprep.subr.bf16.mxu0 0
      %1031 = vmatpush2.bf16.msra.mxu0 0
      %1032 = vmatprep.subr.bf16.mxu0 0
      %1033 = vmatpush2.bf16.msra.mxu0 0
      %1034 = vmatprep.subr.bf16.mxu0 0
      %1035 = vmatpush2.bf16.msra.mxu0 0
      %1036 = vmatprep.subr.bf16.mxu0 0
      %1037 = vmatpush2.bf16.msra.mxu0 0
      %1038 = vmatprep.subr.bf16.mxu0 0
      %1039 = vmatpush2.bf16.msra.mxu0 0
      %1040 = vmatprep.mubr.bf16.mxu0 0
      %1041 = vmatmul.mubr.bf16.gmra.mxu0 %v1006
      %v1042 = vpop.f32.mrf.mxu0
      %v1043 = vadd.f32 0.0, %v1042
      %v1044 = vpop.f32.mrf.mxu0
      %v1045 = vpop.f32.mrf.mxu0
      %v1046 = vadd.f32 0.0, %v1045
      %v1047 = vpop.f32.mrf.mxu0
      %1048 = vdwg.mxu0
      %v1049 = vadd.f32 %v500, %v1043
      %v1050 = vadd.f32 %v503, %v1046
      %v1051 = vmul.f32 %v1049, %v1049
      %v1052 = vmul.f32 %v1050, %v1050
      %v1053 = vsel %vm421, %v1051, 0.0
      %1054 = vadd.xlane.f32.xlu0 %v1053
      %v1055 = vpop.xlane.xlu0 %1054
      %v1056 = vsel %vm421, %v1052, 0.0
      %1057 = vadd.xlane.f32.xlu0 %v1056
      %v1058 = vpop.xlane.xlu0 %1057
      %v1059 = vmax.f32 %v1055, 1e-24
      %v1060 = vmax.f32 %v1058, 1e-24
      %v1061 = vrsqrt.pop %v1059
      %v1062 = vrsqrt.pop %v1060
      %v1063 = vmul.f32 %v1049, %v1061
      %v1064 = vmul.f32 %v1050, %v1062
      %v1065 = vmul.f32 %v1063, 5.656854
      %v1066 = vmul.f32 %v1064, 5.656854
      %v1067 = vlaneseq
      %v1068 = vshrl.u32 %v1067, 7
      %v1069 = vsub.s32 1, %v1068
      %v1070 = vrot.slane %v408, %v1069
      %v1071 = vmul.f32 %v1065, %v1070
      %v1072 = vmul.f32 %v1066, %v1070
      %v1073 = vpack.c.bf16 %v1072, %v1071
      %v1074 = vld [vmem:[%s6] sm:$0xf]
      %v1075 = vld [vmem:[%s6 + $0x4] sm:$0xf]
      %v1076 = vld [vmem:[%s6 + $0x8] sm:$0xf]
      %v1077 = vld [vmem:[%s6 + $0xc] sm:$0xf]
      %v1078 = vld [vmem:[%s7] sm:$0x1]
      %v1080 = vlaneseq
      %v1081 = vshrl.u32 %v1080, 7
      %v1082 = vsub.s32 0, %v1081
      %v1083 = vrot.slane %v1078, %v1082
      %v1089 = vunpack.c.l.b16 %v1074
      %v1090 = vunpack.c.l.b16 %v1075
      %v1091 = vunpack.c.l.b16 %v1076
      %v1092 = vunpack.c.l.b16 %v1077
      %v1093 = vpack.c.b16 %v1090, %v1089
      %v1094 = vpack.c.b16 %v1092, %v1091
      %v1098 = vsel %vm421, %v1073, 0
      %1100 = vmatprep.subr.bf16.mxu0 0
      %1101 = vmatpush1.bf16.msra.mxu0 0
      %1102 = vmatprep.subr.bf16.mxu0 0
      %1103 = vmatpush1.bf16.msra.mxu0 0
      %1104 = vmatprep.subr.bf16.mxu0 0
      %1105 = vmatpush1.bf16.msra.mxu0 0
      %1106 = vmatprep.subr.bf16.mxu0 0
      %1107 = vmatpush1.bf16.msra.mxu0 0
      %1108 = vmatprep.subr.bf16.mxu0 0
      %1109 = vmatpush1.bf16.msra.mxu0 0
      %1110 = vmatprep.subr.bf16.mxu0 0
      %1111 = vmatpush1.bf16.msra.mxu0 0
      %1112 = vmatprep.subr.bf16.mxu0 0
      %1113 = vmatpush1.bf16.msra.mxu0 %v1094
      %1114 = vmatprep.subr.bf16.mxu0 0
      %1115 = vmatpush1.bf16.msra.mxu0 %v1093
      %1116 = vmatprep.subr.bf16.mxu0 0
      %1117 = vmatpush2.bf16.msra.mxu0 0
      %1118 = vmatprep.subr.bf16.mxu0 0
      %1119 = vmatpush2.bf16.msra.mxu0 0
      %1120 = vmatprep.subr.bf16.mxu0 0
      %1121 = vmatpush2.bf16.msra.mxu0 0
      %1122 = vmatprep.subr.bf16.mxu0 0
      %1123 = vmatpush2.bf16.msra.mxu0 0
      %1124 = vmatprep.subr.bf16.mxu0 0
      %1125 = vmatpush2.bf16.msra.mxu0 0
      %1126 = vmatprep.subr.bf16.mxu0 0
      %1127 = vmatpush2.bf16.msra.mxu0 0
      %1128 = vmatprep.subr.bf16.mxu0 0
      %1129 = vmatpush2.bf16.msra.mxu0 0
      %1130 = vmatprep.subr.bf16.mxu0 0
      %1131 = vmatpush2.bf16.msra.mxu0 0
      %1132 = vmatprep.mubr.bf16.mxu0 0
      %1133 = vmatmul.mubr.bf16.gmra.mxu0 %v1098
      %v1134 = vpop.f32.mrf.mxu0
      %v1135 = vadd.f32 %v1083, %v1134
      %v1136 = vpop.f32.mrf.mxu0
      %v1137 = vpop.f32.mrf.mxu0
      %v1138 = vadd.f32 %v1083, %v1137
      %v1139 = vpop.f32.mrf.mxu0
      %1140 = vdwg.mxu0
      %v1141 = vmul.f32 %v1135, 0.5
      %v1142 = vmul.f32 %v1138, 0.5
      %v1143 = vmul.f32 %v1135, 0.70710677
      %v1144 = vmul.f32 %v1138, 0.70710677
      %vm1145 = vcmp.ge.f32.partialorder %v1143, 0.0
      %vm1146 = vcmp.ge.f32.partialorder %v1144, 0.0
      %v1147 = vsel %vm1145, 1.0, -1.0
      %v1148 = vsel %vm1146, 1.0, -1.0
      %v1149 = vand.u32 2147483647, %v1143
      %v1150 = vand.u32 2147483647, %v1144
      %v1151 = vmul.f32 %v1149, 0.3275911
      %v1152 = vmul.f32 %v1150, 0.3275911
      %v1153 = vadd.f32 %v1151, 1.0
      %v1154 = vadd.f32 %v1152, 1.0
      %v1155 = vrcp.pop %v1153
      %v1156 = vmul.f32 1.0, %v1155
      %v1157 = vrcp.pop %v1154
      %v1158 = vmul.f32 1.0, %v1157
      %v1159 = vmul.f32 %v1156, 1.0614054
      %v1160 = vmul.f32 %v1158, 1.0614054
      %v1161 = vadd.f32 %v1159, -1.4531521
      %v1162 = vadd.f32 %v1160, -1.4531521
      %v1163 = vmul.f32 %v1161, %v1156
      %v1164 = vmul.f32 %v1162, %v1158
      %v1165 = vadd.f32 %v1163, 1.4214138
      %v1166 = vadd.f32 %v1164, 1.4214138
      %v1167 = vmul.f32 %v1165, %v1156
      %v1168 = vmul.f32 %v1166, %v1158
      %v1169 = vadd.f32 %v1167, -0.28449672
      %v1170 = vadd.f32 %v1168, -0.28449672
      %v1171 = vmul.f32 %v1169, %v1156
      %v1172 = vmul.f32 %v1170, %v1158
      %v1173 = vadd.f32 %v1171, 0.2548296
      %v1174 = vadd.f32 %v1172, 0.2548296
      %v1175 = vmul.f32 %v1173, %v1156
      %v1176 = vmul.f32 %v1174, %v1158
      %v1177 = vsub.f32 0.0, %v1149
      %v1178 = vsub.f32 0.0, %v1150
      %v1179 = vmul.f32 %v1177, %v1149
      %v1180 = vmul.f32 %v1178, %v1150
      %v1181 = vmul.f32 %v1179, 1.442695
      %v1182 = vpow.pop %v1181
      %v1183 = vmul.f32 %v1180, 1.442695
      %v1184 = vpow.pop %v1183
      %v1185 = vmul.f32 %v1175, %v1182
      %v1186 = vmul.f32 %v1176, %v1184
      %v1187 = vsub.f32 1.0, %v1185
      %v1188 = vsub.f32 1.0, %v1186
      %v1189 = vmul.f32 %v1147, %v1187
      %v1190 = vmul.f32 %v1148, %v1188
      %v1191 = vadd.f32 %v1189, 1.0
      %v1192 = vadd.f32 %v1190, 1.0
      %v1193 = vmul.f32 %v1141, %v1191
      %v1194 = vmul.f32 %v1142, %v1192
      %v1195 = vpack.c.bf16 %v1194, %v1193
      %v1196 = vld [vmem:[%s8] sm:$0xf]
      %v1197 = vld [vmem:[%s8 + $0x4] sm:$0xf]
      %v1198 = vld [vmem:[%s8 + $0x8] sm:$0xf]
      %v1199 = vld [vmem:[%s8 + $0xc] sm:$0xf]
      %v1200 = vld [vmem:[%s8 + $0x10] sm:$0xf]
      %v1201 = vld [vmem:[%s8 + $0x14] sm:$0xf]
      %v1202 = vld [vmem:[%s8 + $0x18] sm:$0xf]
      %v1203 = vld [vmem:[%s8 + $0x1c] sm:$0xf]
      %v1204 = vld [vmem:[%s8 + $0x20] sm:$0xf]
      %v1205 = vld [vmem:[%s8 + $0x24] sm:$0xf]
      %v1206 = vld [vmem:[%s8 + $0x28] sm:$0xf]
      %v1207 = vld [vmem:[%s8 + $0x2c] sm:$0xf]
      %v1208 = vld [vmem:[%s8 + $0x30] sm:$0xf]
      %v1209 = vld [vmem:[%s8 + $0x34] sm:$0xf]
      %v1210 = vld [vmem:[%s8 + $0x38] sm:$0xf]
      %v1211 = vld [vmem:[%s8 + $0x3c] sm:$0xf]
      %v1212 = vlaneseq
      %v1213 = vshrl.u32 %v1212, 7
      %v1214 = vsub.s32 3, %v1213
      %v1215 = vrot.slane %v408, %v1214
      %v1232 = vunpack.c.l.b16 %v1196
      %v1233 = vunpack.c.l.b16 %v1197
      %v1234 = vunpack.c.l.b16 %v1198
      %v1235 = vunpack.c.l.b16 %v1199
      %v1236 = vunpack.c.l.b16 %v1200
      %v1237 = vunpack.c.l.b16 %v1201
      %v1238 = vunpack.c.l.b16 %v1202
      %v1239 = vunpack.c.l.b16 %v1203
      %v1240 = vunpack.c.l.b16 %v1204
      %v1241 = vunpack.c.l.b16 %v1205
      %v1242 = vunpack.c.l.b16 %v1206
      %v1243 = vunpack.c.l.b16 %v1207
      %v1244 = vunpack.c.l.b16 %v1208
      %v1245 = vunpack.c.l.b16 %v1209
      %v1246 = vunpack.c.l.b16 %v1210
      %v1247 = vunpack.c.l.b16 %v1211
      %v1248 = vpack.c.b16 %v1233, %v1232
      %v1249 = vpack.c.b16 %v1235, %v1234
      %v1250 = vpack.c.b16 %v1237, %v1236
      %v1251 = vpack.c.b16 %v1239, %v1238
      %v1252 = vpack.c.b16 %v1241, %v1240
      %v1253 = vpack.c.b16 %v1243, %v1242
      %v1254 = vpack.c.b16 %v1245, %v1244
      %v1255 = vpack.c.b16 %v1247, %v1246
      %1264 = vmatprep.subr.bf16.mxu0 0
      %1265 = vmatpush1.bf16.msra.mxu0 %v1255
      %1266 = vmatprep.subr.bf16.mxu0 0
      %1267 = vmatpush1.bf16.msra.mxu0 %v1254
      %1268 = vmatprep.subr.bf16.mxu0 0
      %1269 = vmatpush1.bf16.msra.mxu0 %v1253
      %1270 = vmatprep.subr.bf16.mxu0 0
      %1271 = vmatpush1.bf16.msra.mxu0 %v1252
      %1272 = vmatprep.subr.bf16.mxu0 0
      %1273 = vmatpush1.bf16.msra.mxu0 %v1251
      %1274 = vmatprep.subr.bf16.mxu0 0
      %1275 = vmatpush1.bf16.msra.mxu0 %v1250
      %1276 = vmatprep.subr.bf16.mxu0 0
      %1277 = vmatpush1.bf16.msra.mxu0 %v1249
      %1278 = vmatprep.subr.bf16.mxu0 0
      %1279 = vmatpush1.bf16.msra.mxu0 %v1248
      %1280 = vmatprep.subr.bf16.mxu0 0
      %1281 = vmatpush2.bf16.msra.mxu0 0
      %1282 = vmatprep.subr.bf16.mxu0 0
      %1283 = vmatpush2.bf16.msra.mxu0 0
      %1284 = vmatprep.subr.bf16.mxu0 0
      %1285 = vmatpush2.bf16.msra.mxu0 0
      %1286 = vmatprep.subr.bf16.mxu0 0
      %1287 = vmatpush2.bf16.msra.mxu0 0
      %1288 = vmatprep.subr.bf16.mxu0 0
      %1289 = vmatpush2.bf16.msra.mxu0 0
      %1290 = vmatprep.subr.bf16.mxu0 0
      %1291 = vmatpush2.bf16.msra.mxu0 0
      %1292 = vmatprep.subr.bf16.mxu0 0
      %1293 = vmatpush2.bf16.msra.mxu0 0
      %1294 = vmatprep.subr.bf16.mxu0 0
      %1295 = vmatpush2.bf16.msra.mxu0 0
      %1296 = vmatprep.mubr.bf16.mxu0 0
      %1297 = vmatmul.mubr.bf16.gmra.mxu0 %v1195
      %v1298 = vpop.f32.mrf.mxu0
      %v1299 = vadd.f32 %v1215, %v1298
      %v1300 = vpop.f32.mrf.mxu0
      %v1301 = vpop.f32.mrf.mxu0
      %v1302 = vadd.f32 %v1215, %v1301
      %v1303 = vpop.f32.mrf.mxu0
      %1304 = vdwg.mxu0
      %v1305 = vadd.f32 %v1049, %v1299
      %v1306 = vadd.f32 %v1050, %v1302
      %1307 = vst.msk [vmem:[%s406] sm:$0xff] %vm421, %v1305
      %1308 = vst.msk [vmem:[%s406 + $0x8] sm:$0xff] %vm421, %v1306
      %p1309 = scmp.lt.s32.totalorder %s22, 1
      %s1310 = scalar_select %p1309, %s22, 1
      %s1311 = smul.addr %s1310, 2
      %s1312 = smul.addr %s1311, 8
      %s1313 = scalar_lea.vmem %s11, %s1312
      // Predicated region
      $region65: #{duration_predictor_forward.8} parent=63 // pred_check
        %p1314 = pneg %p281
      $region66: #{duration_predictor_forward.8} parent=63 // pred_check_branch
        %1316 = sbr.rel (%p1314) target = $region68
      $region67: #{duration_predictor_forward.8} parent=63 // pred_region
        _
      $region68: #{duration_predictor_forward.8} parent=63 // pred_fallthru
        _
    $region64: #{duration_predictor_forward.8} parent=5 // pred_fallthru
      _
    %p1317 = scmp.le.s32.totalorder 2, %s17
    // Predicated region
    $region69: #{duration_predictor_forward.8} parent=5 // pred_check
      %p1318 = pneg %p1317
    $region70: #{duration_predictor_forward.8} parent=5 // pred_check_branch
      %1320 = sbr.rel (%p1318) target = $region72
    $region71: #{duration_predictor_forward.8} parent=5 // pred_region
      %s1321 = ssub.s32 %s17, 2
      // Predicated region
      $region73: #{duration_predictor_forward.8} parent=71 // pred_check
        %p1322 = pneg %p287
      $region74: #{duration_predictor_forward.8} parent=71 // pred_check_branch
        %1324 = sbr.rel (%p1322) target = $region76
      $region75: #{duration_predictor_forward.8} parent=71 // pred_region
        %p1325 = scmp.lt.s32.totalorder %s23, 1
        %s1326 = scalar_select %p1325, %s23, 1
        %s1327 = smul.addr %s1326, 2
        %s1328 = smul.addr %s1327, 8
        %s1329 = scalar_lea.vmem %s11, %s1328
      $region76: #{duration_predictor_forward.8} parent=71 // pred_fallthru
        _
    $region72: #{duration_predictor_forward.8} parent=5 // pred_fallthru
      _
  $region6: #{duration_predictor_forward.8} parent=0 // loop_footer
    %s21 = sadd.s32 1, %s17
  $region7: #{duration_predictor_forward.8} parent=0 // loop_footer_branch
    %16 = sbr.rel target = $region3
  $region8: #{duration_predictor_forward.8} parent=0 // loop_exit
    _

// kernel: duration_predictor_forward.9
$region0: #{duration_predictor_forward.9}
  #allocation0 [shape = 'u32[]', space=smem, size = 0x4, offset = 0x4, fixed_abs, tag = 'smem constant byte address 0x4 - core index']
  #allocation1 [shape = 'u32[144,128]{1,0:T(1,128)}', space=vmem, size = 0x12000, scoped, tag = 'internal scratch']
  %s0 = inlined_call_operand.vmem [shape: f32[8,128], index: 0, kind: input, shape index: {}]
  %s1 = inlined_call_operand.vmem [shape: f32[8,128], index: 1, kind: input, shape index: {}]
  %s2 = inlined_call_operand.hbm [shape: f32[1,1], index: 2, kind: output, shape index: {}]
  %s3 = sld [smem:[#allocation0]]
  $region22: #{duration_predictor_forward.9} parent=0
    _
  %s5 = ssub.s32 1, %s3
  %s6 = scalar_select 0, %s5, %s3
  $region1: #{duration_predictor_forward.9} parent=0
    #allocation2 [shape = 'u8[512]{0}', space=vmem, size = 0x400, scoped, tag = 'output window, operand 0, single buffered']
    #allocation3 [shape = 's32[1]{0}', space=sflag, size = 0x4, scoped, tag = 'scoped memory for duration_predictor_forward.9']
    %7 = vsyncpa [#allocation3], 0
    // Predicated region
    $region2: #{duration_predictor_forward.9} parent=1 // pred_check
      _
    $region3: #{duration_predictor_forward.9} parent=1 // pred_check_branch
      %9 = sbr.rel (0) target = $region5
    $region4: #{duration_predictor_forward.9} parent=1 // pred_region
      _
    $region5: #{duration_predictor_forward.9} parent=1 // pred_fallthru
      _
    // Predicated region
    $region6: #{duration_predictor_forward.9} parent=1 // pred_check
      _
    $region7: #{duration_predictor_forward.9} parent=1 // pred_check_branch
      %11 = sbr.rel (0) target = $region9
    $region8: #{duration_predictor_forward.9} parent=1 // pred_region
      _
    $region9: #{duration_predictor_forward.9} parent=1 // pred_fallthru
      _
    %p12 = scmp.eq.s32.totalorder 0, 0
    // Predicated region
    $region10: #{duration_predictor_forward.9} parent=1 // pred_check
      %p13 = pneg %p12
    $region11: #{duration_predictor_forward.9} parent=1 // pred_check_branch
      %15 = sbr.rel (%p13) target = $region13
    $region12: #{duration_predictor_forward.9} parent=1 // pred_region
      %vm16 = vcmask 0
      %17 = vst.msk [vmem:[#allocation2] sm:$0x1] %vm16, 0.0
    $region13: #{duration_predictor_forward.9} parent=1 // pred_fallthru
      _
    %v18 = vld [vmem:[#allocation2] sm:$0x1]
    %v19 = vld [vmem:[%s0] sm:$0xff]
    %v20 = vld [vmem:[%s1] sm:$0xff]
    %v21 = vsub.f32 %v19, %v20
    %v22 = vand.u32 2147483647, %v21
    %23 = vadd.xlane.f32.xlu0 %v22
    %v24 = vpop.xlane.xlu0 %23
    %v25 = vrot.slane %v24, 4
    %v26 = vadd.f32 %v24, %v25
    %v27 = vrot.slane %v26, 2
    %v28 = vadd.f32 %v26, %v27
    %v29 = vrot.slane %v28, 1
    %v30 = vadd.f32 %v28, %v29
    %s31 = vtos %v30
    %v32 = vstv %s31
    %v33 = vadd.f32 %v18, %v32
    %vm34 = vcmask 0
    %35 = vst.msk [vmem:[#allocation2] sm:$0x1] %vm34, %v33
    // Predicated region
    $region14: #{duration_predictor_forward.9} parent=1 // pred_check
      _
    $region15: #{duration_predictor_forward.9} parent=1 // pred_check_branch
      %37 = sbr.rel (0) target = $region17
    $region16: #{duration_predictor_forward.9} parent=1 // pred_region
      %s39 = ssub.s32 16, 16
      %40 = vsyncadd [#allocation3], %s39
      %s42 = sshll.u32 [#allocation2], 4
      %s43 = int_to_ptr.vmem [resolvable:$true] %s42
      %45 = dma.vmem_to_hbm [thread:$0]  %s43, 16, %s2, [#allocation3]
    $region17: #{duration_predictor_forward.9} parent=1 // pred_fallthru
      _
    // Predicated region
    $region18: #{duration_predictor_forward.9} parent=1 // pred_check
      _
    $region19: #{duration_predictor_forward.9} parent=1 // pred_check_branch
      %47 = sbr.rel (0) target = $region21
    $region20: #{duration_predictor_forward.9} parent=1 // pred_region
      %48 = dma.done [#allocation3], 16
    $region21: #{duration_predictor_forward.9} parent=1 // pred_fallthru
      _
    %49 = vsyncpa [#allocation3], 1

</llo_original>
